<compile_context>
chip_gen: v7x
topology: tpu7x:2x2x1
jax: 0.10.0
libtpu: 0.0.40
codegen_flags: <defaults>
</compile_context>

<pallas_src>
import functools
import math

import jax
import jax.numpy as jnp
from jax.experimental import pallas as pl
from jax.experimental.pallas import tpu as pltpu


# ---------------------------------------------------------------------------
# Generation-aware VMEM budget and default tile sizes
# ---------------------------------------------------------------------------

def _query_vmem_capacity():
    try:
        return int(pltpu.get_tpu_info().vmem_capacity_bytes)
    except Exception:
        return 64 * 1024 * 1024          # conservative fallback (v7x-sized)


_VMEM_CAP = _query_vmem_capacity()
_VMEM_LIMIT = min(100 * 1024 * 1024, (_VMEM_CAP * 3) // 4)   # ~96MiB v5e/v6e, ~48MiB v7x
_BIG_VMEM = _VMEM_LIMIT >= 80 * 1024 * 1024

if _BIG_VMEM:                            # v5e / v6e: use the big scratchpad
    _DEF_TM, _DEF_TN, _DEF_TK = 512, 1024, 512
else:                                    # v7x: 64 MiB physical, stay lean
    _DEF_TM, _DEF_TN, _DEF_TK = 256, 512, 512


def _pick_tile(dim, pref):
    """Largest tile <= pref dividing dim; prefer 256-multiples (full MXU), then 128."""
    if dim <= pref:
        return dim
    for step in (256, 128):
        t = (pref // step) * step
        while t >= step:
            if dim % t == 0:
                return t
            t -= step
    return dim


# ---------------------------------------------------------------------------
# Pallas kernels
# ---------------------------------------------------------------------------

def _matmul_bias_kernel(x_ref, w_ref, b_ref, o_ref, acc_ref, *, relu):
    # x: [tm, tk] bf16, w: [tk, tn] bf16, b: [1, tn] f32 -> o: [tm, tn]
    @pl.when(pl.program_id(2) == 0)
    def _init():
        acc_ref[...] = jnp.zeros_like(acc_ref)

    acc_ref[...] += jnp.dot(x_ref[...], w_ref[...],
                            preferred_element_type=jnp.float32)

    @pl.when(pl.program_id(2) == pl.num_programs(2) - 1)
    def _finalize():
        out = acc_ref[...] + b_ref[...]
        if relu:
            out = jnp.maximum(out, 0.0)
        o_ref[...] = out.astype(o_ref.dtype)


def _split_proj_kernel(x_ref, w_ref, b_ref, *refs, d, n_split):
    # Fused projection x @ [W0|W1|...|W_{n-1}] + b, emitted as n_split separate
    # [tm, d] outputs (removes plain-XLA slice copies of the fused result).
    out_refs = refs[:-1]
    acc_ref = refs[-1]

    @pl.when(pl.program_id(1) == 0)
    def _init():
        acc_ref[...] = jnp.zeros_like(acc_ref)

    acc_ref[...] += jnp.dot(x_ref[...], w_ref[...],
                            preferred_element_type=jnp.float32)

    @pl.when(pl.program_id(1) == pl.num_programs(1) - 1)
    def _finalize():
        out = acc_ref[...] + b_ref[...]
        for s in range(n_split):
            out_refs[s][...] = out[:, s * d:(s + 1) * d].astype(out_refs[s].dtype)


def _proj_add_ln_kernel(x_ref, w_ref, b_ref, res_ref, g_ref, bln_ref,
                        o_ref, acc_ref):
    # Fused: o = LayerNorm(res + x @ w + b); grid = (rows, K-chunks).
    @pl.when(pl.program_id(1) == 0)
    def _init():
        acc_ref[...] = jnp.zeros_like(acc_ref)

    acc_ref[...] += jnp.dot(x_ref[...], w_ref[...],
                            preferred_element_type=jnp.float32)

    @pl.when(pl.program_id(1) == pl.num_programs(1) - 1)
    def _finalize():
        z = acc_ref[...] + b_ref[...] + res_ref[...].astype(jnp.float32)
        inv_d = 1.0 / z.shape[-1]
        # Single-pass statistics: one traversal for sum and sum-of-squares.
        s1 = jnp.sum(z, axis=-1, keepdims=True)
        s2 = jnp.sum(z * z, axis=-1, keepdims=True)
        mu = s1 * inv_d
        var = s2 * inv_d - mu * mu
        zn = (z - mu) * jax.lax.rsqrt(var + 1e-5)
        o_ref[...] = (zn * g_ref[...] + bln_ref[...]).astype(o_ref.dtype)


def _attention_kernel(q_ref, k_ref, v_ref, mask_ref, o_ref, *, h, dk):
    # q: [tq, H*dk], k/v: [Sk, H*dk], mask: [tq, Sk] (additive, f32).
    # 1/sqrt(dk) is already folded into the Q projection weights.
    # Heads are static lane slices; the per-head contexts are concatenated and the
    # output is written with a single lane-dense [tq, D] store.
    # TODO(synk): flash-style kv tiling / head-major grid for long Sk or many heads.
    mask = mask_ref[...]
    outs = []
    for i in range(h):
        lo, hi = i * dk, (i + 1) * dk
        q = q_ref[:, lo:hi]                                   # [tq, dk] bf16
        k = k_ref[:, lo:hi]                                   # [Sk, dk] bf16
        v = v_ref[:, lo:hi]                                   # [Sk, dk] bf16
        # NT matmul: contract dk of both operands (no explicit k transpose).
        s = jax.lax.dot_general(q, k, (((1,), (1,)), ((), ())),
                                preferred_element_type=jnp.float32)  # [tq, Sk]
        s = s + mask
        m = jnp.max(s, axis=-1, keepdims=True)
        e = jnp.exp(s - m)
        denom = jnp.sum(e, axis=-1, keepdims=True)
        attn = (e * pl.reciprocal(denom, approx=True)).astype(v.dtype)
        outs.append(jnp.dot(attn, v, preferred_element_type=jnp.float32))
    o_ref[...] = jnp.concatenate(outs, axis=-1).astype(o_ref.dtype)


# ---------------------------------------------------------------------------
# Pallas wrappers
# ---------------------------------------------------------------------------

def linear(x2d, w, b, *, relu=False, out_dtype=jnp.bfloat16,
           tm=None, tn=None, tk=None):
    """o = [relu](x2d @ w + b); x2d: [M, K] bf16, w: [K, N] bf16, b: [N] f32."""
    M, K = x2d.shape
    N = w.shape[1]
    tm = _pick_tile(M, tm or _DEF_TM)
    tn = _pick_tile(N, tn or _DEF_TN)
    tk = _pick_tile(K, tk or _DEF_TK)
    kernel = functools.partial(_matmul_bias_kernel, relu=relu)
    return pl.pallas_call(
        kernel,
        out_shape=jax.ShapeDtypeStruct((M, N), out_dtype),
        grid_spec=pltpu.PrefetchScalarGridSpec(
            num_scalar_prefetch=0,
            grid=(M // tm, N // tn, K // tk),
            in_specs=[
                pl.BlockSpec((tm, tk), lambda i, j, k: (i, k)),
                pl.BlockSpec((tk, tn), lambda i, j, k: (k, j)),
                pl.BlockSpec((1, tn), lambda i, j, k: (0, j)),
            ],
            out_specs=pl.BlockSpec((tm, tn), lambda i, j, k: (i, j)),
            scratch_shapes=[pltpu.VMEM((tm, tn), jnp.float32)],
        ),
        compiler_params=pltpu.CompilerParams(
            dimension_semantics=("parallel", "parallel", "arbitrary"),
            vmem_limit_bytes=_VMEM_LIMIT),
    )(x2d, w, b.reshape(1, N))


def fused_split_proj(x2d, w, b, n_split, *, out_dtype=jnp.bfloat16):
    """x2d @ w + b with w = [W0|...|W_{n-1}], returned as n_split arrays [M, D]."""
    M, K = x2d.shape
    n_tot = w.shape[1]
    D = n_tot // n_split
    tm = _pick_tile(M, _DEF_TM)
    tk = _pick_tile(K, _DEF_TK)
    kernel = functools.partial(_split_proj_kernel, d=D, n_split=n_split)
    out_shape = tuple(jax.ShapeDtypeStruct((M, D), out_dtype)
                      for _ in range(n_split))
    out_specs = [pl.BlockSpec((tm, D), lambda i, k: (i, 0))
                 for _ in range(n_split)]
    return pl.pallas_call(
        kernel,
        out_shape=out_shape,
        grid_spec=pltpu.PrefetchScalarGridSpec(
            num_scalar_prefetch=0,
            grid=(M // tm, K // tk),
            in_specs=[
                pl.BlockSpec((tm, tk), lambda i, k: (i, k)),
                pl.BlockSpec((tk, n_tot), lambda i, k: (k, 0)),
                pl.BlockSpec((1, n_tot), lambda i, k: (0, 0)),
            ],
            out_specs=out_specs,
            scratch_shapes=[pltpu.VMEM((tm, n_tot), jnp.float32)],
        ),
        compiler_params=pltpu.CompilerParams(
            dimension_semantics=("parallel", "arbitrary"),
            vmem_limit_bytes=_VMEM_LIMIT),
    )(x2d, w, b.reshape(1, n_tot))


def proj_add_layernorm(x2d, w, b, res2d, gamma, beta, *, out_dtype=jnp.bfloat16):
    """o = LayerNorm(res2d + x2d @ w + b) over the last dim (eps=1e-5)."""
    M, K = x2d.shape
    D = w.shape[1]
    # Untiled-D epilogue: keep the footprint bounded on 64 MiB VMEM parts.
    if (not _BIG_VMEM) and D >= 2048:
        tm_pref, tk_pref = 128, 256
    else:
        tm_pref, tk_pref = 256, 512
    tm, tk = _pick_tile(M, tm_pref), _pick_tile(K, tk_pref)
    return pl.pallas_call(
        _proj_add_ln_kernel,
        out_shape=jax.ShapeDtypeStruct((M, D), out_dtype),
        grid_spec=pltpu.PrefetchScalarGridSpec(
            num_scalar_prefetch=0,
            grid=(M // tm, K // tk),
            in_specs=[
                pl.BlockSpec((tm, tk), lambda i, k: (i, k)),
                pl.BlockSpec((tk, D), lambda i, k: (k, 0)),
                pl.BlockSpec((1, D), lambda i, k: (0, 0)),
                pl.BlockSpec((tm, D), lambda i, k: (i, 0)),
                pl.BlockSpec((1, D), lambda i, k: (0, 0)),
                pl.BlockSpec((1, D), lambda i, k: (0, 0)),
            ],
            out_specs=pl.BlockSpec((tm, D), lambda i, k: (i, 0)),
            scratch_shapes=[pltpu.VMEM((tm, D), jnp.float32)],
        ),
        compiler_params=pltpu.CompilerParams(
            dimension_semantics=("parallel", "arbitrary"),
            vmem_limit_bytes=_VMEM_LIMIT),
    )(x2d, w, b.reshape(1, D), res2d, gamma.reshape(1, D), beta.reshape(1, D))


def attention(q, k, v, mask, h, *, tq_pref=256):
    """q: [B, Sq, D], k/v: [B, Sk, D] (heads packed on last dim), mask: [Sq, Sk]."""
    B, Sq, D = q.shape
    Sk = k.shape[1]
    dk = D // h
    tq = _pick_tile(Sq, tq_pref)
    kernel = functools.partial(_attention_kernel, h=h, dk=dk)
    return pl.pallas_call(
        kernel,
        out_shape=jax.ShapeDtypeStruct((B, Sq, D), jnp.bfloat16),
        grid_spec=pltpu.PrefetchScalarGridSpec(
            num_scalar_prefetch=0,
            grid=(B, Sq // tq),
            in_specs=[
                pl.BlockSpec((None, tq, D), lambda b, qi: (b, qi, 0)),
                pl.BlockSpec((None, Sk, D), lambda b, qi: (b, 0, 0)),
                pl.BlockSpec((None, Sk, D), lambda b, qi: (b, 0, 0)),
                pl.BlockSpec((tq, Sk), lambda b, qi: (qi, 0)),
            ],
            out_specs=pl.BlockSpec((None, tq, D), lambda b, qi: (b, qi, 0)),
        ),
        compiler_params=pltpu.CompilerParams(
            dimension_semantics=("parallel", "parallel"),
            vmem_limit_bytes=_VMEM_LIMIT),
    )(q, k, v, mask)


# ---------------------------------------------------------------------------
# Model pieces (plain-JAX orchestration of the Pallas kernels)
# ---------------------------------------------------------------------------

def multi_head_attention_ctx(p, Q, KV, mask, h, *, self_attn):
    """Returns the concatenated head context [B, Sq, D] (output projection is fused
    into the following proj_add_layernorm call)."""
    B, Sq, D = Q.shape
    Sk = KV.shape[1]
    if self_attn:
        q2d, k2d, v2d = fused_split_proj(Q.reshape(B * Sq, D),
                                         p["w_qkv"], p["b_qkv"], 3)
        q = q2d.reshape(B, Sq, D)
        k = k2d.reshape(B, Sq, D)
        v = v2d.reshape(B, Sq, D)
    else:
        q = linear(Q.reshape(B * Sq, D), p["wq"], p["bq"]).reshape(B, Sq, D)
        k2d, v2d = fused_split_proj(KV.reshape(B * Sk, D),
                                    p["w_kv"], p["b_kv"], 2)
        k = k2d.reshape(B, Sk, D)
        v = v2d.reshape(B, Sk, D)
    return attention(q, k, v, mask, h)                                 # [B, Sq, D]


def encoder_layer(p, x, mask, h):
    B, S, D = x.shape
    x2d = x.reshape(B * S, D)
    ctx = multi_head_attention_ctx(p["mha"], x, x, mask, h, self_attn=True)
    x2d = proj_add_layernorm(ctx.reshape(B * S, D), p["mha"]["wo"], p["mha"]["bo"],
                             x2d, p["ln1_g"], p["ln1_b"])
    h1 = linear(x2d, p["ffn"]["w1"], p["ffn"]["b1"], relu=True)
    x2d = proj_add_layernorm(h1, p["ffn"]["w2"], p["ffn"]["b2"],
                             x2d, p["ln2_g"], p["ln2_b"])
    return x2d.reshape(B, S, D)


def decoder_layer(p, x, dec_mask, enc_out, mem_mask, h):
    B, S, D = x.shape
    x2d = x.reshape(B * S, D)
    ctx = multi_head_attention_ctx(p["mmha"], x, x, dec_mask, h, self_attn=True)
    x2d = proj_add_layernorm(ctx.reshape(B * S, D), p["mmha"]["wo"], p["mmha"]["bo"],
                             x2d, p["ln1_g"], p["ln1_b"])
    x = x2d.reshape(B, S, D)
    ctx = multi_head_attention_ctx(p["mha"], x, enc_out, mem_mask, h, self_attn=False)
    # NOTE: the reference module reuses layernorm1 here (layernorm3 unused).
    x2d = proj_add_layernorm(ctx.reshape(B * S, D), p["mha"]["wo"], p["mha"]["bo"],
                             x2d, p["ln1_g"], p["ln1_b"])
    h1 = linear(x2d, p["ffn"]["w1"], p["ffn"]["b1"], relu=True)
    x2d = proj_add_layernorm(h1, p["ffn"]["w2"], p["ffn"]["b2"],
                             x2d, p["ln2_g"], p["ln2_b"])
    return x2d.reshape(B, S, D)


def compute_positional_encoding(max_input_tokens, d_model):
    positions = jnp.arange(max_input_tokens, dtype=jnp.float32)[:, None]
    indices = jnp.arange(d_model // 2, dtype=jnp.float32)
    angle = positions / (10000.0 ** (2.0 * indices / d_model))
    pe = jnp.zeros((max_input_tokens, d_model), jnp.float32)
    pe = pe.at[:, 0::2].set(jnp.sin(angle))
    pe = pe.at[:, 1::2].set(jnp.cos(angle))
    return pe


def embed(emb_matrix, tokens, pe, d_model):
    # Embedding gather (glue) + sqrt(d_model) scale + positional encoding, then bf16.
    x = emb_matrix[tokens] * math.sqrt(d_model)
    S = tokens.shape[1]
    return (x + pe[:S, :]).astype(jnp.bfloat16)


def transformer_forward(params, x_tok, input_mask, y_tok, target_mask,
                        memory_mask, *, h, d_model):
    pe = params["pe"]
    x = embed(params["emb"], x_tok, pe, d_model)
    y = embed(params["emb"], y_tok, pe, d_model)
    for lp in params["encoders"]:
        x = encoder_layer(lp, x, input_mask, h)
    for lp in params["decoders"]:
        y = decoder_layer(lp, y, target_mask, x, memory_mask, h)
    # Tied target projection: y @ emb^T (no bias).  The weight was transposed once
    # at init and padded to a 128-multiple column count; pad columns sliced off here.
    B, Sd, D = y.shape
    vocab = params["emb"].shape[0]
    logits = linear(y.reshape(B * Sd, D), params["emb_t"], params["proj_b"],
                    out_dtype=jnp.float32)
    return logits[:, :vocab].reshape(B, Sd, vocab)


# ---------------------------------------------------------------------------
# Deterministic parameter initialization
# ---------------------------------------------------------------------------

def _init_linear(key, din, dout, scale=0.02):
    k1, k2 = jax.random.split(key)
    w = jax.random.normal(k1, (din, dout), jnp.float32) * scale
    b = jax.random.normal(k2, (dout,), jnp.float32) * scale
    return w, b


def _init_mha(key, d_model, h):
    dk = d_model // h
    qscale = 1.0 / math.sqrt(dk)          # fold softmax scale into Q projection
    ks = jax.random.split(key, 4)
    wq, bq = _init_linear(ks[0], d_model, d_model)
    wk, bk = _init_linear(ks[1], d_model, d_model)
    wv, bv = _init_linear(ks[2], d_model, d_model)
    wo, bo = _init_linear(ks[3], d_model, d_model)
    wq_s, bq_s = wq * qscale, bq * qscale
    return dict(
        wq=wq_s.astype(jnp.bfloat16), bq=bq_s,
        w_qkv=jnp.concatenate([wq_s, wk, wv], axis=1).astype(jnp.bfloat16),
        b_qkv=jnp.concatenate([bq_s, bk, bv]),
        w_kv=jnp.concatenate([wk, wv], axis=1).astype(jnp.bfloat16),
        b_kv=jnp.concatenate([bk, bv]),
        wo=wo.astype(jnp.bfloat16), bo=bo)


def _init_ffn(key, d_model, d_ff):
    k1, k2 = jax.random.split(key)
    w1, b1 = _init_linear(k1, d_model, d_ff)
    w2, b2 = _init_linear(k2, d_ff, d_model)
    return dict(w1=w1.astype(jnp.bfloat16), b1=b1,
                w2=w2.astype(jnp.bfloat16), b2=b2)


def _init_encoder(key, d_model, h, d_ff):
    k1, k2 = jax.random.split(key)
    return dict(mha=_init_mha(k1, d_model, h), ffn=_init_ffn(k2, d_model, d_ff),
                ln1_g=jnp.ones((d_model,), jnp.float32),
                ln1_b=jnp.zeros((d_model,), jnp.float32),
                ln2_g=jnp.ones((d_model,), jnp.float32),
                ln2_b=jnp.zeros((d_model,), jnp.float32))


def _init_decoder(key, d_model, h, d_ff):
    k1, k2, k3 = jax.random.split(key, 3)
    return dict(mmha=_init_mha(k1, d_model, h), mha=_init_mha(k2, d_model, h),
                ffn=_init_ffn(k3, d_model, d_ff),
                ln1_g=jnp.ones((d_model,), jnp.float32),
                ln1_b=jnp.zeros((d_model,), jnp.float32),
                ln2_g=jnp.ones((d_model,), jnp.float32),
                ln2_b=jnp.zeros((d_model,), jnp.float32))


def init_transformer(key, vocab_size, N, d_model, h, d_ff, max_input_tokens):
    keys = jax.random.split(key, 2 * N + 1)
    emb = jax.random.normal(keys[0], (vocab_size, d_model), jnp.float32) * 0.02
    encoders = [_init_encoder(keys[1 + i], d_model, h, d_ff) for i in range(N)]
    decoders = [_init_decoder(keys[1 + N + i], d_model, h, d_ff) for i in range(N)]
    # Tied projection weight: transpose once, pad columns to a 128 multiple so the
    # vocab-matmul N tile is always bounded.
    vocab_pad = ((vocab_size + 127) // 128) * 128
    emb_t = emb.T
    if vocab_pad != vocab_size:
        emb_t = jnp.pad(emb_t, ((0, 0), (0, vocab_pad - vocab_size)))
    return dict(emb=emb,
                emb_t=emb_t.astype(jnp.bfloat16),
                proj_b=jnp.zeros((vocab_pad,), jnp.float32),
                encoders=encoders, decoders=decoders,
                pe=compute_positional_encoding(max_input_tokens, d_model))


# ---------------------------------------------------------------------------
# Main
# ---------------------------------------------------------------------------

if __name__ == "__main__":
    vocab_size, N, d_model, h, d_ff = 64, 2, 32, 4, 64
    max_input_tokens = 32
    B, S_enc, S_dec = 2, 8, 8

    root = jax.random.PRNGKey(0)
    k_params, k_xtok, k_ytok = jax.random.split(root, 3)

    params = init_transformer(k_params, vocab_size, N, d_model, h, d_ff,
                              max_input_tokens)

    x_tok = jax.random.randint(k_xtok, (B, S_enc), 0, vocab_size, jnp.int32)
    y_tok = jax.random.randint(k_ytok, (B, S_dec), 0, vocab_size, jnp.int32)

    # Additive attention masks (broadcast over batch/heads):
    input_mask = jnp.zeros((S_enc, S_enc), jnp.float32)          # no masking
    causal = jnp.where(jnp.arange(S_dec)[:, None] >= jnp.arange(S_dec)[None, :],
                       0.0, -1e9).astype(jnp.float32)            # causal mask
    target_mask = causal
    memory_mask = jnp.zeros((S_dec, S_enc), jnp.float32)         # no masking

    forward = jax.jit(functools.partial(transformer_forward, h=h, d_model=d_model))
    logits = forward(params, x_tok, input_mask, y_tok, target_mask, memory_mask)
    logits = jax.block_until_ready(logits)

    assert logits.shape == (B, S_dec, vocab_size)
    assert bool(jnp.all(jnp.isfinite(logits)))
    print("KERNEL_OK")
</pallas_src>

<mosaic_0001>
module attributes {stable_mosaic.version = 11 : i64} {
  func.func @_split_proj_kernel(%arg0: i32, %arg1: i32, %arg2: memref<16x32xbf16, #tpu.memory_space<vmem>>, %arg3: memref<32x96xbf16, #tpu.memory_space<vmem>>, %arg4: memref<1x96xf32, #tpu.memory_space<vmem>>, %arg5: memref<16x32xbf16, #tpu.memory_space<vmem>>, %arg6: memref<16x32xbf16, #tpu.memory_space<vmem>>, %arg7: memref<16x32xbf16, #tpu.memory_space<vmem>>, %arg8: memref<16x96xf32, #tpu.memory_space<vmem>>) attributes {dimension_semantics = [#tpu.dimension_semantics<parallel>, #tpu.dimension_semantics<arbitrary>], iteration_bounds = array<i64: 1, 1>, scalar_prefetch = 0 : i64, scratch_operands = 1 : i64, tpu.core_type = #tpu.core_type<tc>, window_params = [{transform_indices = @transform_0, window_bounds = array<i64: 16, 32>}, {transform_indices = @transform_1, window_bounds = array<i64: 32, 96>}, {pipeline_mode = #tpu.pipeline_mode<synchronous>, transform_indices = @transform_2, window_bounds = array<i64: 1, 96>}, {transform_indices = @transform_3, window_bounds = array<i64: 16, 32>}, {transform_indices = @transform_4, window_bounds = array<i64: 16, 32>}, {transform_indices = @transform_5, window_bounds = array<i64: 16, 32>}]} {
    %c0_i32 = arith.constant 0 : i32
    %0 = arith.cmpi eq, %arg1, %c0_i32 : i32
    %1 = arith.extui %0 : i1 to i32
    %c0_i32_0 = arith.constant 0 : i32
    %2 = arith.cmpi ne, %1, %c0_i32_0 : i32
    scf.if %2 {
      %cst_10 = arith.constant 0.000000e+00 : f32
      %12 = vector.broadcast %cst_10 : f32 to vector<16x96xf32>
      %c0_11 = arith.constant 0 : index
      %c0_12 = arith.constant 0 : index
      %13 = vector.load %arg8[%c0_11, %c0_12] : memref<16x96xf32, #tpu.memory_space<vmem>>, vector<16x96xf32>
      tpu.vector_store %arg8[%c0_11, %c0_12], %12 {strides = array<i32>} : memref<16x96xf32, #tpu.memory_space<vmem>>, vector<16x96xf32>,
    } else {
    }
    %c0 = arith.constant 0 : index
    %c0_1 = arith.constant 0 : index
    %3 = vector.load %arg8[%c0, %c0_1] : memref<16x96xf32, #tpu.memory_space<vmem>>, vector<16x96xf32>
    %c0_2 = arith.constant 0 : index
    %c0_3 = arith.constant 0 : index
    %4 = vector.load %arg2[%c0_2, %c0_3] : memref<16x32xbf16, #tpu.memory_space<vmem>>, vector<16x32xbf16>
    %c0_4 = arith.constant 0 : index
    %c0_5 = arith.constant 0 : index
    %5 = vector.load %arg3[%c0_4, %c0_5] : memref<32x96xbf16, #tpu.memory_space<vmem>>, vector<32x96xbf16>
    %cst = arith.constant dense<0.000000e+00> : vector<16x96xf32>
    %6 = tpu.matmul %4, %5, %cst {dimension_numbers = #tpu.dot_dimension_numbers<[1], [0], [0], [1], [0, 0, 1, 1], [], []>} : vector<16x32xbf16>, vector<32x96xbf16>, vector<16x96xf32> -> vector<16x96xf32>
    %7 = arith.addf %3, %6 : vector<16x96xf32>
    %c0_6 = arith.constant 0 : index
    %c0_7 = arith.constant 0 : index
    %8 = vector.load %arg8[%c0_6, %c0_7] : memref<16x96xf32, #tpu.memory_space<vmem>>, vector<16x96xf32>
    tpu.vector_store %arg8[%c0_6, %c0_7], %7 {strides = array<i32>} : memref<16x96xf32, #tpu.memory_space<vmem>>, vector<16x96xf32>,
    %c0_i32_8 = arith.constant 0 : i32
    %9 = arith.cmpi eq, %arg1, %c0_i32_8 : i32
    %10 = arith.extui %9 : i1 to i32
    %c0_i32_9 = arith.constant 0 : i32
    %11 = arith.cmpi ne, %10, %c0_i32_9 : i32
    scf.if %11 {
      %c0_10 = arith.constant 0 : index
      %c0_11 = arith.constant 0 : index
      %12 = vector.load %arg8[%c0_10, %c0_11] : memref<16x96xf32, #tpu.memory_space<vmem>>, vector<16x96xf32>
      %c0_12 = arith.constant 0 : index
      %c0_13 = arith.constant 0 : index
      %13 = vector.load %arg4[%c0_12, %c0_13] : memref<1x96xf32, #tpu.memory_space<vmem>>, vector<1x96xf32>
      %14 = vector.broadcast %13 : vector<1x96xf32> to vector<16x96xf32>
      %15 = arith.addf %12, %14 : vector<16x96xf32>
      %16 = vector.extract_strided_slice %15 {offsets = [0, 0], sizes = [16, 32], strides = [1, 1]} : vector<16x96xf32> to vector<16x32xf32>
      %17 = arith.truncf %16 : vector<16x32xf32> to vector<16x32xbf16>
      %c0_14 = arith.constant 0 : index
      %c0_15 = arith.constant 0 : index
      %18 = vector.load %arg5[%c0_14, %c0_15] : memref<16x32xbf16, #tpu.memory_space<vmem>>, vector<16x32xbf16>
      tpu.vector_store %arg5[%c0_14, %c0_15], %17 {strides = array<i32>} : memref<16x32xbf16, #tpu.memory_space<vmem>>, vector<16x32xbf16>,
      %19 = vector.extract_strided_slice %15 {offsets = [0, 32], sizes = [16, 32], strides = [1, 1]} : vector<16x96xf32> to vector<16x32xf32>
      %20 = arith.truncf %19 : vector<16x32xf32> to vector<16x32xbf16>
      %c0_16 = arith.constant 0 : index
      %c0_17 = arith.constant 0 : index
      %21 = vector.load %arg6[%c0_16, %c0_17] : memref<16x32xbf16, #tpu.memory_space<vmem>>, vector<16x32xbf16>
      tpu.vector_store %arg6[%c0_16, %c0_17], %20 {strides = array<i32>} : memref<16x32xbf16, #tpu.memory_space<vmem>>, vector<16x32xbf16>,
      %22 = vector.extract_strided_slice %15 {offsets = [0, 64], sizes = [16, 32], strides = [1, 1]} : vector<16x96xf32> to vector<16x32xf32>
      %23 = arith.truncf %22 : vector<16x32xf32> to vector<16x32xbf16>
      %c0_18 = arith.constant 0 : index
      %c0_19 = arith.constant 0 : index
      %24 = vector.load %arg7[%c0_18, %c0_19] : memref<16x32xbf16, #tpu.memory_space<vmem>>, vector<16x32xbf16>
      tpu.vector_store %arg7[%c0_18, %c0_19], %23 {strides = array<i32>} : memref<16x32xbf16, #tpu.memory_space<vmem>>, vector<16x32xbf16>,
    } else {
    }
    return
  }
  func.func @transform_0(%arg0: i32, %arg1: i32) -> (i32, i32) {
    %c0_i32 = arith.constant 0 : i32
    return %arg0, %arg1 : i32, i32
  }
  func.func @transform_1(%arg0: i32, %arg1: i32) -> (i32, i32) {
    %c0_i32 = arith.constant 0 : i32
    %c0_i32_0 = arith.constant 0 : i32
    return %arg1, %c0_i32 : i32, i32
  }
  func.func @transform_2(%arg0: i32, %arg1: i32) -> (i32, i32) {
    %c0_i32 = arith.constant 0 : i32
    %c0_i32_0 = arith.constant 0 : i32
    %c0_i32_1 = arith.constant 0 : i32
    return %c0_i32, %c0_i32_0 : i32, i32
  }
  func.func @transform_3(%arg0: i32, %arg1: i32) -> (i32, i32) {
    %c0_i32 = arith.constant 0 : i32
    %c0_i32_0 = arith.constant 0 : i32
    return %arg0, %c0_i32 : i32, i32
  }
  func.func @transform_4(%arg0: i32, %arg1: i32) -> (i32, i32) {
    %c0_i32 = arith.constant 0 : i32
    %c0_i32_0 = arith.constant 0 : i32
    return %arg0, %c0_i32 : i32, i32
  }
  func.func @transform_5(%arg0: i32, %arg1: i32) -> (i32, i32) {
    %c0_i32 = arith.constant 0 : i32
    %c0_i32_0 = arith.constant 0 : i32
    return %arg0, %c0_i32 : i32, i32
  }
}

module attributes {stable_mosaic.version = 11 : i64} {
  func.func @_proj_add_ln_kernel(%arg0: i32, %arg1: i32, %arg2: memref<16x32xbf16, #tpu.memory_space<vmem>>, %arg3: memref<32x32xbf16, #tpu.memory_space<vmem>>, %arg4: memref<1x32xf32, #tpu.memory_space<vmem>>, %arg5: memref<16x32xbf16, #tpu.memory_space<vmem>>, %arg6: memref<1x32xf32, #tpu.memory_space<vmem>>, %arg7: memref<1x32xf32, #tpu.memory_space<vmem>>, %arg8: memref<16x32xbf16, #tpu.memory_space<vmem>>, %arg9: memref<16x32xf32, #tpu.memory_space<vmem>>) attributes {dimension_semantics = [#tpu.dimension_semantics<parallel>, #tpu.dimension_semantics<arbitrary>], iteration_bounds = array<i64: 1, 1>, scalar_prefetch = 0 : i64, scratch_operands = 1 : i64, tpu.core_type = #tpu.core_type<tc>, window_params = [{transform_indices = @transform_0, window_bounds = array<i64: 16, 32>}, {transform_indices = @transform_1, window_bounds = array<i64: 32, 32>}, {pipeline_mode = #tpu.pipeline_mode<synchronous>, transform_indices = @transform_2, window_bounds = array<i64: 1, 32>}, {transform_indices = @transform_3, window_bounds = array<i64: 16, 32>}, {pipeline_mode = #tpu.pipeline_mode<synchronous>, transform_indices = @transform_4, window_bounds = array<i64: 1, 32>}, {pipeline_mode = #tpu.pipeline_mode<synchronous>, transform_indices = @transform_5, window_bounds = array<i64: 1, 32>}, {transform_indices = @transform_6, window_bounds = array<i64: 16, 32>}]} {
    %c0_i32 = arith.constant 0 : i32
    %0 = arith.cmpi eq, %arg1, %c0_i32 : i32
    %1 = arith.extui %0 : i1 to i32
    %c0_i32_0 = arith.constant 0 : i32
    %2 = arith.cmpi ne, %1, %c0_i32_0 : i32
    scf.if %2 {
      %cst_10 = arith.constant 0.000000e+00 : f32
      %12 = vector.broadcast %cst_10 : f32 to vector<16x32xf32>
      %c0_11 = arith.constant 0 : index
      %c0_12 = arith.constant 0 : index
      %13 = vector.load %arg9[%c0_11, %c0_12] : memref<16x32xf32, #tpu.memory_space<vmem>>, vector<16x32xf32>
      tpu.vector_store %arg9[%c0_11, %c0_12], %12 {strides = array<i32>} : memref<16x32xf32, #tpu.memory_space<vmem>>, vector<16x32xf32>,
    } else {
    }
    %c0 = arith.constant 0 : index
    %c0_1 = arith.constant 0 : index
    %3 = vector.load %arg9[%c0, %c0_1] : memref<16x32xf32, #tpu.memory_space<vmem>>, vector<16x32xf32>
    %c0_2 = arith.constant 0 : index
    %c0_3 = arith.constant 0 : index
    %4 = vector.load %arg2[%c0_2, %c0_3] : memref<16x32xbf16, #tpu.memory_space<vmem>>, vector<16x32xbf16>
    %c0_4 = arith.constant 0 : index
    %c0_5 = arith.constant 0 : index
    %5 = vector.load %arg3[%c0_4, %c0_5] : memref<32x32xbf16, #tpu.memory_space<vmem>>, vector<32x32xbf16>
    %cst = arith.constant dense<0.000000e+00> : vector<16x32xf32>
    %6 = tpu.matmul %4, %5, %cst {dimension_numbers = #tpu.dot_dimension_numbers<[1], [0], [0], [1], [0, 0, 1, 1], [], []>} : vector<16x32xbf16>, vector<32x32xbf16>, vector<16x32xf32> -> vector<16x32xf32>
    %7 = arith.addf %3, %6 : vector<16x32xf32>
    %c0_6 = arith.constant 0 : index
    %c0_7 = arith.constant 0 : index
    %8 = vector.load %arg9[%c0_6, %c0_7] : memref<16x32xf32, #tpu.memory_space<vmem>>, vector<16x32xf32>
    tpu.vector_store %arg9[%c0_6, %c0_7], %7 {strides = array<i32>} : memref<16x32xf32, #tpu.memory_space<vmem>>, vector<16x32xf32>,
    %c0_i32_8 = arith.constant 0 : i32
    %9 = arith.cmpi eq, %arg1, %c0_i32_8 : i32
    %10 = arith.extui %9 : i1 to i32
    %c0_i32_9 = arith.constant 0 : i32
    %11 = arith.cmpi ne, %10, %c0_i32_9 : i32
    scf.if %11 {
      %c0_10 = arith.constant 0 : index
      %c0_11 = arith.constant 0 : index
      %12 = vector.load %arg9[%c0_10, %c0_11] : memref<16x32xf32, #tpu.memory_space<vmem>>, vector<16x32xf32>
      %c0_12 = arith.constant 0 : index
      %c0_13 = arith.constant 0 : index
      %13 = vector.load %arg4[%c0_12, %c0_13] : memref<1x32xf32, #tpu.memory_space<vmem>>, vector<1x32xf32>
      %14 = vector.broadcast %13 : vector<1x32xf32> to vector<16x32xf32>
      %15 = arith.addf %12, %14 : vector<16x32xf32>
      %c0_14 = arith.constant 0 : index
      %c0_15 = arith.constant 0 : index
      %16 = vector.load %arg5[%c0_14, %c0_15] : memref<16x32xbf16, #tpu.memory_space<vmem>>, vector<16x32xbf16>
      %17 = arith.extf %16 : vector<16x32xbf16> to vector<16x32xf32>
      %18 = arith.addf %15, %17 : vector<16x32xf32>
      %cst_16 = arith.constant dense<0.000000e+00> : vector<16xf32>
      %19 = vector.multi_reduction <add>, %18, %cst_16 [1] : vector<16x32xf32> to vector<16xf32>
      %20 = vector.shape_cast %19 : vector<16xf32> to vector<16x1xf32>
      %21 = arith.mulf %18, %18 : vector<16x32xf32>
      %cst_17 = arith.constant dense<0.000000e+00> : vector<16xf32>
      %22 = vector.multi_reduction <add>, %21, %cst_17 [1] : vector<16x32xf32> to vector<16xf32>
      %23 = vector.shape_cast %22 : vector<16xf32> to vector<16x1xf32>
      %cst_18 = arith.constant 3.125000e-02 : f32
      %24 = vector.broadcast %cst_18 : f32 to vector<16x1xf32>
      %25 = arith.mulf %20, %24 : vector<16x1xf32>
      %cst_19 = arith.constant 3.125000e-02 : f32
      %26 = vector.broadcast %cst_19 : f32 to vector<16x1xf32>
      %27 = arith.mulf %23, %26 : vector<16x1xf32>
      %28 = arith.mulf %25, %25 : vector<16x1xf32>
      %29 = arith.subf %27, %28 : vector<16x1xf32>
      %30 = vector.broadcast %25 : vector<16x1xf32> to vector<16x32xf32>
      %31 = arith.subf %18, %30 : vector<16x32xf32>
      %cst_20 = arith.constant 9.99999974E-6 : f32
      %32 = vector.broadcast %cst_20 : f32 to vector<16x1xf32>
      %33 = arith.addf %29, %32 : vector<16x1xf32>
      %34 = math.rsqrt %33 : vector<16x1xf32>
      %35 = vector.broadcast %34 : vector<16x1xf32> to vector<16x32xf32>
      %36 = arith.mulf %31, %35 : vector<16x32xf32>
      %c0_21 = arith.constant 0 : index
      %c0_22 = arith.constant 0 : index
      %37 = vector.load %arg6[%c0_21, %c0_22] : memref<1x32xf32, #tpu.memory_space<vmem>>, vector<1x32xf32>
      %38 = vector.broadcast %37 : vector<1x32xf32> to vector<16x32xf32>
      %39 = arith.mulf %36, %38 : vector<16x32xf32>
      %c0_23 = arith.constant 0 : index
      %c0_24 = arith.constant 0 : index
      %40 = vector.load %arg7[%c0_23, %c0_24] : memref<1x32xf32, #tpu.memory_space<vmem>>, vector<1x32xf32>
      %41 = vector.broadcast %40 : vector<1x32xf32> to vector<16x32xf32>
      %42 = arith.addf %39, %41 : vector<16x32xf32>
      %43 = arith.truncf %42 : vector<16x32xf32> to vector<16x32xbf16>
      %c0_25 = arith.constant 0 : index
      %c0_26 = arith.constant 0 : index
      %44 = vector.load %arg8[%c0_25, %c0_26] : memref<16x32xbf16, #tpu.memory_space<vmem>>, vector<16x32xbf16>
      tpu.vector_store %arg8[%c0_25, %c0_26], %43 {strides = array<i32>} : memref<16x32xbf16, #tpu.memory_space<vmem>>, vector<16x32xbf16>,
    } else {
    }
    return
  }
  func.func @transform_0(%arg0: i32, %arg1: i32) -> (i32, i32) {
    %c0_i32 = arith.constant 0 : i32
    return %arg0, %arg1 : i32, i32
  }
  func.func @transform_1(%arg0: i32, %arg1: i32) -> (i32, i32) {
    %c0_i32 = arith.constant 0 : i32
    %c0_i32_0 = arith.constant 0 : i32
    return %arg1, %c0_i32 : i32, i32
  }
  func.func @transform_2(%arg0: i32, %arg1: i32) -> (i32, i32) {
    %c0_i32 = arith.constant 0 : i32
    %c0_i32_0 = arith.constant 0 : i32
    %c0_i32_1 = arith.constant 0 : i32
    return %c0_i32, %c0_i32_0 : i32, i32
  }
  func.func @transform_3(%arg0: i32, %arg1: i32) -> (i32, i32) {
    %c0_i32 = arith.constant 0 : i32
    %c0_i32_0 = arith.constant 0 : i32
    return %arg0, %c0_i32 : i32, i32
  }
  func.func @transform_4(%arg0: i32, %arg1: i32) -> (i32, i32) {
    %c0_i32 = arith.constant 0 : i32
    %c0_i32_0 = arith.constant 0 : i32
    %c0_i32_1 = arith.constant 0 : i32
    return %c0_i32, %c0_i32_0 : i32, i32
  }
  func.func @transform_5(%arg0: i32, %arg1: i32) -> (i32, i32) {
    %c0_i32 = arith.constant 0 : i32
    %c0_i32_0 = arith.constant 0 : i32
    %c0_i32_1 = arith.constant 0 : i32
    return %c0_i32, %c0_i32_0 : i32, i32
  }
  func.func @transform_6(%arg0: i32, %arg1: i32) -> (i32, i32) {
    %c0_i32 = arith.constant 0 : i32
    %c0_i32_0 = arith.constant 0 : i32
    return %arg0, %c0_i32 : i32, i32
  }
}

module attributes {stable_mosaic.version = 11 : i64} {
  func.func @_attention_kernel(%arg0: i32, %arg1: i32, %arg2: memref<1x8x32xbf16, #tpu.memory_space<vmem>>, %arg3: memref<1x8x32xbf16, #tpu.memory_space<vmem>>, %arg4: memref<1x8x32xbf16, #tpu.memory_space<vmem>>, %arg5: memref<8x8xf32, #tpu.memory_space<vmem>>, %arg6: memref<1x8x32xbf16, #tpu.memory_space<vmem>>) attributes {dimension_semantics = [#tpu.dimension_semantics<parallel>, #tpu.dimension_semantics<parallel>], iteration_bounds = array<i64: 2, 1>, scalar_prefetch = 0 : i64, scratch_operands = 0 : i64, tpu.core_type = #tpu.core_type<tc>, window_params = [{transform_indices = @transform_0, window_bounds = array<i64: 1, 8, 32>}, {transform_indices = @transform_1, window_bounds = array<i64: 1, 8, 32>}, {transform_indices = @transform_2, window_bounds = array<i64: 1, 8, 32>}, {transform_indices = @transform_3, window_bounds = array<i64: 8, 8>}, {transform_indices = @transform_4, window_bounds = array<i64: 1, 8, 32>}]} {
    %c0 = arith.constant 0 : index
    %c0_0 = arith.constant 0 : index
    %0 = vector.load %arg5[%c0, %c0_0] : memref<8x8xf32, #tpu.memory_space<vmem>>, vector<8x8xf32>
    %c0_1 = arith.constant 0 : index
    %c0_2 = arith.constant 0 : index
    %c0_3 = arith.constant 0 : index
    %1 = vector.load %arg2[%c0_1, %c0_2, %c0_3] : memref<1x8x32xbf16, #tpu.memory_space<vmem>>, vector<1x8x8xbf16>
    %2 = vector.shape_cast %1 : vector<1x8x8xbf16> to vector<8x8xbf16>
    %c0_4 = arith.constant 0 : index
    %c0_5 = arith.constant 0 : index
    %c0_6 = arith.constant 0 : index
    %3 = vector.load %arg3[%c0_4, %c0_5, %c0_6] : memref<1x8x32xbf16, #tpu.memory_space<vmem>>, vector<1x8x8xbf16>
    %4 = vector.shape_cast %3 : vector<1x8x8xbf16> to vector<8x8xbf16>
    %c0_7 = arith.constant 0 : index
    %c0_8 = arith.constant 0 : index
    %c0_9 = arith.constant 0 : index
    %5 = vector.load %arg4[%c0_7, %c0_8, %c0_9] : memref<1x8x32xbf16, #tpu.memory_space<vmem>>, vector<1x8x8xbf16>
    %6 = vector.shape_cast %5 : vector<1x8x8xbf16> to vector<8x8xbf16>
    %cst = arith.constant dense<0.000000e+00> : vector<8x8xf32>
    %7 = tpu.matmul %2, %4, %cst {dimension_numbers = #tpu.dot_dimension_numbers<[1], [1], [0], [0], [0, 0, 1, 0], [], []>} : vector<8x8xbf16>, vector<8x8xbf16>, vector<8x8xf32> -> vector<8x8xf32>
    %8 = arith.addf %7, %0 : vector<8x8xf32>
    %cst_10 = arith.constant dense<0xFF800000> : vector<8xf32>
    %9 = vector.multi_reduction <maximumf>, %8, %cst_10 [1] : vector<8x8xf32> to vector<8xf32>
    %10 = vector.shape_cast %9 : vector<8xf32> to vector<8x1xf32>
    %11 = vector.broadcast %10 : vector<8x1xf32> to vector<8x8xf32>
    %12 = arith.subf %8, %11 : vector<8x8xf32>
    %13 = math.exp %12 : vector<8x8xf32>
    %cst_11 = arith.constant dense<0.000000e+00> : vector<8xf32>
    %14 = vector.multi_reduction <add>, %13, %cst_11 [1] : vector<8x8xf32> to vector<8xf32>
    %15 = vector.shape_cast %14 : vector<8xf32> to vector<8x1xf32>
    %16 = tpu.reciprocal %15 {approx = true} : vector<8x1xf32> -> vector<8x1xf32>
    %17 = vector.broadcast %16 : vector<8x1xf32> to vector<8x8xf32>
    %18 = arith.mulf %13, %17 : vector<8x8xf32>
    %19 = arith.truncf %18 : vector<8x8xf32> to vector<8x8xbf16>
    %cst_12 = arith.constant dense<0.000000e+00> : vector<8x8xf32>
    %20 = tpu.matmul %19, %6, %cst_12 {dimension_numbers = #tpu.dot_dimension_numbers<[1], [0], [0], [1], [0, 0, 1, 1], [], []>} : vector<8x8xbf16>, vector<8x8xbf16>, vector<8x8xf32> -> vector<8x8xf32>
    %c0_13 = arith.constant 0 : index
    %c0_14 = arith.constant 0 : index
    %c8 = arith.constant 8 : index
    %21 = vector.load %arg2[%c0_13, %c0_14, %c8] : memref<1x8x32xbf16, #tpu.memory_space<vmem>>, vector<1x8x8xbf16>
    %22 = vector.shape_cast %21 : vector<1x8x8xbf16> to vector<8x8xbf16>
    %c0_15 = arith.constant 0 : index
    %c0_16 = arith.constant 0 : index
    %c8_17 = arith.constant 8 : index
    %23 = vector.load %arg3[%c0_15, %c0_16, %c8_17] : memref<1x8x32xbf16, #tpu.memory_space<vmem>>, vector<1x8x8xbf16>
    %24 = vector.shape_cast %23 : vector<1x8x8xbf16> to vector<8x8xbf16>
    %c0_18 = arith.constant 0 : index
    %c0_19 = arith.constant 0 : index
    %c8_20 = arith.constant 8 : index
    %25 = vector.load %arg4[%c0_18, %c0_19, %c8_20] : memref<1x8x32xbf16, #tpu.memory_space<vmem>>, vector<1x8x8xbf16>
    %26 = vector.shape_cast %25 : vector<1x8x8xbf16> to vector<8x8xbf16>
    %cst_21 = arith.constant dense<0.000000e+00> : vector<8x8xf32>
    %27 = tpu.matmul %22, %24, %cst_21 {dimension_numbers = #tpu.dot_dimension_numbers<[1], [1], [0], [0], [0, 0, 1, 0], [], []>} : vector<8x8xbf16>, vector<8x8xbf16>, vector<8x8xf32> -> vector<8x8xf32>
    %28 = arith.addf %27, %0 : vector<8x8xf32>
    %cst_22 = arith.constant dense<0xFF800000> : vector<8xf32>
    %29 = vector.multi_reduction <maximumf>, %28, %cst_22 [1] : vector<8x8xf32> to vector<8xf32>
    %30 = vector.shape_cast %29 : vector<8xf32> to vector<8x1xf32>
    %31 = vector.broadcast %30 : vector<8x1xf32> to vector<8x8xf32>
    %32 = arith.subf %28, %31 : vector<8x8xf32>
    %33 = math.exp %32 : vector<8x8xf32>
    %cst_23 = arith.constant dense<0.000000e+00> : vector<8xf32>
    %34 = vector.multi_reduction <add>, %33, %cst_23 [1] : vector<8x8xf32> to vector<8xf32>
    %35 = vector.shape_cast %34 : vector<8xf32> to vector<8x1xf32>
    %36 = tpu.reciprocal %35 {approx = true} : vector<8x1xf32> -> vector<8x1xf32>
    %37 = vector.broadcast %36 : vector<8x1xf32> to vector<8x8xf32>
    %38 = arith.mulf %33, %37 : vector<8x8xf32>
    %39 = arith.truncf %38 : vector<8x8xf32> to vector<8x8xbf16>
    %cst_24 = arith.constant dense<0.000000e+00> : vector<8x8xf32>
    %40 = tpu.matmul %39, %26, %cst_24 {dimension_numbers = #tpu.dot_dimension_numbers<[1], [0], [0], [1], [0, 0, 1, 1], [], []>} : vector<8x8xbf16>, vector<8x8xbf16>, vector<8x8xf32> -> vector<8x8xf32>
    %c0_25 = arith.constant 0 : index
    %c0_26 = arith.constant 0 : index
    %c16 = arith.constant 16 : index
    %41 = vector.load %arg2[%c0_25, %c0_26, %c16] : memref<1x8x32xbf16, #tpu.memory_space<vmem>>, vector<1x8x8xbf16>
    %42 = vector.shape_cast %41 : vector<1x8x8xbf16> to vector<8x8xbf16>
    %c0_27 = arith.constant 0 : index
    %c0_28 = arith.constant 0 : index
    %c16_29 = arith.constant 16 : index
    %43 = vector.load %arg3[%c0_27, %c0_28, %c16_29] : memref<1x8x32xbf16, #tpu.memory_space<vmem>>, vector<1x8x8xbf16>
    %44 = vector.shape_cast %43 : vector<1x8x8xbf16> to vector<8x8xbf16>
    %c0_30 = arith.constant 0 : index
    %c0_31 = arith.constant 0 : index
    %c16_32 = arith.constant 16 : index
    %45 = vector.load %arg4[%c0_30, %c0_31, %c16_32] : memref<1x8x32xbf16, #tpu.memory_space<vmem>>, vector<1x8x8xbf16>
    %46 = vector.shape_cast %45 : vector<1x8x8xbf16> to vector<8x8xbf16>
    %cst_33 = arith.constant dense<0.000000e+00> : vector<8x8xf32>
    %47 = tpu.matmul %42, %44, %cst_33 {dimension_numbers = #tpu.dot_dimension_numbers<[1], [1], [0], [0], [0, 0, 1, 0], [], []>} : vector<8x8xbf16>, vector<8x8xbf16>, vector<8x8xf32> -> vector<8x8xf32>
    %48 = arith.addf %47, %0 : vector<8x8xf32>
    %cst_34 = arith.constant dense<0xFF800000> : vector<8xf32>
    %49 = vector.multi_reduction <maximumf>, %48, %cst_34 [1] : vector<8x8xf32> to vector<8xf32>
    %50 = vector.shape_cast %49 : vector<8xf32> to vector<8x1xf32>
    %51 = vector.broadcast %50 : vector<8x1xf32> to vector<8x8xf32>
    %52 = arith.subf %48, %51 : vector<8x8xf32>
    %53 = math.exp %52 : vector<8x8xf32>
    %cst_35 = arith.constant dense<0.000000e+00> : vector<8xf32>
    %54 = vector.multi_reduction <add>, %53, %cst_35 [1] : vector<8x8xf32> to vector<8xf32>
    %55 = vector.shape_cast %54 : vector<8xf32> to vector<8x1xf32>
    %56 = tpu.reciprocal %55 {approx = true} : vector<8x1xf32> -> vector<8x1xf32>
    %57 = vector.broadcast %56 : vector<8x1xf32> to vector<8x8xf32>
    %58 = arith.mulf %53, %57 : vector<8x8xf32>
    %59 = arith.truncf %58 : vector<8x8xf32> to vector<8x8xbf16>
    %cst_36 = arith.constant dense<0.000000e+00> : vector<8x8xf32>
    %60 = tpu.matmul %59, %46, %cst_36 {dimension_numbers = #tpu.dot_dimension_numbers<[1], [0], [0], [1], [0, 0, 1, 1], [], []>} : vector<8x8xbf16>, vector<8x8xbf16>, vector<8x8xf32> -> vector<8x8xf32>
    %c0_37 = arith.constant 0 : index
    %c0_38 = arith.constant 0 : index
    %c24 = arith.constant 24 : index
    %61 = vector.load %arg2[%c0_37, %c0_38, %c24] : memref<1x8x32xbf16, #tpu.memory_space<vmem>>, vector<1x8x8xbf16>
    %62 = vector.shape_cast %61 : vector<1x8x8xbf16> to vector<8x8xbf16>
    %c0_39 = arith.constant 0 : index
    %c0_40 = arith.constant 0 : index
    %c24_41 = arith.constant 24 : index
    %63 = vector.load %arg3[%c0_39, %c0_40, %c24_41] : memref<1x8x32xbf16, #tpu.memory_space<vmem>>, vector<1x8x8xbf16>
    %64 = vector.shape_cast %63 : vector<1x8x8xbf16> to vector<8x8xbf16>
    %c0_42 = arith.constant 0 : index
    %c0_43 = arith.constant 0 : index
    %c24_44 = arith.constant 24 : index
    %65 = vector.load %arg4[%c0_42, %c0_43, %c24_44] : memref<1x8x32xbf16, #tpu.memory_space<vmem>>, vector<1x8x8xbf16>
    %66 = vector.shape_cast %65 : vector<1x8x8xbf16> to vector<8x8xbf16>
    %cst_45 = arith.constant dense<0.000000e+00> : vector<8x8xf32>
    %67 = tpu.matmul %62, %64, %cst_45 {dimension_numbers = #tpu.dot_dimension_numbers<[1], [1], [0], [0], [0, 0, 1, 0], [], []>} : vector<8x8xbf16>, vector<8x8xbf16>, vector<8x8xf32> -> vector<8x8xf32>
    %68 = arith.addf %67, %0 : vector<8x8xf32>
    %cst_46 = arith.constant dense<0xFF800000> : vector<8xf32>
    %69 = vector.multi_reduction <maximumf>, %68, %cst_46 [1] : vector<8x8xf32> to vector<8xf32>
    %70 = vector.shape_cast %69 : vector<8xf32> to vector<8x1xf32>
    %71 = vector.broadcast %70 : vector<8x1xf32> to vector<8x8xf32>
    %72 = arith.subf %68, %71 : vector<8x8xf32>
    %73 = math.exp %72 : vector<8x8xf32>
    %cst_47 = arith.constant dense<0.000000e+00> : vector<8xf32>
    %74 = vector.multi_reduction <add>, %73, %cst_47 [1] : vector<8x8xf32> to vector<8xf32>
    %75 = vector.shape_cast %74 : vector<8xf32> to vector<8x1xf32>
    %76 = tpu.reciprocal %75 {approx = true} : vector<8x1xf32> -> vector<8x1xf32>
    %77 = vector.broadcast %76 : vector<8x1xf32> to vector<8x8xf32>
    %78 = arith.mulf %73, %77 : vector<8x8xf32>
    %79 = arith.truncf %78 : vector<8x8xf32> to vector<8x8xbf16>
    %cst_48 = arith.constant dense<0.000000e+00> : vector<8x8xf32>
    %80 = tpu.matmul %79, %66, %cst_48 {dimension_numbers = #tpu.dot_dimension_numbers<[1], [0], [0], [1], [0, 0, 1, 1], [], []>} : vector<8x8xbf16>, vector<8x8xbf16>, vector<8x8xf32> -> vector<8x8xf32>
    %81 = tpu.concatenate %20, %40, %60, %80 in 1 : vector<8x8xf32>, vector<8x8xf32>, vector<8x8xf32>, vector<8x8xf32> -> vector<8x32xf32>
    %82 = arith.truncf %81 : vector<8x32xf32> to vector<8x32xbf16>
    %c0_49 = arith.constant 0 : index
    %c0_50 = arith.constant 0 : index
    %c0_51 = arith.constant 0 : index
    %83 = vector.load %arg6[%c0_49, %c0_50, %c0_51] : memref<1x8x32xbf16, #tpu.memory_space<vmem>>, vector<1x8x32xbf16>
    %84 = vector.shape_cast %83 : vector<1x8x32xbf16> to vector<8x32xbf16>
    %85 = vector.shape_cast %82 : vector<8x32xbf16> to vector<1x8x32xbf16>
    tpu.vector_store %arg6[%c0_49, %c0_50, %c0_51], %85 {strides = array<i32>} : memref<1x8x32xbf16, #tpu.memory_space<vmem>>, vector<1x8x32xbf16>,
    return
  }
  func.func @transform_0(%arg0: i32, %arg1: i32) -> (i32, i32, i32) {
    %c0_i32 = arith.constant 0 : i32
    %c0_i32_0 = arith.constant 0 : i32
    return %arg0, %arg1, %c0_i32 : i32, i32, i32
  }
  func.func @transform_1(%arg0: i32, %arg1: i32) -> (i32, i32, i32) {
    %c0_i32 = arith.constant 0 : i32
    %c0_i32_0 = arith.constant 0 : i32
    %c0_i32_1 = arith.constant 0 : i32
    return %arg0, %c0_i32, %c0_i32_0 : i32, i32, i32
  }
  func.func @transform_2(%arg0: i32, %arg1: i32) -> (i32, i32, i32) {
    %c0_i32 = arith.constant 0 : i32
    %c0_i32_0 = arith.constant 0 : i32
    %c0_i32_1 = arith.constant 0 : i32
    return %arg0, %c0_i32, %c0_i32_0 : i32, i32, i32
  }
  func.func @transform_3(%arg0: i32, %arg1: i32) -> (i32, i32) {
    %c0_i32 = arith.constant 0 : i32
    %c0_i32_0 = arith.constant 0 : i32
    return %arg1, %c0_i32 : i32, i32
  }
  func.func @transform_4(%arg0: i32, %arg1: i32) -> (i32, i32, i32) {
    %c0_i32 = arith.constant 0 : i32
    %c0_i32_0 = arith.constant 0 : i32
    return %arg0, %arg1, %c0_i32 : i32, i32, i32
  }
}

module attributes {stable_mosaic.version = 11 : i64} {
  func.func @_matmul_bias_kernel(%arg0: i32, %arg1: i32, %arg2: i32, %arg3: memref<16x32xbf16, #tpu.memory_space<vmem>>, %arg4: memref<32x64xbf16, #tpu.memory_space<vmem>>, %arg5: memref<1x64xf32, #tpu.memory_space<vmem>>, %arg6: memref<16x64xbf16, #tpu.memory_space<vmem>>, %arg7: memref<16x64xf32, #tpu.memory_space<vmem>>) attributes {dimension_semantics = [#tpu.dimension_semantics<parallel>, #tpu.dimension_semantics<parallel>, #tpu.dimension_semantics<arbitrary>], iteration_bounds = array<i64: 1, 1, 1>, scalar_prefetch = 0 : i64, scratch_operands = 1 : i64, tpu.core_type = #tpu.core_type<tc>, window_params = [{transform_indices = @transform_0, window_bounds = array<i64: 16, 32>}, {transform_indices = @transform_1, window_bounds = array<i64: 32, 64>}, {transform_indices = @transform_2, window_bounds = array<i64: 1, 64>}, {transform_indices = @transform_3, window_bounds = array<i64: 16, 64>}]} {
    %c0_i32 = arith.constant 0 : i32
    %0 = arith.cmpi eq, %arg2, %c0_i32 : i32
    %1 = arith.extui %0 : i1 to i32
    %c0_i32_0 = arith.constant 0 : i32
    %2 = arith.cmpi ne, %1, %c0_i32_0 : i32
    scf.if %2 {
      %cst_10 = arith.constant 0.000000e+00 : f32
      %12 = vector.broadcast %cst_10 : f32 to vector<16x64xf32>
      %c0_11 = arith.constant 0 : index
      %c0_12 = arith.constant 0 : index
      %13 = vector.load %arg7[%c0_11, %c0_12] : memref<16x64xf32, #tpu.memory_space<vmem>>, vector<16x64xf32>
      tpu.vector_store %arg7[%c0_11, %c0_12], %12 {strides = array<i32>} : memref<16x64xf32, #tpu.memory_space<vmem>>, vector<16x64xf32>,
    } else {
    }
    %c0 = arith.constant 0 : index
    %c0_1 = arith.constant 0 : index
    %3 = vector.load %arg7[%c0, %c0_1] : memref<16x64xf32, #tpu.memory_space<vmem>>, vector<16x64xf32>
    %c0_2 = arith.constant 0 : index
    %c0_3 = arith.constant 0 : index
    %4 = vector.load %arg3[%c0_2, %c0_3] : memref<16x32xbf16, #tpu.memory_space<vmem>>, vector<16x32xbf16>
    %c0_4 = arith.constant 0 : index
    %c0_5 = arith.constant 0 : index
    %5 = vector.load %arg4[%c0_4, %c0_5] : memref<32x64xbf16, #tpu.memory_space<vmem>>, vector<32x64xbf16>
    %cst = arith.constant dense<0.000000e+00> : vector<16x64xf32>
    %6 = tpu.matmul %4, %5, %cst {dimension_numbers = #tpu.dot_dimension_numbers<[1], [0], [0], [1], [0, 0, 1, 1], [], []>} : vector<16x32xbf16>, vector<32x64xbf16>, vector<16x64xf32> -> vector<16x64xf32>
    %7 = arith.addf %3, %6 : vector<16x64xf32>
    %c0_6 = arith.constant 0 : index
    %c0_7 = arith.constant 0 : index
    %8 = vector.load %arg7[%c0_6, %c0_7] : memref<16x64xf32, #tpu.memory_space<vmem>>, vector<16x64xf32>
    tpu.vector_store %arg7[%c0_6, %c0_7], %7 {strides = array<i32>} : memref<16x64xf32, #tpu.memory_space<vmem>>, vector<16x64xf32>,
    %c0_i32_8 = arith.constant 0 : i32
    %9 = arith.cmpi eq, %arg2, %c0_i32_8 : i32
    %10 = arith.extui %9 : i1 to i32
    %c0_i32_9 = arith.constant 0 : i32
    %11 = arith.cmpi ne, %10, %c0_i32_9 : i32
    scf.if %11 {
      %c0_10 = arith.constant 0 : index
      %c0_11 = arith.constant 0 : index
      %12 = vector.load %arg7[%c0_10, %c0_11] : memref<16x64xf32, #tpu.memory_space<vmem>>, vector<16x64xf32>
      %c0_12 = arith.constant 0 : index
      %c0_13 = arith.constant 0 : index
      %13 = vector.load %arg5[%c0_12, %c0_13] : memref<1x64xf32, #tpu.memory_space<vmem>>, vector<1x64xf32>
      %14 = vector.broadcast %13 : vector<1x64xf32> to vector<16x64xf32>
      %15 = arith.addf %12, %14 : vector<16x64xf32>
      %cst_14 = arith.constant 0.000000e+00 : f32
      %16 = vector.broadcast %cst_14 : f32 to vector<16x64xf32>
      %17 = arith.maximumf %15, %16 : vector<16x64xf32>
      %18 = arith.truncf %17 : vector<16x64xf32> to vector<16x64xbf16>
      %c0_15 = arith.constant 0 : index
      %c0_16 = arith.constant 0 : index
      %19 = vector.load %arg6[%c0_15, %c0_16] : memref<16x64xbf16, #tpu.memory_space<vmem>>, vector<16x64xbf16>
      tpu.vector_store %arg6[%c0_15, %c0_16], %18 {strides = array<i32>} : memref<16x64xbf16, #tpu.memory_space<vmem>>, vector<16x64xbf16>,
    } else {
    }
    return
  }
  func.func @transform_0(%arg0: i32, %arg1: i32, %arg2: i32) -> (i32, i32) {
    %c0_i32 = arith.constant 0 : i32
    return %arg0, %arg2 : i32, i32
  }
  func.func @transform_1(%arg0: i32, %arg1: i32, %arg2: i32) -> (i32, i32) {
    %c0_i32 = arith.constant 0 : i32
    return %arg2, %arg1 : i32, i32
  }
  func.func @transform_2(%arg0: i32, %arg1: i32, %arg2: i32) -> (i32, i32) {
    %c0_i32 = arith.constant 0 : i32
    %c0_i32_0 = arith.constant 0 : i32
    return %c0_i32, %arg1 : i32, i32
  }
  func.func @transform_3(%arg0: i32, %arg1: i32, %arg2: i32) -> (i32, i32) {
    %c0_i32 = arith.constant 0 : i32
    return %arg0, %arg1 : i32, i32
  }
}

module attributes {stable_mosaic.version = 11 : i64} {
  func.func @_proj_add_ln_kernel(%arg0: i32, %arg1: i32, %arg2: memref<16x64xbf16, #tpu.memory_space<vmem>>, %arg3: memref<64x32xbf16, #tpu.memory_space<vmem>>, %arg4: memref<1x32xf32, #tpu.memory_space<vmem>>, %arg5: memref<16x32xbf16, #tpu.memory_space<vmem>>, %arg6: memref<1x32xf32, #tpu.memory_space<vmem>>, %arg7: memref<1x32xf32, #tpu.memory_space<vmem>>, %arg8: memref<16x32xbf16, #tpu.memory_space<vmem>>, %arg9: memref<16x32xf32, #tpu.memory_space<vmem>>) attributes {dimension_semantics = [#tpu.dimension_semantics<parallel>, #tpu.dimension_semantics<arbitrary>], iteration_bounds = array<i64: 1, 1>, scalar_prefetch = 0 : i64, scratch_operands = 1 : i64, tpu.core_type = #tpu.core_type<tc>, window_params = [{transform_indices = @transform_0, window_bounds = array<i64: 16, 64>}, {transform_indices = @transform_1, window_bounds = array<i64: 64, 32>}, {pipeline_mode = #tpu.pipeline_mode<synchronous>, transform_indices = @transform_2, window_bounds = array<i64: 1, 32>}, {transform_indices = @transform_3, window_bounds = array<i64: 16, 32>}, {pipeline_mode = #tpu.pipeline_mode<synchronous>, transform_indices = @transform_4, window_bounds = array<i64: 1, 32>}, {pipeline_mode = #tpu.pipeline_mode<synchronous>, transform_indices = @transform_5, window_bounds = array<i64: 1, 32>}, {transform_indices = @transform_6, window_bounds = array<i64: 16, 32>}]} {
    %c0_i32 = arith.constant 0 : i32
    %0 = arith.cmpi eq, %arg1, %c0_i32 : i32
    %1 = arith.extui %0 : i1 to i32
    %c0_i32_0 = arith.constant 0 : i32
    %2 = arith.cmpi ne, %1, %c0_i32_0 : i32
    scf.if %2 {
      %cst_10 = arith.constant 0.000000e+00 : f32
      %12 = vector.broadcast %cst_10 : f32 to vector<16x32xf32>
      %c0_11 = arith.constant 0 : index
      %c0_12 = arith.constant 0 : index
      %13 = vector.load %arg9[%c0_11, %c0_12] : memref<16x32xf32, #tpu.memory_space<vmem>>, vector<16x32xf32>
      tpu.vector_store %arg9[%c0_11, %c0_12], %12 {strides = array<i32>} : memref<16x32xf32, #tpu.memory_space<vmem>>, vector<16x32xf32>,
    } else {
    }
    %c0 = arith.constant 0 : index
    %c0_1 = arith.constant 0 : index
    %3 = vector.load %arg9[%c0, %c0_1] : memref<16x32xf32, #tpu.memory_space<vmem>>, vector<16x32xf32>
    %c0_2 = arith.constant 0 : index
    %c0_3 = arith.constant 0 : index
    %4 = vector.load %arg2[%c0_2, %c0_3] : memref<16x64xbf16, #tpu.memory_space<vmem>>, vector<16x64xbf16>
    %c0_4 = arith.constant 0 : index
    %c0_5 = arith.constant 0 : index
    %5 = vector.load %arg3[%c0_4, %c0_5] : memref<64x32xbf16, #tpu.memory_space<vmem>>, vector<64x32xbf16>
    %cst = arith.constant dense<0.000000e+00> : vector<16x32xf32>
    %6 = tpu.matmul %4, %5, %cst {dimension_numbers = #tpu.dot_dimension_numbers<[1], [0], [0], [1], [0, 0, 1, 1], [], []>} : vector<16x64xbf16>, vector<64x32xbf16>, vector<16x32xf32> -> vector<16x32xf32>
    %7 = arith.addf %3, %6 : vector<16x32xf32>
    %c0_6 = arith.constant 0 : index
    %c0_7 = arith.constant 0 : index
    %8 = vector.load %arg9[%c0_6, %c0_7] : memref<16x32xf32, #tpu.memory_space<vmem>>, vector<16x32xf32>
    tpu.vector_store %arg9[%c0_6, %c0_7], %7 {strides = array<i32>} : memref<16x32xf32, #tpu.memory_space<vmem>>, vector<16x32xf32>,
    %c0_i32_8 = arith.constant 0 : i32
    %9 = arith.cmpi eq, %arg1, %c0_i32_8 : i32
    %10 = arith.extui %9 : i1 to i32
    %c0_i32_9 = arith.constant 0 : i32
    %11 = arith.cmpi ne, %10, %c0_i32_9 : i32
    scf.if %11 {
      %c0_10 = arith.constant 0 : index
      %c0_11 = arith.constant 0 : index
      %12 = vector.load %arg9[%c0_10, %c0_11] : memref<16x32xf32, #tpu.memory_space<vmem>>, vector<16x32xf32>
      %c0_12 = arith.constant 0 : index
      %c0_13 = arith.constant 0 : index
      %13 = vector.load %arg4[%c0_12, %c0_13] : memref<1x32xf32, #tpu.memory_space<vmem>>, vector<1x32xf32>
      %14 = vector.broadcast %13 : vector<1x32xf32> to vector<16x32xf32>
      %15 = arith.addf %12, %14 : vector<16x32xf32>
      %c0_14 = arith.constant 0 : index
      %c0_15 = arith.constant 0 : index
      %16 = vector.load %arg5[%c0_14, %c0_15] : memref<16x32xbf16, #tpu.memory_space<vmem>>, vector<16x32xbf16>
      %17 = arith.extf %16 : vector<16x32xbf16> to vector<16x32xf32>
      %18 = arith.addf %15, %17 : vector<16x32xf32>
      %cst_16 = arith.constant dense<0.000000e+00> : vector<16xf32>
      %19 = vector.multi_reduction <add>, %18, %cst_16 [1] : vector<16x32xf32> to vector<16xf32>
      %20 = vector.shape_cast %19 : vector<16xf32> to vector<16x1xf32>
      %21 = arith.mulf %18, %18 : vector<16x32xf32>
      %cst_17 = arith.constant dense<0.000000e+00> : vector<16xf32>
      %22 = vector.multi_reduction <add>, %21, %cst_17 [1] : vector<16x32xf32> to vector<16xf32>
      %23 = vector.shape_cast %22 : vector<16xf32> to vector<16x1xf32>
      %cst_18 = arith.constant 3.125000e-02 : f32
      %24 = vector.broadcast %cst_18 : f32 to vector<16x1xf32>
      %25 = arith.mulf %20, %24 : vector<16x1xf32>
      %cst_19 = arith.constant 3.125000e-02 : f32
      %26 = vector.broadcast %cst_19 : f32 to vector<16x1xf32>
      %27 = arith.mulf %23, %26 : vector<16x1xf32>
      %28 = arith.mulf %25, %25 : vector<16x1xf32>
      %29 = arith.subf %27, %28 : vector<16x1xf32>
      %30 = vector.broadcast %25 : vector<16x1xf32> to vector<16x32xf32>
      %31 = arith.subf %18, %30 : vector<16x32xf32>
      %cst_20 = arith.constant 9.99999974E-6 : f32
      %32 = vector.broadcast %cst_20 : f32 to vector<16x1xf32>
      %33 = arith.addf %29, %32 : vector<16x1xf32>
      %34 = math.rsqrt %33 : vector<16x1xf32>
      %35 = vector.broadcast %34 : vector<16x1xf32> to vector<16x32xf32>
      %36 = arith.mulf %31, %35 : vector<16x32xf32>
      %c0_21 = arith.constant 0 : index
      %c0_22 = arith.constant 0 : index
      %37 = vector.load %arg6[%c0_21, %c0_22] : memref<1x32xf32, #tpu.memory_space<vmem>>, vector<1x32xf32>
      %38 = vector.broadcast %37 : vector<1x32xf32> to vector<16x32xf32>
      %39 = arith.mulf %36, %38 : vector<16x32xf32>
      %c0_23 = arith.constant 0 : index
      %c0_24 = arith.constant 0 : index
      %40 = vector.load %arg7[%c0_23, %c0_24] : memref<1x32xf32, #tpu.memory_space<vmem>>, vector<1x32xf32>
      %41 = vector.broadcast %40 : vector<1x32xf32> to vector<16x32xf32>
      %42 = arith.addf %39, %41 : vector<16x32xf32>
      %43 = arith.truncf %42 : vector<16x32xf32> to vector<16x32xbf16>
      %c0_25 = arith.constant 0 : index
      %c0_26 = arith.constant 0 : index
      %44 = vector.load %arg8[%c0_25, %c0_26] : memref<16x32xbf16, #tpu.memory_space<vmem>>, vector<16x32xbf16>
      tpu.vector_store %arg8[%c0_25, %c0_26], %43 {strides = array<i32>} : memref<16x32xbf16, #tpu.memory_space<vmem>>, vector<16x32xbf16>,
    } else {
    }
    return
  }
  func.func @transform_0(%arg0: i32, %arg1: i32) -> (i32, i32) {
    %c0_i32 = arith.constant 0 : i32
    return %arg0, %arg1 : i32, i32
  }
  func.func @transform_1(%arg0: i32, %arg1: i32) -> (i32, i32) {
    %c0_i32 = arith.constant 0 : i32
    %c0_i32_0 = arith.constant 0 : i32
    return %arg1, %c0_i32 : i32, i32
  }
  func.func @transform_2(%arg0: i32, %arg1: i32) -> (i32, i32) {
    %c0_i32 = arith.constant 0 : i32
    %c0_i32_0 = arith.constant 0 : i32
    %c0_i32_1 = arith.constant 0 : i32
    return %c0_i32, %c0_i32_0 : i32, i32
  }
  func.func @transform_3(%arg0: i32, %arg1: i32) -> (i32, i32) {
    %c0_i32 = arith.constant 0 : i32
    %c0_i32_0 = arith.constant 0 : i32
    return %arg0, %c0_i32 : i32, i32
  }
  func.func @transform_4(%arg0: i32, %arg1: i32) -> (i32, i32) {
    %c0_i32 = arith.constant 0 : i32
    %c0_i32_0 = arith.constant 0 : i32
    %c0_i32_1 = arith.constant 0 : i32
    return %c0_i32, %c0_i32_0 : i32, i32
  }
  func.func @transform_5(%arg0: i32, %arg1: i32) -> (i32, i32) {
    %c0_i32 = arith.constant 0 : i32
    %c0_i32_0 = arith.constant 0 : i32
    %c0_i32_1 = arith.constant 0 : i32
    return %c0_i32, %c0_i32_0 : i32, i32
  }
  func.func @transform_6(%arg0: i32, %arg1: i32) -> (i32, i32) {
    %c0_i32 = arith.constant 0 : i32
    %c0_i32_0 = arith.constant 0 : i32
    return %arg0, %c0_i32 : i32, i32
  }
}

module attributes {stable_mosaic.version = 11 : i64} {
  func.func @_split_proj_kernel(%arg0: i32, %arg1: i32, %arg2: memref<16x32xbf16, #tpu.memory_space<vmem>>, %arg3: memref<32x64xbf16, #tpu.memory_space<vmem>>, %arg4: memref<1x64xf32, #tpu.memory_space<vmem>>, %arg5: memref<16x32xbf16, #tpu.memory_space<vmem>>, %arg6: memref<16x32xbf16, #tpu.memory_space<vmem>>, %arg7: memref<16x64xf32, #tpu.memory_space<vmem>>) attributes {dimension_semantics = [#tpu.dimension_semantics<parallel>, #tpu.dimension_semantics<arbitrary>], iteration_bounds = array<i64: 1, 1>, scalar_prefetch = 0 : i64, scratch_operands = 1 : i64, tpu.core_type = #tpu.core_type<tc>, window_params = [{transform_indices = @transform_0, window_bounds = array<i64: 16, 32>}, {transform_indices = @transform_1, window_bounds = array<i64: 32, 64>}, {pipeline_mode = #tpu.pipeline_mode<synchronous>, transform_indices = @transform_2, window_bounds = array<i64: 1, 64>}, {transform_indices = @transform_3, window_bounds = array<i64: 16, 32>}, {transform_indices = @transform_4, window_bounds = array<i64: 16, 32>}]} {
    %c0_i32 = arith.constant 0 : i32
    %0 = arith.cmpi eq, %arg1, %c0_i32 : i32
    %1 = arith.extui %0 : i1 to i32
    %c0_i32_0 = arith.constant 0 : i32
    %2 = arith.cmpi ne, %1, %c0_i32_0 : i32
    scf.if %2 {
      %cst_10 = arith.constant 0.000000e+00 : f32
      %12 = vector.broadcast %cst_10 : f32 to vector<16x64xf32>
      %c0_11 = arith.constant 0 : index
      %c0_12 = arith.constant 0 : index
      %13 = vector.load %arg7[%c0_11, %c0_12] : memref<16x64xf32, #tpu.memory_space<vmem>>, vector<16x64xf32>
      tpu.vector_store %arg7[%c0_11, %c0_12], %12 {strides = array<i32>} : memref<16x64xf32, #tpu.memory_space<vmem>>, vector<16x64xf32>,
    } else {
    }
    %c0 = arith.constant 0 : index
    %c0_1 = arith.constant 0 : index
    %3 = vector.load %arg7[%c0, %c0_1] : memref<16x64xf32, #tpu.memory_space<vmem>>, vector<16x64xf32>
    %c0_2 = arith.constant 0 : index
    %c0_3 = arith.constant 0 : index
    %4 = vector.load %arg2[%c0_2, %c0_3] : memref<16x32xbf16, #tpu.memory_space<vmem>>, vector<16x32xbf16>
    %c0_4 = arith.constant 0 : index
    %c0_5 = arith.constant 0 : index
    %5 = vector.load %arg3[%c0_4, %c0_5] : memref<32x64xbf16, #tpu.memory_space<vmem>>, vector<32x64xbf16>
    %cst = arith.constant dense<0.000000e+00> : vector<16x64xf32>
    %6 = tpu.matmul %4, %5, %cst {dimension_numbers = #tpu.dot_dimension_numbers<[1], [0], [0], [1], [0, 0, 1, 1], [], []>} : vector<16x32xbf16>, vector<32x64xbf16>, vector<16x64xf32> -> vector<16x64xf32>
    %7 = arith.addf %3, %6 : vector<16x64xf32>
    %c0_6 = arith.constant 0 : index
    %c0_7 = arith.constant 0 : index
    %8 = vector.load %arg7[%c0_6, %c0_7] : memref<16x64xf32, #tpu.memory_space<vmem>>, vector<16x64xf32>
    tpu.vector_store %arg7[%c0_6, %c0_7], %7 {strides = array<i32>} : memref<16x64xf32, #tpu.memory_space<vmem>>, vector<16x64xf32>,
    %c0_i32_8 = arith.constant 0 : i32
    %9 = arith.cmpi eq, %arg1, %c0_i32_8 : i32
    %10 = arith.extui %9 : i1 to i32
    %c0_i32_9 = arith.constant 0 : i32
    %11 = arith.cmpi ne, %10, %c0_i32_9 : i32
    scf.if %11 {
      %c0_10 = arith.constant 0 : index
      %c0_11 = arith.constant 0 : index
      %12 = vector.load %arg7[%c0_10, %c0_11] : memref<16x64xf32, #tpu.memory_space<vmem>>, vector<16x64xf32>
      %c0_12 = arith.constant 0 : index
      %c0_13 = arith.constant 0 : index
      %13 = vector.load %arg4[%c0_12, %c0_13] : memref<1x64xf32, #tpu.memory_space<vmem>>, vector<1x64xf32>
      %14 = vector.broadcast %13 : vector<1x64xf32> to vector<16x64xf32>
      %15 = arith.addf %12, %14 : vector<16x64xf32>
      %16 = vector.extract_strided_slice %15 {offsets = [0, 0], sizes = [16, 32], strides = [1, 1]} : vector<16x64xf32> to vector<16x32xf32>
      %17 = arith.truncf %16 : vector<16x32xf32> to vector<16x32xbf16>
      %c0_14 = arith.constant 0 : index
      %c0_15 = arith.constant 0 : index
      %18 = vector.load %arg5[%c0_14, %c0_15] : memref<16x32xbf16, #tpu.memory_space<vmem>>, vector<16x32xbf16>
      tpu.vector_store %arg5[%c0_14, %c0_15], %17 {strides = array<i32>} : memref<16x32xbf16, #tpu.memory_space<vmem>>, vector<16x32xbf16>,
      %19 = vector.extract_strided_slice %15 {offsets = [0, 32], sizes = [16, 32], strides = [1, 1]} : vector<16x64xf32> to vector<16x32xf32>
      %20 = arith.truncf %19 : vector<16x32xf32> to vector<16x32xbf16>
      %c0_16 = arith.constant 0 : index
      %c0_17 = arith.constant 0 : index
      %21 = vector.load %arg6[%c0_16, %c0_17] : memref<16x32xbf16, #tpu.memory_space<vmem>>, vector<16x32xbf16>
      tpu.vector_store %arg6[%c0_16, %c0_17], %20 {strides = array<i32>} : memref<16x32xbf16, #tpu.memory_space<vmem>>, vector<16x32xbf16>,
    } else {
    }
    return
  }
  func.func @transform_0(%arg0: i32, %arg1: i32) -> (i32, i32) {
    %c0_i32 = arith.constant 0 : i32
    return %arg0, %arg1 : i32, i32
  }
  func.func @transform_1(%arg0: i32, %arg1: i32) -> (i32, i32) {
    %c0_i32 = arith.constant 0 : i32
    %c0_i32_0 = arith.constant 0 : i32
    return %arg1, %c0_i32 : i32, i32
  }
  func.func @transform_2(%arg0: i32, %arg1: i32) -> (i32, i32) {
    %c0_i32 = arith.constant 0 : i32
    %c0_i32_0 = arith.constant 0 : i32
    %c0_i32_1 = arith.constant 0 : i32
    return %c0_i32, %c0_i32_0 : i32, i32
  }
  func.func @transform_3(%arg0: i32, %arg1: i32) -> (i32, i32) {
    %c0_i32 = arith.constant 0 : i32
    %c0_i32_0 = arith.constant 0 : i32
    return %arg0, %c0_i32 : i32, i32
  }
  func.func @transform_4(%arg0: i32, %arg1: i32) -> (i32, i32) {
    %c0_i32 = arith.constant 0 : i32
    %c0_i32_0 = arith.constant 0 : i32
    return %arg0, %c0_i32 : i32, i32
  }
}

module attributes {stable_mosaic.version = 11 : i64} {
  func.func @_matmul_bias_kernel(%arg0: i32, %arg1: i32, %arg2: i32, %arg3: memref<16x32xbf16, #tpu.memory_space<vmem>>, %arg4: memref<32x32xbf16, #tpu.memory_space<vmem>>, %arg5: memref<1x32xf32, #tpu.memory_space<vmem>>, %arg6: memref<16x32xbf16, #tpu.memory_space<vmem>>, %arg7: memref<16x32xf32, #tpu.memory_space<vmem>>) attributes {dimension_semantics = [#tpu.dimension_semantics<parallel>, #tpu.dimension_semantics<parallel>, #tpu.dimension_semantics<arbitrary>], iteration_bounds = array<i64: 1, 1, 1>, scalar_prefetch = 0 : i64, scratch_operands = 1 : i64, tpu.core_type = #tpu.core_type<tc>, window_params = [{transform_indices = @transform_0, window_bounds = array<i64: 16, 32>}, {transform_indices = @transform_1, window_bounds = array<i64: 32, 32>}, {transform_indices = @transform_2, window_bounds = array<i64: 1, 32>}, {transform_indices = @transform_3, window_bounds = array<i64: 16, 32>}]} {
    %c0_i32 = arith.constant 0 : i32
    %0 = arith.cmpi eq, %arg2, %c0_i32 : i32
    %1 = arith.extui %0 : i1 to i32
    %c0_i32_0 = arith.constant 0 : i32
    %2 = arith.cmpi ne, %1, %c0_i32_0 : i32
    scf.if %2 {
      %cst_10 = arith.constant 0.000000e+00 : f32
      %12 = vector.broadcast %cst_10 : f32 to vector<16x32xf32>
      %c0_11 = arith.constant 0 : index
      %c0_12 = arith.constant 0 : index
      %13 = vector.load %arg7[%c0_11, %c0_12] : memref<16x32xf32, #tpu.memory_space<vmem>>, vector<16x32xf32>
      tpu.vector_store %arg7[%c0_11, %c0_12], %12 {strides = array<i32>} : memref<16x32xf32, #tpu.memory_space<vmem>>, vector<16x32xf32>,
    } else {
    }
    %c0 = arith.constant 0 : index
    %c0_1 = arith.constant 0 : index
    %3 = vector.load %arg7[%c0, %c0_1] : memref<16x32xf32, #tpu.memory_space<vmem>>, vector<16x32xf32>
    %c0_2 = arith.constant 0 : index
    %c0_3 = arith.constant 0 : index
    %4 = vector.load %arg3[%c0_2, %c0_3] : memref<16x32xbf16, #tpu.memory_space<vmem>>, vector<16x32xbf16>
    %c0_4 = arith.constant 0 : index
    %c0_5 = arith.constant 0 : index
    %5 = vector.load %arg4[%c0_4, %c0_5] : memref<32x32xbf16, #tpu.memory_space<vmem>>, vector<32x32xbf16>
    %cst = arith.constant dense<0.000000e+00> : vector<16x32xf32>
    %6 = tpu.matmul %4, %5, %cst {dimension_numbers = #tpu.dot_dimension_numbers<[1], [0], [0], [1], [0, 0, 1, 1], [], []>} : vector<16x32xbf16>, vector<32x32xbf16>, vector<16x32xf32> -> vector<16x32xf32>
    %7 = arith.addf %3, %6 : vector<16x32xf32>
    %c0_6 = arith.constant 0 : index
    %c0_7 = arith.constant 0 : index
    %8 = vector.load %arg7[%c0_6, %c0_7] : memref<16x32xf32, #tpu.memory_space<vmem>>, vector<16x32xf32>
    tpu.vector_store %arg7[%c0_6, %c0_7], %7 {strides = array<i32>} : memref<16x32xf32, #tpu.memory_space<vmem>>, vector<16x32xf32>,
    %c0_i32_8 = arith.constant 0 : i32
    %9 = arith.cmpi eq, %arg2, %c0_i32_8 : i32
    %10 = arith.extui %9 : i1 to i32
    %c0_i32_9 = arith.constant 0 : i32
    %11 = arith.cmpi ne, %10, %c0_i32_9 : i32
    scf.if %11 {
      %c0_10 = arith.constant 0 : index
      %c0_11 = arith.constant 0 : index
      %12 = vector.load %arg7[%c0_10, %c0_11] : memref<16x32xf32, #tpu.memory_space<vmem>>, vector<16x32xf32>
      %c0_12 = arith.constant 0 : index
      %c0_13 = arith.constant 0 : index
      %13 = vector.load %arg5[%c0_12, %c0_13] : memref<1x32xf32, #tpu.memory_space<vmem>>, vector<1x32xf32>
      %14 = vector.broadcast %13 : vector<1x32xf32> to vector<16x32xf32>
      %15 = arith.addf %12, %14 : vector<16x32xf32>
      %16 = arith.truncf %15 : vector<16x32xf32> to vector<16x32xbf16>
      %c0_14 = arith.constant 0 : index
      %c0_15 = arith.constant 0 : index
      %17 = vector.load %arg6[%c0_14, %c0_15] : memref<16x32xbf16, #tpu.memory_space<vmem>>, vector<16x32xbf16>
      tpu.vector_store %arg6[%c0_14, %c0_15], %16 {strides = array<i32>} : memref<16x32xbf16, #tpu.memory_space<vmem>>, vector<16x32xbf16>,
    } else {
    }
    return
  }
  func.func @transform_0(%arg0: i32, %arg1: i32, %arg2: i32) -> (i32, i32) {
    %c0_i32 = arith.constant 0 : i32
    return %arg0, %arg2 : i32, i32
  }
  func.func @transform_1(%arg0: i32, %arg1: i32, %arg2: i32) -> (i32, i32) {
    %c0_i32 = arith.constant 0 : i32
    return %arg2, %arg1 : i32, i32
  }
  func.func @transform_2(%arg0: i32, %arg1: i32, %arg2: i32) -> (i32, i32) {
    %c0_i32 = arith.constant 0 : i32
    %c0_i32_0 = arith.constant 0 : i32
    return %c0_i32, %arg1 : i32, i32
  }
  func.func @transform_3(%arg0: i32, %arg1: i32, %arg2: i32) -> (i32, i32) {
    %c0_i32 = arith.constant 0 : i32
    return %arg0, %arg1 : i32, i32
  }
}

module attributes {stable_mosaic.version = 11 : i64} {
  func.func @_matmul_bias_kernel(%arg0: i32, %arg1: i32, %arg2: i32, %arg3: memref<16x32xbf16, #tpu.memory_space<vmem>>, %arg4: memref<32x128xbf16, #tpu.memory_space<vmem>>, %arg5: memref<1x128xf32, #tpu.memory_space<vmem>>, %arg6: memref<16x128xf32, #tpu.memory_space<vmem>>, %arg7: memref<16x128xf32, #tpu.memory_space<vmem>>) attributes {dimension_semantics = [#tpu.dimension_semantics<parallel>, #tpu.dimension_semantics<parallel>, #tpu.dimension_semantics<arbitrary>], iteration_bounds = array<i64: 1, 1, 1>, scalar_prefetch = 0 : i64, scratch_operands = 1 : i64, tpu.core_type = #tpu.core_type<tc>, window_params = [{transform_indices = @transform_0, window_bounds = array<i64: 16, 32>}, {transform_indices = @transform_1, window_bounds = array<i64: 32, 128>}, {transform_indices = @transform_2, window_bounds = array<i64: 1, 128>}, {transform_indices = @transform_3, window_bounds = array<i64: 16, 128>}]} {
    %c0_i32 = arith.constant 0 : i32
    %0 = arith.cmpi eq, %arg2, %c0_i32 : i32
    %1 = arith.extui %0 : i1 to i32
    %c0_i32_0 = arith.constant 0 : i32
    %2 = arith.cmpi ne, %1, %c0_i32_0 : i32
    scf.if %2 {
      %cst_10 = arith.constant 0.000000e+00 : f32
      %12 = vector.broadcast %cst_10 : f32 to vector<16x128xf32>
      %c0_11 = arith.constant 0 : index
      %c0_12 = arith.constant 0 : index
      %13 = vector.load %arg7[%c0_11, %c0_12] : memref<16x128xf32, #tpu.memory_space<vmem>>, vector<16x128xf32>
      tpu.vector_store %arg7[%c0_11, %c0_12], %12 {strides = array<i32>} : memref<16x128xf32, #tpu.memory_space<vmem>>, vector<16x128xf32>,
    } else {
    }
    %c0 = arith.constant 0 : index
    %c0_1 = arith.constant 0 : index
    %3 = vector.load %arg7[%c0, %c0_1] : memref<16x128xf32, #tpu.memory_space<vmem>>, vector<16x128xf32>
    %c0_2 = arith.constant 0 : index
    %c0_3 = arith.constant 0 : index
    %4 = vector.load %arg3[%c0_2, %c0_3] : memref<16x32xbf16, #tpu.memory_space<vmem>>, vector<16x32xbf16>
    %c0_4 = arith.constant 0 : index
    %c0_5 = arith.constant 0 : index
    %5 = vector.load %arg4[%c0_4, %c0_5] : memref<32x128xbf16, #tpu.memory_space<vmem>>, vector<32x128xbf16>
    %cst = arith.constant dense<0.000000e+00> : vector<16x128xf32>
    %6 = tpu.matmul %4, %5, %cst {dimension_numbers = #tpu.dot_dimension_numbers<[1], [0], [0], [1], [0, 0, 1, 1], [], []>} : vector<16x32xbf16>, vector<32x128xbf16>, vector<16x128xf32> -> vector<16x128xf32>
    %7 = arith.addf %3, %6 : vector<16x128xf32>
    %c0_6 = arith.constant 0 : index
    %c0_7 = arith.constant 0 : index
    %8 = vector.load %arg7[%c0_6, %c0_7] : memref<16x128xf32, #tpu.memory_space<vmem>>, vector<16x128xf32>
    tpu.vector_store %arg7[%c0_6, %c0_7], %7 {strides = array<i32>} : memref<16x128xf32, #tpu.memory_space<vmem>>, vector<16x128xf32>,
    %c0_i32_8 = arith.constant 0 : i32
    %9 = arith.cmpi eq, %arg2, %c0_i32_8 : i32
    %10 = arith.extui %9 : i1 to i32
    %c0_i32_9 = arith.constant 0 : i32
    %11 = arith.cmpi ne, %10, %c0_i32_9 : i32
    scf.if %11 {
      %c0_10 = arith.constant 0 : index
      %c0_11 = arith.constant 0 : index
      %12 = vector.load %arg7[%c0_10, %c0_11] : memref<16x128xf32, #tpu.memory_space<vmem>>, vector<16x128xf32>
      %c0_12 = arith.constant 0 : index
      %c0_13 = arith.constant 0 : index
      %13 = vector.load %arg5[%c0_12, %c0_13] : memref<1x128xf32, #tpu.memory_space<vmem>>, vector<1x128xf32>
      %14 = vector.broadcast %13 : vector<1x128xf32> to vector<16x128xf32>
      %15 = arith.addf %12, %14 : vector<16x128xf32>
      %c0_14 = arith.constant 0 : index
      %c0_15 = arith.constant 0 : index
      %16 = vector.load %arg6[%c0_14, %c0_15] : memref<16x128xf32, #tpu.memory_space<vmem>>, vector<16x128xf32>
      tpu.vector_store %arg6[%c0_14, %c0_15], %15 {strides = array<i32>} : memref<16x128xf32, #tpu.memory_space<vmem>>, vector<16x128xf32>,
    } else {
    }
    return
  }
  func.func @transform_0(%arg0: i32, %arg1: i32, %arg2: i32) -> (i32, i32) {
    %c0_i32 = arith.constant 0 : i32
    return %arg0, %arg2 : i32, i32
  }
  func.func @transform_1(%arg0: i32, %arg1: i32, %arg2: i32) -> (i32, i32) {
    %c0_i32 = arith.constant 0 : i32
    return %arg2, %arg1 : i32, i32
  }
  func.func @transform_2(%arg0: i32, %arg1: i32, %arg2: i32) -> (i32, i32) {
    %c0_i32 = arith.constant 0 : i32
    %c0_i32_0 = arith.constant 0 : i32
    return %c0_i32, %arg1 : i32, i32
  }
  func.func @transform_3(%arg0: i32, %arg1: i32, %arg2: i32) -> (i32, i32) {
    %c0_i32 = arith.constant 0 : i32
    return %arg0, %arg1 : i32, i32
  }
}

</mosaic_0001>

<llo_original>
// kernel: transformer_forward.32
$region0: #{transformer_forward.32}
  #allocation0 [shape = 'u32[]', space=smem, size = 0x4, offset = 0x4, fixed_abs, tag = 'smem constant byte address 0x4 - core index']
  #allocation1 [shape = 'u32[144,128]{1,0:T(1,128)}', space=vmem, size = 0x12000, scoped, tag = 'internal scratch']
  #allocation2 [shape = 'f32[16,64]{1,0:T(8,128)}', space=vmem, size = 0x2000, scoped, tag = 'scratch operand']
  %s0 = inlined_call_operand.vmem [shape: bf16[16,32], index: 0, kind: input, shape index: {}]
  %s1 = inlined_call_operand.vmem [shape: bf16[32,64], index: 1, kind: input, shape index: {}]
  %s2 = inlined_call_operand.vmem [shape: f32[1,64], index: 2, kind: input, shape index: {}]
  %s3 = inlined_call_operand.vmem [shape: bf16[16,64], index: 3, kind: output, shape index: {}]
  %s4 = sld [smem:[#allocation0]]
  $region30: #{transformer_forward.32} parent=0
    _
  %s6 = ssub.s32 1, %s4
  %s7 = scalar_select 0, %s6, %s4
  // Predicated region
  $region2: #{transformer_forward.32} parent=0 // pred_check
    _
  $region3: #{transformer_forward.32} parent=0 // pred_check_branch
    %9 = sbr.rel (0) target = $region5
  $region4: #{transformer_forward.32} parent=0 // pred_region
    _
  $region5: #{transformer_forward.32} parent=0 // pred_fallthru
    _
  // Predicated region
  $region6: #{transformer_forward.32} parent=0 // pred_check
    _
  $region7: #{transformer_forward.32} parent=0 // pred_check_branch
    %11 = sbr.rel (0) target = $region9
  $region8: #{transformer_forward.32} parent=0 // pred_region
    _
  $region9: #{transformer_forward.32} parent=0 // pred_fallthru
    _
  // Predicated region
  $region10: #{transformer_forward.32} parent=0 // pred_check
    _
  $region11: #{transformer_forward.32} parent=0 // pred_check_branch
    %13 = sbr.rel (0) target = $region13
  $region12: #{transformer_forward.32} parent=0 // pred_region
    _
  $region13: #{transformer_forward.32} parent=0 // pred_fallthru
    _
  %p15 = scmp.eq.s32.totalorder 0, 0
  // Predicated region
  $region14: #{transformer_forward.32} parent=0 // pred_check
    %p16 = pneg %p15
  $region15: #{transformer_forward.32} parent=0 // pred_check_branch
    %18 = sbr.rel (%p16) target = $region17
  $region16: #{transformer_forward.32} parent=0 // pred_region
    %vm19 = vcmask 523264
    %20 = vst.msk [vmem:[#allocation2] sm:$0xff] %vm19, 0.0
    %21 = vst.msk [vmem:[#allocation2 + $0x8] sm:$0xff] %vm19, 0.0
  $region17: #{transformer_forward.32} parent=0 // pred_fallthru
    _
  %v22 = vld [vmem:[#allocation2] sm:$0xff]
  %v23 = vld [vmem:[#allocation2 + $0x8] sm:$0xff]
  %v24 = vld [vmem:[%s0] sm:$0xf]
  %v25 = vld [vmem:[%s0 + $0x4] sm:$0xf]
  %v26 = vld [vmem:[%s1] sm:$0xf]
  %v27 = vld [vmem:[%s1 + $0x4] sm:$0xf]
  %v28 = vld [vmem:[%s1 + $0x8] sm:$0xf]
  %v29 = vld [vmem:[%s1 + $0xc] sm:$0xf]
  %v32 = vunpack.c.l.b16 %v24
  %v33 = vunpack.c.l.b16 %v25
  %v34 = vpack.c.b16 %v33, %v32
  %v39 = vunpack.c.l.b16 %v26
  %v40 = vunpack.c.l.b16 %v27
  %v41 = vunpack.c.l.b16 %v28
  %v42 = vunpack.c.l.b16 %v29
  %v43 = vpack.c.b16 %v40, %v39
  %v44 = vpack.c.b16 %v42, %v41
  %vm47 = vcmask 261120
  %v49 = vsel %vm47, %v34, 0
  %51 = vmatprep.subr.bf16.mxu0 0
  %52 = vmatpush1.bf16.msra.mxu0 %v43
  %53 = vmatprep.subr.bf16.mxu0 0
  %54 = vmatpush1.bf16.msra.mxu0 %v44
  %55 = vmatprep.subr.bf16.mxu0 0
  %56 = vmatpush1.bf16.msra.mxu0 0
  %57 = vmatprep.subr.bf16.mxu0 0
  %58 = vmatpush1.bf16.msra.mxu0 0
  %59 = vmatprep.subr.bf16.mxu0 0
  %60 = vmatpush1.bf16.msra.mxu0 0
  %61 = vmatprep.subr.bf16.mxu0 0
  %62 = vmatpush1.bf16.msra.mxu0 0
  %63 = vmatprep.subr.bf16.mxu0 0
  %64 = vmatpush1.bf16.msra.mxu0 0
  %65 = vmatprep.subr.bf16.mxu0 0
  %66 = vmatpush1.bf16.msra.mxu0 0
  %67 = vmatprep.subr.bf16.mxu0 0
  %68 = vmatpush1.bf16.msra.mxu0 0
  %69 = vmatprep.subr.bf16.mxu0 0
  %70 = vmatpush1.bf16.msra.mxu0 0
  %71 = vmatprep.subr.bf16.mxu0 0
  %72 = vmatpush1.bf16.msra.mxu0 0
  %73 = vmatprep.subr.bf16.mxu0 0
  %74 = vmatpush1.bf16.msra.mxu0 0
  %75 = vmatprep.subr.bf16.mxu0 0
  %76 = vmatpush1.bf16.msra.mxu0 0
  %77 = vmatprep.subr.bf16.mxu0 0
  %78 = vmatpush1.bf16.msra.mxu0 0
  %79 = vmatprep.subr.bf16.mxu0 0
  %80 = vmatpush1.bf16.msra.mxu0 0
  %81 = vmatprep.subr.bf16.mxu0 0
  %82 = vmatpush1.bf16.msra.mxu0 0
  %83 = vmatprep.mubr.bf16.mxu0 0
  %84 = vmatmul.mubr.bf16.gmra.mrb[0].mxu0 %v49
  %v85 = vpop.f32.mrb[0].mxu0
  %v86 = vadd.f32 0.0, %v85
  %v87 = vpop.f32.mrb[0].mxu0
  %v88 = vpop.f32.mrb[0].mxu0
  %v89 = vadd.f32 0.0, %v88
  %v90 = vpop.f32.mrb[0].mxu0
  %91 = vdwg.mxu0
  %v92 = vadd.f32 %v22, %v86
  %v93 = vadd.f32 %v23, %v89
  %vm94 = vcmask 523264
  %95 = vst.msk [vmem:[#allocation2] sm:$0xff] %vm94, %v92
  %96 = vst.msk [vmem:[#allocation2 + $0x8] sm:$0xff] %vm94, %v93
  // Predicated region
  $region18: #{transformer_forward.32} parent=0 // pred_check
    %p97 = pneg %p15
  $region19: #{transformer_forward.32} parent=0 // pred_check_branch
    %99 = sbr.rel (%p97) target = $region21
  $region20: #{transformer_forward.32} parent=0 // pred_region
    %v100 = vld [vmem:[#allocation2] sm:$0xff]
    %v101 = vld [vmem:[#allocation2 + $0x8] sm:$0xff]
    %v102 = vld [vmem:[%s2] sm:$0x1]
    %v104 = vlaneseq
    %v105 = vshrl.u32 %v104, 7
    %v106 = vsub.s32 0, %v105
    %v107 = vrot.slane %v102, %v106
    %v109 = vadd.f32 %v100, %v107
    %v110 = vadd.f32 %v101, %v107
    %v111 = vmax.f32 %v109, 0.0
    %v112 = vmax.f32 %v110, 0.0
    %v113 = vpack.c.bf16 %v112, %v111
    %v115 = vunpack.c.l.b16 %v113
    %v116 = vunpack.c.h.b16 %v113
    %v117 = vpack.c.b16 %v115, %v115
    %v118 = vpack.c.b16 %v116, %v116
    %vm121 = vcmask 519168
    %122 = vst.msk [vmem:[%s3] sm:$0xf] %vm121, %v117
    %123 = vst.msk [vmem:[%s3 + $0x4] sm:$0xf] %vm121, %v118
  $region21: #{transformer_forward.32} parent=0 // pred_fallthru
    _
  // Predicated region
  $region22: #{transformer_forward.32} parent=0 // pred_check
    _
  $region23: #{transformer_forward.32} parent=0 // pred_check_branch
    %125 = sbr.rel (0) target = $region25
  $region24: #{transformer_forward.32} parent=0 // pred_region
    _
  $region25: #{transformer_forward.32} parent=0 // pred_fallthru
    _
  // Predicated region
  $region26: #{transformer_forward.32} parent=0 // pred_check
    _
  $region27: #{transformer_forward.32} parent=0 // pred_check_branch
    %127 = sbr.rel (0) target = $region29
  $region28: #{transformer_forward.32} parent=0 // pred_region
    _
  $region29: #{transformer_forward.32} parent=0 // pred_fallthru
    _

// kernel: transformer_forward.31
$region0: #{transformer_forward.31}
  #allocation0 [shape = 'u32[]', space=smem, size = 0x4, offset = 0x4, fixed_abs, tag = 'smem constant byte address 0x4 - core index']
  #allocation1 [shape = 'u32[144,128]{1,0:T(1,128)}', space=vmem, size = 0x12000, scoped, tag = 'internal scratch']
  #allocation2 [shape = 'f32[16,32]{1,0:T(8,128)}', space=vmem, size = 0x2000, scoped, tag = 'scratch operand']
  %s0 = inlined_call_operand.vmem [shape: bf16[16,32], index: 0, kind: input, shape index: {}]
  %s1 = inlined_call_operand.vmem [shape: bf16[32,32], index: 1, kind: input, shape index: {}]
  %s2 = inlined_call_operand.vmem [shape: f32[1,32], index: 2, kind: input, shape index: {}]
  %s3 = inlined_call_operand.vmem [shape: bf16[16,32], index: 3, kind: input, shape index: {}]
  %s4 = inlined_call_operand.vmem [shape: f32[1,32], index: 4, kind: input, shape index: {}]
  %s5 = inlined_call_operand.vmem [shape: f32[1,32], index: 5, kind: input, shape index: {}]
  %s6 = inlined_call_operand.vmem [shape: bf16[16,32], index: 6, kind: output, shape index: {}]
  %s7 = sld [smem:[#allocation0]]
  $region42: #{transformer_forward.31} parent=0
    _
  %s9 = ssub.s32 1, %s7
  %s10 = scalar_select 0, %s9, %s7
  // Predicated region
  $region2: #{transformer_forward.31} parent=0 // pred_check
    _
  $region3: #{transformer_forward.31} parent=0 // pred_check_branch
    %12 = sbr.rel (0) target = $region5
  $region4: #{transformer_forward.31} parent=0 // pred_region
    _
  $region5: #{transformer_forward.31} parent=0 // pred_fallthru
    _
  // Predicated region
  $region6: #{transformer_forward.31} parent=0 // pred_check
    _
  $region7: #{transformer_forward.31} parent=0 // pred_check_branch
    %14 = sbr.rel (0) target = $region9
  $region8: #{transformer_forward.31} parent=0 // pred_region
    _
  $region9: #{transformer_forward.31} parent=0 // pred_fallthru
    _
  // Predicated region
  $region10: #{transformer_forward.31} parent=0 // pred_check
    _
  $region11: #{transformer_forward.31} parent=0 // pred_check_branch
    %16 = sbr.rel (0) target = $region13
  $region12: #{transformer_forward.31} parent=0 // pred_region
    _
  $region13: #{transformer_forward.31} parent=0 // pred_fallthru
    _
  // Predicated region
  $region14: #{transformer_forward.31} parent=0 // pred_check
    _
  $region15: #{transformer_forward.31} parent=0 // pred_check_branch
    %18 = sbr.rel (0) target = $region17
  $region16: #{transformer_forward.31} parent=0 // pred_region
    _
  $region17: #{transformer_forward.31} parent=0 // pred_fallthru
    _
  // Predicated region
  $region18: #{transformer_forward.31} parent=0 // pred_check
    _
  $region19: #{transformer_forward.31} parent=0 // pred_check_branch
    %20 = sbr.rel (0) target = $region21
  $region20: #{transformer_forward.31} parent=0 // pred_region
    _
  $region21: #{transformer_forward.31} parent=0 // pred_fallthru
    _
  // Predicated region
  $region22: #{transformer_forward.31} parent=0 // pred_check
    _
  $region23: #{transformer_forward.31} parent=0 // pred_check_branch
    %22 = sbr.rel (0) target = $region25
  $region24: #{transformer_forward.31} parent=0 // pred_region
    _
  $region25: #{transformer_forward.31} parent=0 // pred_fallthru
    _
  %p24 = scmp.eq.s32.totalorder 0, 0
  // Predicated region
  $region26: #{transformer_forward.31} parent=0 // pred_check
    %p25 = pneg %p24
  $region27: #{transformer_forward.31} parent=0 // pred_check_branch
    %27 = sbr.rel (%p25) target = $region29
  $region28: #{transformer_forward.31} parent=0 // pred_region
    %vm28 = vcmask 261120
    %29 = vst.msk [vmem:[#allocation2] sm:$0xff] %vm28, 0.0
    %30 = vst.msk [vmem:[#allocation2 + $0x8] sm:$0xff] %vm28, 0.0
  $region29: #{transformer_forward.31} parent=0 // pred_fallthru
    _
  %v31 = vld [vmem:[#allocation2] sm:$0xff]
  %v32 = vld [vmem:[#allocation2 + $0x8] sm:$0xff]
  %v33 = vld [vmem:[%s0] sm:$0xf]
  %v34 = vld [vmem:[%s0 + $0x4] sm:$0xf]
  %v35 = vld [vmem:[%s1] sm:$0xf]
  %v36 = vld [vmem:[%s1 + $0x4] sm:$0xf]
  %v37 = vld [vmem:[%s1 + $0x8] sm:$0xf]
  %v38 = vld [vmem:[%s1 + $0xc] sm:$0xf]
  %v41 = vunpack.c.l.b16 %v33
  %v42 = vunpack.c.l.b16 %v34
  %v43 = vpack.c.b16 %v42, %v41
  %v48 = vunpack.c.l.b16 %v35
  %v49 = vunpack.c.l.b16 %v36
  %v50 = vunpack.c.l.b16 %v37
  %v51 = vunpack.c.l.b16 %v38
  %v52 = vpack.c.b16 %v49, %v48
  %v53 = vpack.c.b16 %v51, %v50
  %vm56 = vcmask 261120
  %v58 = vsel %vm56, %v43, 0
  %60 = vmatprep.subr.bf16.mxu0 0
  %61 = vmatpush1.bf16.msra.mxu0 %v52
  %62 = vmatprep.subr.bf16.mxu0 0
  %63 = vmatpush1.bf16.msra.mxu0 %v53
  %64 = vmatprep.subr.bf16.mxu0 0
  %65 = vmatpush1.bf16.msra.mxu0 0
  %66 = vmatprep.subr.bf16.mxu0 0
  %67 = vmatpush1.bf16.msra.mxu0 0
  %68 = vmatprep.subr.bf16.mxu0 0
  %69 = vmatpush1.bf16.msra.mxu0 0
  %70 = vmatprep.subr.bf16.mxu0 0
  %71 = vmatpush1.bf16.msra.mxu0 0
  %72 = vmatprep.subr.bf16.mxu0 0
  %73 = vmatpush1.bf16.msra.mxu0 0
  %74 = vmatprep.subr.bf16.mxu0 0
  %75 = vmatpush1.bf16.msra.mxu0 0
  %76 = vmatprep.subr.bf16.mxu0 0
  %77 = vmatpush1.bf16.msra.mxu0 0
  %78 = vmatprep.subr.bf16.mxu0 0
  %79 = vmatpush1.bf16.msra.mxu0 0
  %80 = vmatprep.subr.bf16.mxu0 0
  %81 = vmatpush1.bf16.msra.mxu0 0
  %82 = vmatprep.subr.bf16.mxu0 0
  %83 = vmatpush1.bf16.msra.mxu0 0
  %84 = vmatprep.subr.bf16.mxu0 0
  %85 = vmatpush1.bf16.msra.mxu0 0
  %86 = vmatprep.subr.bf16.mxu0 0
  %87 = vmatpush1.bf16.msra.mxu0 0
  %88 = vmatprep.subr.bf16.mxu0 0
  %89 = vmatpush1.bf16.msra.mxu0 0
  %90 = vmatprep.subr.bf16.mxu0 0
  %91 = vmatpush1.bf16.msra.mxu0 0
  %92 = vmatprep.mubr.bf16.mxu0 0
  %93 = vmatmul.mubr.bf16.gmra.mrb[0].mxu0 %v58
  %v94 = vpop.f32.mrb[0].mxu0
  %v95 = vadd.f32 0.0, %v94
  %v96 = vpop.f32.mrb[0].mxu0
  %v97 = vpop.f32.mrb[0].mxu0
  %v98 = vadd.f32 0.0, %v97
  %v99 = vpop.f32.mrb[0].mxu0
  %100 = vdwg.mxu0
  %v101 = vadd.f32 %v31, %v95
  %v102 = vadd.f32 %v32, %v98
  %103 = vst.msk [vmem:[#allocation2] sm:$0xff] %vm56, %v101
  %104 = vst.msk [vmem:[#allocation2 + $0x8] sm:$0xff] %vm56, %v102
  // Predicated region
  $region30: #{transformer_forward.31} parent=0 // pred_check
    %p105 = pneg %p24
  $region31: #{transformer_forward.31} parent=0 // pred_check_branch
    %107 = sbr.rel (%p105) target = $region33
  $region32: #{transformer_forward.31} parent=0 // pred_region
    %v108 = vld [vmem:[#allocation2] sm:$0xff]
    %v109 = vld [vmem:[#allocation2 + $0x8] sm:$0xff]
    %v110 = vld [vmem:[%s2] sm:$0x1]
    %v112 = vlaneseq
    %v113 = vshrl.u32 %v112, 7
    %v114 = vsub.s32 0, %v113
    %v115 = vrot.slane %v110, %v114
    %v117 = vadd.f32 %v108, %v115
    %v118 = vadd.f32 %v109, %v115
    %v119 = vld [vmem:[%s3] sm:$0xf]
    %v120 = vld [vmem:[%s3 + $0x4] sm:$0xf]
    %v121 = vunpack.c.l.bf16 %v119
    %v122 = vunpack.c.l.bf16 %v120
    %v123 = vadd.f32 %v117, %v121
    %v124 = vadd.f32 %v118, %v122
    %v125 = vsel %vm56, %v123, 0.0
    %126 = vadd.xlane.f32.xlu0 %v125
    %v127 = vpop.xlane.xlu0 %126
    %v128 = vsel %vm56, %v124, 0.0
    %129 = vadd.xlane.f32.xlu0 %v128
    %v130 = vpop.xlane.xlu0 %129
    %v131 = vmul.f32 %v123, %v123
    %v132 = vmul.f32 %v124, %v124
    %v133 = vsel %vm56, %v131, 0.0
    %134 = vadd.xlane.f32.xlu0 %v133
    %v135 = vpop.xlane.xlu0 %134
    %v136 = vsel %vm56, %v132, 0.0
    %137 = vadd.xlane.f32.xlu0 %v136
    %v138 = vpop.xlane.xlu0 %137
    %v139 = vmul.f32 %v127, 0.03125
    %v140 = vmul.f32 %v130, 0.03125
    %v141 = vmul.f32 %v135, 0.03125
    %v142 = vmul.f32 %v138, 0.03125
    %v143 = vmul.f32 %v139, %v139
    %v144 = vmul.f32 %v140, %v140
    %v145 = vsub.f32 %v141, %v143
    %v146 = vsub.f32 %v142, %v144
    %v147 = vsub.f32 %v123, %v139
    %v148 = vsub.f32 %v124, %v140
    %v149 = vadd.f32 %v145, 1e-05
    %v150 = vadd.f32 %v146, 1e-05
    %v151 = vrsqrt.pop %v149
    %v152 = vrsqrt.pop %v150
    %v153 = vmul.f32 %v147, %v151
    %v154 = vmul.f32 %v148, %v152
    %v155 = vld [vmem:[%s4] sm:$0x1]
    %v157 = vlaneseq
    %v158 = vshrl.u32 %v157, 7
    %v159 = vsub.s32 0, %v158
    %v160 = vrot.slane %v155, %v159
    %v162 = vmul.f32 %v153, %v160
    %v163 = vmul.f32 %v154, %v160
    %v164 = vld [vmem:[%s5] sm:$0x1]
    %v166 = vlaneseq
    %v167 = vshrl.u32 %v166, 7
    %v168 = vsub.s32 0, %v167
    %v169 = vrot.slane %v164, %v168
    %v171 = vadd.f32 %v162, %v169
    %v172 = vadd.f32 %v163, %v169
    %v173 = vpack.c.bf16 %v172, %v171
    %v175 = vunpack.c.l.b16 %v173
    %v176 = vunpack.c.h.b16 %v173
    %v177 = vpack.c.b16 %v175, %v175
    %v178 = vpack.c.b16 %v176, %v176
    %vm181 = vcmask 257024
    %182 = vst.msk [vmem:[%s6] sm:$0xf] %vm181, %v177
    %183 = vst.msk [vmem:[%s6 + $0x4] sm:$0xf] %vm181, %v178
  $region33: #{transformer_forward.31} parent=0 // pred_fallthru
    _
  // Predicated region
  $region34: #{transformer_forward.31} parent=0 // pred_check
    _
  $region35: #{transformer_forward.31} parent=0 // pred_check_branch
    %185 = sbr.rel (0) target = $region37
  $region36: #{transformer_forward.31} parent=0 // pred_region
    _
  $region37: #{transformer_forward.31} parent=0 // pred_fallthru
    _
  // Predicated region
  $region38: #{transformer_forward.31} parent=0 // pred_check
    _
  $region39: #{transformer_forward.31} parent=0 // pred_check_branch
    %187 = sbr.rel (0) target = $region41
  $region40: #{transformer_forward.31} parent=0 // pred_region
    _
  $region41: #{transformer_forward.31} parent=0 // pred_fallthru
    _

// kernel: transformer_forward.29
$region0: #{transformer_forward.29}
  #allocation0 [shape = 'u32[]', space=smem, size = 0x4, offset = 0x4, fixed_abs, tag = 'smem constant byte address 0x4 - core index']
  #allocation1 [shape = 'u32[144,128]{1,0:T(1,128)}', space=vmem, size = 0x12000, scoped, tag = 'internal scratch']
  #allocation2 [shape = 'f32[16,96]{1,0:T(8,128)}', space=vmem, size = 0x2000, scoped, tag = 'scratch operand']
  %s0 = inlined_call_operand.vmem [shape: bf16[16,32], index: 0, kind: input, shape index: {}]
  %s1 = inlined_call_operand.vmem [shape: bf16[32,96], index: 1, kind: input, shape index: {}]
  %s2 = inlined_call_operand.vmem [shape: f32[1,96], index: 2, kind: input, shape index: {}]
  %s3 = inlined_call_operand.vmem [shape: bf16[16,32], index: 3, kind: output, shape index: {0}]
  %s4 = inlined_call_operand.vmem [shape: bf16[16,32], index: 4, kind: output, shape index: {1}]
  %s5 = inlined_call_operand.vmem [shape: bf16[16,32], index: 5, kind: output, shape index: {2}]
  %6 = xla_tuple %s3, %s4, %s5
  %s7 = sld [smem:[#allocation0]]
  $region46: #{transformer_forward.29} parent=0
    _
  %s9 = ssub.s32 1, %s7
  %s10 = scalar_select 0, %s9, %s7
  // Predicated region
  $region2: #{transformer_forward.29} parent=0 // pred_check
    _
  $region3: #{transformer_forward.29} parent=0 // pred_check_branch
    %12 = sbr.rel (0) target = $region5
  $region4: #{transformer_forward.29} parent=0 // pred_region
    _
  $region5: #{transformer_forward.29} parent=0 // pred_fallthru
    _
  // Predicated region
  $region6: #{transformer_forward.29} parent=0 // pred_check
    _
  $region7: #{transformer_forward.29} parent=0 // pred_check_branch
    %14 = sbr.rel (0) target = $region9
  $region8: #{transformer_forward.29} parent=0 // pred_region
    _
  $region9: #{transformer_forward.29} parent=0 // pred_fallthru
    _
  // Predicated region
  $region10: #{transformer_forward.29} parent=0 // pred_check
    _
  $region11: #{transformer_forward.29} parent=0 // pred_check_branch
    %16 = sbr.rel (0) target = $region13
  $region12: #{transformer_forward.29} parent=0 // pred_region
    _
  $region13: #{transformer_forward.29} parent=0 // pred_fallthru
    _
  %p18 = scmp.eq.s32.totalorder 0, 0
  // Predicated region
  $region14: #{transformer_forward.29} parent=0 // pred_check
    %p19 = pneg %p18
  $region15: #{transformer_forward.29} parent=0 // pred_check_branch
    %21 = sbr.rel (%p19) target = $region17
  $region16: #{transformer_forward.29} parent=0 // pred_region
    %vm22 = vcmask 785408
    %23 = vst.msk [vmem:[#allocation2] sm:$0xff] %vm22, 0.0
    %24 = vst.msk [vmem:[#allocation2 + $0x8] sm:$0xff] %vm22, 0.0
  $region17: #{transformer_forward.29} parent=0 // pred_fallthru
    _
  %v25 = vld [vmem:[#allocation2] sm:$0xff]
  %v26 = vld [vmem:[#allocation2 + $0x8] sm:$0xff]
  %v27 = vld [vmem:[%s0] sm:$0xf]
  %v28 = vld [vmem:[%s0 + $0x4] sm:$0xf]
  %v29 = vld [vmem:[%s1] sm:$0xf]
  %v30 = vld [vmem:[%s1 + $0x4] sm:$0xf]
  %v31 = vld [vmem:[%s1 + $0x8] sm:$0xf]
  %v32 = vld [vmem:[%s1 + $0xc] sm:$0xf]
  %v35 = vunpack.c.l.b16 %v27
  %v36 = vunpack.c.l.b16 %v28
  %v37 = vpack.c.b16 %v36, %v35
  %v42 = vunpack.c.l.b16 %v29
  %v43 = vunpack.c.l.b16 %v30
  %v44 = vunpack.c.l.b16 %v31
  %v45 = vunpack.c.l.b16 %v32
  %v46 = vpack.c.b16 %v43, %v42
  %v47 = vpack.c.b16 %v45, %v44
  %vm50 = vcmask 261120
  %v52 = vsel %vm50, %v37, 0
  %54 = vmatprep.subr.bf16.mxu0 0
  %55 = vmatpush1.bf16.msra.mxu0 %v46
  %56 = vmatprep.subr.bf16.mxu0 0
  %57 = vmatpush1.bf16.msra.mxu0 %v47
  %58 = vmatprep.subr.bf16.mxu0 0
  %59 = vmatpush1.bf16.msra.mxu0 0
  %60 = vmatprep.subr.bf16.mxu0 0
  %61 = vmatpush1.bf16.msra.mxu0 0
  %62 = vmatprep.subr.bf16.mxu0 0
  %63 = vmatpush1.bf16.msra.mxu0 0
  %64 = vmatprep.subr.bf16.mxu0 0
  %65 = vmatpush1.bf16.msra.mxu0 0
  %66 = vmatprep.subr.bf16.mxu0 0
  %67 = vmatpush1.bf16.msra.mxu0 0
  %68 = vmatprep.subr.bf16.mxu0 0
  %69 = vmatpush1.bf16.msra.mxu0 0
  %70 = vmatprep.subr.bf16.mxu0 0
  %71 = vmatpush1.bf16.msra.mxu0 0
  %72 = vmatprep.subr.bf16.mxu0 0
  %73 = vmatpush1.bf16.msra.mxu0 0
  %74 = vmatprep.subr.bf16.mxu0 0
  %75 = vmatpush1.bf16.msra.mxu0 0
  %76 = vmatprep.subr.bf16.mxu0 0
  %77 = vmatpush1.bf16.msra.mxu0 0
  %78 = vmatprep.subr.bf16.mxu0 0
  %79 = vmatpush1.bf16.msra.mxu0 0
  %80 = vmatprep.subr.bf16.mxu0 0
  %81 = vmatpush1.bf16.msra.mxu0 0
  %82 = vmatprep.subr.bf16.mxu0 0
  %83 = vmatpush1.bf16.msra.mxu0 0
  %84 = vmatprep.subr.bf16.mxu0 0
  %85 = vmatpush1.bf16.msra.mxu0 0
  %86 = vmatprep.mubr.bf16.mxu0 0
  %87 = vmatmul.mubr.bf16.gmra.mrb[0].mxu0 %v52
  %v88 = vpop.f32.mrb[0].mxu0
  %v89 = vadd.f32 0.0, %v88
  %v90 = vpop.f32.mrb[0].mxu0
  %v91 = vpop.f32.mrb[0].mxu0
  %v92 = vadd.f32 0.0, %v91
  %v93 = vpop.f32.mrb[0].mxu0
  %94 = vdwg.mxu0
  %v95 = vadd.f32 %v25, %v89
  %v96 = vadd.f32 %v26, %v92
  %vm97 = vcmask 785408
  %98 = vst.msk [vmem:[#allocation2] sm:$0xff] %vm97, %v95
  %99 = vst.msk [vmem:[#allocation2 + $0x8] sm:$0xff] %vm97, %v96
  // Predicated region
  $region18: #{transformer_forward.29} parent=0 // pred_check
    %p100 = pneg %p18
  $region19: #{transformer_forward.29} parent=0 // pred_check_branch
    %102 = sbr.rel (%p100) target = $region21
  $region20: #{transformer_forward.29} parent=0 // pred_region
    %v103 = vld [vmem:[#allocation2] sm:$0xff]
    %v104 = vld [vmem:[#allocation2 + $0x8] sm:$0xff]
    %v105 = vld [vmem:[%s2] sm:$0x1]
    %v107 = vlaneseq
    %v108 = vshrl.u32 %v107, 7
    %v109 = vsub.s32 0, %v108
    %v110 = vrot.slane %v105, %v109
    %v112 = vadd.f32 %v103, %v110
    %v113 = vadd.f32 %v104, %v110
    %v114 = vpack.c.bf16 %v113, %v112
    %v116 = vunpack.c.l.b16 %v114
    %v117 = vunpack.c.h.b16 %v114
    %v118 = vpack.c.b16 %v116, %v116
    %v119 = vpack.c.b16 %v117, %v117
    %vm122 = vcmask 257024
    %123 = vst.msk [vmem:[%s3] sm:$0xf] %vm122, %v118
    %124 = vst.msk [vmem:[%s3 + $0x4] sm:$0xf] %vm122, %v119
    %125 = vrot.lane.b32.xlu0 %v118, 96
    %v126 = vpop.permute.xlu0 %125
    %127 = vrot.lane.b32.xlu0 %v119, 96
    %v128 = vpop.permute.xlu0 %127
    %131 = vst.msk [vmem:[%s4] sm:$0xf] %vm122, %v126
    %132 = vst.msk [vmem:[%s4 + $0x4] sm:$0xf] %vm122, %v128
    %133 = vrot.lane.b32.xlu0 %v118, 64
    %v134 = vpop.permute.xlu0 %133
    %135 = vrot.lane.b32.xlu0 %v119, 64
    %v136 = vpop.permute.xlu0 %135
    %139 = vst.msk [vmem:[%s5] sm:$0xf] %vm122, %v134
    %140 = vst.msk [vmem:[%s5 + $0x4] sm:$0xf] %vm122, %v136
  $region21: #{transformer_forward.29} parent=0 // pred_fallthru
    _
  // Predicated region
  $region22: #{transformer_forward.29} parent=0 // pred_check
    _
  $region23: #{transformer_forward.29} parent=0 // pred_check_branch
    %142 = sbr.rel (0) target = $region25
  $region24: #{transformer_forward.29} parent=0 // pred_region
    _
  $region25: #{transformer_forward.29} parent=0 // pred_fallthru
    _
  // Predicated region
  $region26: #{transformer_forward.29} parent=0 // pred_check
    _
  $region27: #{transformer_forward.29} parent=0 // pred_check_branch
    %144 = sbr.rel (0) target = $region29
  $region28: #{transformer_forward.29} parent=0 // pred_region
    _
  $region29: #{transformer_forward.29} parent=0 // pred_fallthru
    _
  // Predicated region
  $region30: #{transformer_forward.29} parent=0 // pred_check
    _
  $region31: #{transformer_forward.29} parent=0 // pred_check_branch
    %146 = sbr.rel (0) target = $region33
  $region32: #{transformer_forward.29} parent=0 // pred_region
    _
  $region33: #{transformer_forward.29} parent=0 // pred_fallthru
    _
  // Predicated region
  $region34: #{transformer_forward.29} parent=0 // pred_check
    _
  $region35: #{transformer_forward.29} parent=0 // pred_check_branch
    %148 = sbr.rel (0) target = $region37
  $region36: #{transformer_forward.29} parent=0 // pred_region
    _
  $region37: #{transformer_forward.29} parent=0 // pred_fallthru
    _
  // Predicated region
  $region38: #{transformer_forward.29} parent=0 // pred_check
    _
  $region39: #{transformer_forward.29} parent=0 // pred_check_branch
    %150 = sbr.rel (0) target = $region41
  $region40: #{transformer_forward.29} parent=0 // pred_region
    _
  $region41: #{transformer_forward.29} parent=0 // pred_fallthru
    _
  // Predicated region
  $region42: #{transformer_forward.29} parent=0 // pred_check
    _
  $region43: #{transformer_forward.29} parent=0 // pred_check_branch
    %152 = sbr.rel (0) target = $region45
  $region44: #{transformer_forward.29} parent=0 // pred_region
    _
  $region45: #{transformer_forward.29} parent=0 // pred_fallthru
    _

// kernel: transformer_forward.30
$region0: #{transformer_forward.30}
  #allocation0 [shape = 'u32[]', space=smem, size = 0x4, offset = 0x4, fixed_abs, tag = 'smem constant byte address 0x4 - core index']
  #allocation1 [shape = 'u32[144,128]{1,0:T(1,128)}', space=vmem, size = 0x12000, scoped, tag = 'internal scratch']
  %s0 = inlined_call_operand.vmem [shape: bf16[2,8,32], index: 0, kind: input, shape index: {}]
  %s1 = inlined_call_operand.vmem [shape: bf16[2,8,32], index: 1, kind: input, shape index: {}]
  %s2 = inlined_call_operand.vmem [shape: bf16[2,8,32], index: 2, kind: input, shape index: {}]
  %s3 = inlined_call_operand.vmem [shape: f32[8,8], index: 3, kind: input, shape index: {}]
  %s4 = inlined_call_operand.vmem [shape: bf16[2,8,32], index: 4, kind: output, shape index: {}]
  %s5 = sld [smem:[#allocation0]]
  $region49: #{transformer_forward.30} parent=0
    _
  %s7 = ssub.s32 1, %s5
  %s8 = scalar_select 0, %s7, %s5
  loop: start=0, step=1, limit=4
  $region2: #{transformer_forward.30} parent=0 // loop_pre_header
    _
  $region3: #{transformer_forward.30} parent=0 // loop_header
    %s10 = sphi 0, %s14
    %p11 = scmp.ge.s32.totalorder %s10, 4
    %s17 = sphi 0, %s29
    %s18 = sphi 0, %s25
    %s19 = sphi 0, %s17
    %s20 = sphi 0, %s18
    %s21 = sphi 0, %s19
    %s22 = sphi 0, %s20
    %s34 = sphi 0, %s36
    %s37 = sphi 0, %s34
    %s38 = sphi 0, %s37
    %s54 = sphi 0, %s38
    %s60 = sphi 0, %s62
    %s63 = sphi 0, %s60
    %s64 = sphi 0, %s63
    %s80 = sphi 0, %s64
    %s86 = sphi 0, %s88
    %s89 = sphi 0, %s86
    %s90 = sphi 0, %s89
    %s106 = sphi 0, %s90
    %s112 = sphi 0, %s114
    %s115 = sphi 0, %s112
    %s116 = sphi 0, %s115
    %s132 = sphi 0, %s116
    %s140 = sphi 0, %s142
    %s143 = sphi 0, %s140
    %s144 = sphi 0, %s143
    %s160 = sphi 0, %s144
  $region4: #{transformer_forward.30} parent=0 // loop_header_branch
    %13 = sbr.rel (%p11) target = $region8
  $region5: #{transformer_forward.30} parent=0 // loop_body
    %s15 = ssub.s32 %s10, 1
    %s16 = ssub.s32 %s10, 2
    %s23 = sadd.s32 1, %s18
    %p24 = scmp.ge.s32.totalorder %s23, 1
    %s25 = scalar_select %p24, 0, %s23
    %s26 = sadd.s32 1, %s17
    %s27 = scalar_select %p24, %s26, %s17
    %p28 = scmp.ge.s32.totalorder %s27, 2
    %s29 = scalar_select %p28, 0, %s27
    %s30 = ssub.s32 %s17, %s29
    %s31 = ssub.s32 %s18, %s25
    %s32 = sor.u32 %s30, %s31
    %p33 = scmp.eq.s32.totalorder %s32, 0
    %s35 = sadd.s32 %s34, 1
    %s36 = scalar_select %p33, %s34, %s35
    %p39 = pneg %p33
    %p40 = scmp.eq.s32.totalorder %s10, 1
    %p41 = por %p39, %p40
    %p42 = scmp.ne.s32.totalorder %s34, %s37
    %p43 = scmp.eq.s32.totalorder %s10, 0
    %p44 = por %p42, %p43
    %p45 = scmp.ne.s32.totalorder %s34, %s37
    %p46 = scmp.eq.s32.totalorder %s15, 1
    %p47 = por %p45, %p46
    %p48 = scmp.ne.s32.totalorder %s37, %s38
    %p49 = scmp.eq.s32.totalorder %s15, 0
    %p50 = por %p48, %p49
    %p51 = scmp.ne.s32.totalorder %s37, %s38
    %p52 = scmp.eq.s32.totalorder %s16, 1
    %p53 = por %p51, %p52
    %p55 = scmp.ne.s32.totalorder %s38, %s54
    %p56 = scmp.eq.s32.totalorder %s16, 0
    %p57 = por %p55, %p56
    %s58 = ssub.s32 %s17, %s29
    %p59 = scmp.eq.s32.totalorder %s58, 0
    %s61 = sadd.s32 %s60, 1
    %s62 = scalar_select %p59, %s60, %s61
    %p65 = pneg %p59
    %p66 = scmp.eq.s32.totalorder %s10, 1
    %p67 = por %p65, %p66
    %p68 = scmp.ne.s32.totalorder %s60, %s63
    %p69 = scmp.eq.s32.totalorder %s10, 0
    %p70 = por %p68, %p69
    %p71 = scmp.ne.s32.totalorder %s60, %s63
    %p72 = scmp.eq.s32.totalorder %s15, 1
    %p73 = por %p71, %p72
    %p74 = scmp.ne.s32.totalorder %s63, %s64
    %p75 = scmp.eq.s32.totalorder %s15, 0
    %p76 = por %p74, %p75
    %p77 = scmp.ne.s32.totalorder %s63, %s64
    %p78 = scmp.eq.s32.totalorder %s16, 1
    %p79 = por %p77, %p78
    %p81 = scmp.ne.s32.totalorder %s64, %s80
    %p82 = scmp.eq.s32.totalorder %s16, 0
    %p83 = por %p81, %p82
    %s84 = ssub.s32 %s17, %s29
    %p85 = scmp.eq.s32.totalorder %s84, 0
    %s87 = sadd.s32 %s86, 1
    %s88 = scalar_select %p85, %s86, %s87
    %p91 = pneg %p85
    %p92 = scmp.eq.s32.totalorder %s10, 1
    %p93 = por %p91, %p92
    %p94 = scmp.ne.s32.totalorder %s86, %s89
    %p95 = scmp.eq.s32.totalorder %s10, 0
    %p96 = por %p94, %p95
    %p97 = scmp.ne.s32.totalorder %s86, %s89
    %p98 = scmp.eq.s32.totalorder %s15, 1
    %p99 = por %p97, %p98
    %p100 = scmp.ne.s32.totalorder %s89, %s90
    %p101 = scmp.eq.s32.totalorder %s15, 0
    %p102 = por %p100, %p101
    %p103 = scmp.ne.s32.totalorder %s89, %s90
    %p104 = scmp.eq.s32.totalorder %s16, 1
    %p105 = por %p103, %p104
    %p107 = scmp.ne.s32.totalorder %s90, %s106
    %p108 = scmp.eq.s32.totalorder %s16, 0
    %p109 = por %p107, %p108
    %s110 = ssub.s32 %s18, %s25
    %p111 = scmp.eq.s32.totalorder %s110, 0
    %s113 = sadd.s32 %s112, 1
    %s114 = scalar_select %p111, %s112, %s113
    %p117 = pneg %p111
    %p118 = scmp.eq.s32.totalorder %s10, 1
    %p119 = por %p117, %p118
    %p120 = scmp.ne.s32.totalorder %s112, %s115
    %p121 = scmp.eq.s32.totalorder %s10, 0
    %p122 = por %p120, %p121
    %p123 = scmp.ne.s32.totalorder %s112, %s115
    %p124 = scmp.eq.s32.totalorder %s15, 1
    %p125 = por %p123, %p124
    %p126 = scmp.ne.s32.totalorder %s115, %s116
    %p127 = scmp.eq.s32.totalorder %s15, 0
    %p128 = por %p126, %p127
    %p129 = scmp.ne.s32.totalorder %s115, %s116
    %p130 = scmp.eq.s32.totalorder %s16, 1
    %p131 = por %p129, %p130
    %p133 = scmp.ne.s32.totalorder %s116, %s132
    %p134 = scmp.eq.s32.totalorder %s16, 0
    %p135 = por %p133, %p134
    %s136 = ssub.s32 %s17, %s29
    %s137 = ssub.s32 %s18, %s25
    %s138 = sor.u32 %s136, %s137
    %p139 = scmp.eq.s32.totalorder %s138, 0
    %s141 = sadd.s32 %s140, 1
    %s142 = scalar_select %p139, %s140, %s141
    %p145 = pneg %p139
    %p146 = scmp.eq.s32.totalorder %s10, 1
    %p147 = por %p145, %p146
    %p148 = scmp.ne.s32.totalorder %s140, %s143
    %p149 = scmp.eq.s32.totalorder %s10, 0
    %p150 = por %p148, %p149
    %p151 = scmp.ne.s32.totalorder %s140, %s143
    %p152 = scmp.eq.s32.totalorder %s15, 1
    %p153 = por %p151, %p152
    %p154 = scmp.ne.s32.totalorder %s143, %s144
    %p155 = scmp.eq.s32.totalorder %s15, 0
    %p156 = por %p154, %p155
    %p157 = scmp.ne.s32.totalorder %s143, %s144
    %p158 = scmp.eq.s32.totalorder %s16, 1
    %p159 = por %p157, %p158
    %p161 = scmp.ne.s32.totalorder %s144, %s160
    %p162 = scmp.eq.s32.totalorder %s16, 0
    %p163 = por %p161, %p162
    %p164 = scmp.le.s32.totalorder 1, %s10
    %p165 = scmp.lt.s32.totalorder %s10, 3
    %p166 = pnand %p164, %p165
    %p167 = pneg %p166
    // Predicated region
    $region9: #{transformer_forward.30} parent=5 // pred_check
      _
    $region10: #{transformer_forward.30} parent=5 // pred_check_branch
      %169 = sbr.rel (%p166) target = $region12
    $region11: #{transformer_forward.30} parent=5 // pred_region
      %s170 = ssub.s32 %s10, 1
      // Predicated region
      $region13: #{transformer_forward.30} parent=11 // pred_check
        %p171 = pneg %p128
      $region14: #{transformer_forward.30} parent=11 // pred_check_branch
        %173 = sbr.rel (%p171) target = $region16
      $region15: #{transformer_forward.30} parent=11 // pred_region
        %p174 = scmp.lt.s32.totalorder %s20, 0
        %s175 = scalar_select %p174, %s20, 0
        %s176 = smul.addr %s175, 8
        %s177 = scalar_lea.vmem %s3, %s176
      $region16: #{transformer_forward.30} parent=11 // pred_fallthru
        _
    $region12: #{transformer_forward.30} parent=5 // pred_fallthru
      _
    %p178 = scmp.lt.s32.totalorder %s10, 2
    // Predicated region
    $region17: #{transformer_forward.30} parent=5 // pred_check
      %p179 = pneg %p178
    $region18: #{transformer_forward.30} parent=5 // pred_check_branch
      %181 = sbr.rel (%p179) target = $region20
    $region19: #{transformer_forward.30} parent=5 // pred_region
      // Predicated region
      $region21: #{transformer_forward.30} parent=19 // pred_check
        %p182 = pneg %p44
      $region22: #{transformer_forward.30} parent=19 // pred_check_branch
        %184 = sbr.rel (%p182) target = $region24
      $region23: #{transformer_forward.30} parent=19 // pred_region
        %p185 = scmp.lt.s32.totalorder %s17, 1
        %s186 = scalar_select %p185, %s17, 1
        %p187 = scmp.lt.s32.totalorder %s18, 0
        %s188 = scalar_select %p187, %s18, 0
        %s189 = sadd.s32 %s188, %s186
        %s190 = smul.addr %s189, 4
        %s191 = scalar_lea.vmem %s0, %s190
      $region24: #{transformer_forward.30} parent=19 // pred_fallthru
        _
      // Predicated region
      $region25: #{transformer_forward.30} parent=19 // pred_check
        %p192 = pneg %p70
      $region26: #{transformer_forward.30} parent=19 // pred_check_branch
        %194 = sbr.rel (%p192) target = $region28
      $region27: #{transformer_forward.30} parent=19 // pred_region
        %p195 = scmp.lt.s32.totalorder %s17, 1
        %s196 = scalar_select %p195, %s17, 1
        %s197 = smul.addr %s196, 4
        %s198 = scalar_lea.vmem %s1, %s197
      $region28: #{transformer_forward.30} parent=19 // pred_fallthru
        _
      // Predicated region
      $region29: #{transformer_forward.30} parent=19 // pred_check
        %p199 = pneg %p96
      $region30: #{transformer_forward.30} parent=19 // pred_check_branch
        %201 = sbr.rel (%p199) target = $region32
      $region31: #{transformer_forward.30} parent=19 // pred_region
        %p202 = scmp.lt.s32.totalorder %s17, 1
        %s203 = scalar_select %p202, %s17, 1
        %s204 = smul.addr %s203, 4
        %s205 = scalar_lea.vmem %s2, %s204
      $region32: #{transformer_forward.30} parent=19 // pred_fallthru
        _
    $region20: #{transformer_forward.30} parent=5 // pred_fallthru
      _
    %p206 = scmp.le.s32.totalorder 1, %s10
    %p207 = scmp.lt.s32.totalorder %s10, 3
    %p208 = pnand %p206, %p207
    %p209 = pneg %p208
    // Predicated region
    $region33: #{transformer_forward.30} parent=5 // pred_check
      _
    $region34: #{transformer_forward.30} parent=5 // pred_check_branch
      %211 = sbr.rel (%p208) target = $region36
    $region35: #{transformer_forward.30} parent=5 // pred_region
      %s212 = ssub.s32 %s10, 1
      %p213 = scmp.lt.s32.totalorder %s19, 1
      %s214 = scalar_select %p213, %s19, 1
      %p215 = scmp.lt.s32.totalorder %s20, 0
      %s216 = scalar_select %p215, %s20, 0
      %s217 = sadd.s32 %s216, %s214
      %s218 = smul.addr %s217, 4
      %s219 = scalar_lea.vmem %s0, %s218
      %p220 = pneg %p50
      %p221 = pneg %p47
      %p222 = scmp.lt.s32.totalorder %s19, 1
      %s223 = scalar_select %p222, %s19, 1
      %s224 = smul.addr %s223, 4
      %s225 = scalar_lea.vmem %s1, %s224
      %p226 = pneg %p76
      %p227 = pneg %p73
      %p228 = scmp.lt.s32.totalorder %s19, 1
      %s229 = scalar_select %p228, %s19, 1
      %s230 = smul.addr %s229, 4
      %s231 = scalar_lea.vmem %s2, %s230
      %p232 = pneg %p102
      %p233 = pneg %p99
      %p234 = scmp.lt.s32.totalorder %s20, 0
      %s235 = scalar_select %p234, %s20, 0
      %s236 = smul.addr %s235, 8
      %s237 = scalar_lea.vmem %s3, %s236
      %p238 = pneg %p128
      %p239 = pneg %p125
      %p240 = pneg %p156
      %p241 = pneg %p153
      %p242 = scmp.lt.s32.totalorder %s19, 1
      %s243 = scalar_select %p242, %s19, 1
      %p244 = scmp.lt.s32.totalorder %s20, 0
      %s245 = scalar_select %p244, %s20, 0
      %s246 = sadd.s32 %s245, %s243
      %s247 = smul.addr %s246, 4
      %s248 = scalar_lea.vmem %s4, %s247
      %p249 = scmp.lt.s32.totalorder %s19, 1
      %s250 = scalar_select %p249, %s19, 1
      %p251 = scmp.lt.s32.totalorder %s20, 0
      %s252 = scalar_select %p251, %s20, 0
      %s253 = sadd.s32 %s252, %s250
      %s254 = smul.addr %s253, 4
      %s255 = scalar_lea.vmem %s0, %s254
      %p256 = scmp.lt.s32.totalorder %s19, 1
      %s257 = scalar_select %p256, %s19, 1
      %s258 = smul.addr %s257, 4
      %s259 = scalar_lea.vmem %s1, %s258
      %p260 = scmp.lt.s32.totalorder %s19, 1
      %s261 = scalar_select %p260, %s19, 1
      %s262 = smul.addr %s261, 4
      %s263 = scalar_lea.vmem %s2, %s262
      %p264 = scmp.lt.s32.totalorder %s20, 0
      %s265 = scalar_select %p264, %s20, 0
      %s266 = smul.addr %s265, 8
      %s267 = scalar_lea.vmem %s3, %s266
      %p268 = scmp.lt.s32.totalorder %s19, 1
      %s269 = scalar_select %p268, %s19, 1
      %p270 = scmp.lt.s32.totalorder %s20, 0
      %s271 = scalar_select %p270, %s20, 0
      %s272 = sadd.s32 %s271, %s269
      %s273 = smul.addr %s272, 4
      %s274 = scalar_lea.vmem %s4, %s273
      %v276 = vld [vmem:[%s267] sm:$0xff]
      %v277 = vld [vmem:[%s255] sm:$0xf]
      %v278 = vld [vmem:[%s259] sm:$0xf]
      %v279 = vld [vmem:[%s263] sm:$0xf]
      %vm280 = vcmask 64512
      %v282 = vsel %vm280, %v277, 0
      %v285 = vsel %vm280, %v278, 0
      %287 = vmatprep.subr.bf16.mxu0 0
      %288 = vmatpush1.bf16.xpose.msra.mxu0 %v285
      %289 = vmatprep.subr.bf16.mxu0 0
      %290 = vmatpush1.bf16.xpose.msra.mxu0 0
      %291 = vmatprep.subr.bf16.mxu0 0
      %292 = vmatpush1.bf16.xpose.msra.mxu0 0
      %293 = vmatprep.subr.bf16.mxu0 0
      %294 = vmatpush1.bf16.xpose.msra.mxu0 0
      %295 = vmatprep.subr.bf16.mxu0 0
      %296 = vmatpush1.bf16.xpose.msra.mxu0 0
      %297 = vmatprep.subr.bf16.mxu0 0
      %298 = vmatpush1.bf16.xpose.msra.mxu0 0
      %299 = vmatprep.subr.bf16.mxu0 0
      %300 = vmatpush1.bf16.xpose.msra.mxu0 0
      %301 = vmatprep.subr.bf16.mxu0 0
      %302 = vmatpush1.bf16.xpose.msra.mxu0 0
      %303 = vmatprep.subr.bf16.mxu0 0
      %304 = vmatpush1.bf16.xpose.msra.mxu0 0
      %305 = vmatprep.subr.bf16.mxu0 0
      %306 = vmatpush1.bf16.xpose.msra.mxu0 0
      %307 = vmatprep.subr.bf16.mxu0 0
      %308 = vmatpush1.bf16.xpose.msra.mxu0 0
      %309 = vmatprep.subr.bf16.mxu0 0
      %310 = vmatpush1.bf16.xpose.msra.mxu0 0
      %311 = vmatprep.subr.bf16.mxu0 0
      %312 = vmatpush1.bf16.xpose.msra.mxu0 0
      %313 = vmatprep.subr.bf16.mxu0 0
      %314 = vmatpush1.bf16.xpose.msra.mxu0 0
      %315 = vmatprep.subr.bf16.mxu0 0
      %316 = vmatpush1.bf16.xpose.msra.mxu0 0
      %317 = vmatprep.subr.bf16.mxu0 0
      %318 = vmatpush1.bf16.xpose.msra.mxu0 0
      %319 = vmatprep.mubr.bf16.mxu0 0
      %320 = vmatmul.mubr.bf16.gmra.mrb[0].mxu0 %v282
      %v321 = vpop.f32.mrb[0].mxu0
      %v322 = vadd.f32 %v276, %v321
      %v323 = vpop.f32.mrb[0].mxu0
      %v324 = vpop.f32.mrb[0].mxu0
      %v325 = vpop.f32.mrb[0].mxu0
      %326 = vdwg.mxu0
      %v327 = vsel %vm280, %v322, -inf
      %328 = vmax.xlane.f32.xlu0 %v327
      %v329 = vpop.xlane.xlu0 %328
      %v330 = vsub.f32 %v322, %v329
      %v331 = vmul.f32 %v330, 1.442695
      %v332 = vpow.pop %v331
      %v333 = vsel %vm280, %v332, 0.0
      %334 = vadd.xlane.f32.xlu0 %v333
      %v335 = vpop.xlane.xlu0 %334
      %v336 = vrcp.pop %v335
      %v337 = vmul.f32 %v332, %v336
      %v338 = vpack.c.bf16 %v337, %v337
      %v340 = vsel %vm280, %v338, 0
      %vm342 = vcmask 1043456
      %v344 = vsel %vm342, %v279, 0
      %346 = vmatprep.subr.bf16.mxu0 0
      %347 = vmatpush1.bf16.msra.mxu0 %v344
      %348 = vmatprep.subr.bf16.mxu0 0
      %349 = vmatpush1.bf16.msra.mxu0 0
      %350 = vmatprep.subr.bf16.mxu0 0
      %351 = vmatpush1.bf16.msra.mxu0 0
      %352 = vmatprep.subr.bf16.mxu0 0
      %353 = vmatpush1.bf16.msra.mxu0 0
      %354 = vmatprep.subr.bf16.mxu0 0
      %355 = vmatpush1.bf16.msra.mxu0 0
      %356 = vmatprep.subr.bf16.mxu0 0
      %357 = vmatpush1.bf16.msra.mxu0 0
      %358 = vmatprep.subr.bf16.mxu0 0
      %359 = vmatpush1.bf16.msra.mxu0 0
      %360 = vmatprep.subr.bf16.mxu0 0
      %361 = vmatpush1.bf16.msra.mxu0 0
      %362 = vmatprep.subr.bf16.mxu0 0
      %363 = vmatpush1.bf16.msra.mxu0 0
      %364 = vmatprep.subr.bf16.mxu0 0
      %365 = vmatpush1.bf16.msra.mxu0 0
      %366 = vmatprep.subr.bf16.mxu0 0
      %367 = vmatpush1.bf16.msra.mxu0 0
      %368 = vmatprep.subr.bf16.mxu0 0
      %369 = vmatpush1.bf16.msra.mxu0 0
      %370 = vmatprep.subr.bf16.mxu0 0
      %371 = vmatpush1.bf16.msra.mxu0 0
      %372 = vmatprep.subr.bf16.mxu0 0
      %373 = vmatpush1.bf16.msra.mxu0 0
      %374 = vmatprep.subr.bf16.mxu0 0
      %375 = vmatpush1.bf16.msra.mxu0 0
      %376 = vmatprep.subr.bf16.mxu0 0
      %377 = vmatpush1.bf16.msra.mxu0 0
      %378 = vmatprep.mubr.bf16.mxu0 0
      %379 = vmatmul.mubr.bf16.gmra.mrb[0].mxu0 %v340
      %v380 = vpop.f32.mrb[0].mxu0
      %v381 = vadd.f32 0.0, %v380
      %v382 = vpop.f32.mrb[0].mxu0
      %v383 = vpop.f32.mrb[0].mxu0
      %v384 = vpop.f32.mrb[0].mxu0
      %385 = vdwg.mxu0
      %v387 = vunpack.c.l.b16 %v277
      %v388 = vpack.c.b16 %v387, %v387
      %389 = vrot.lane.b32.xlu0 %v388, 120
      %v390 = vpop.permute.xlu0 %389
      %v392 = vunpack.c.l.b16 %v278
      %v393 = vpack.c.b16 %v392, %v392
      %394 = vrot.lane.b32.xlu0 %v393, 120
      %v395 = vpop.permute.xlu0 %394
      %v397 = vsel %vm280, %v390, 0
      %v400 = vsel %vm280, %v395, 0
      %402 = vmatprep.subr.bf16.mxu0 0
      %403 = vmatpush1.bf16.xpose.msra.mxu0 %v400
      %404 = vmatprep.subr.bf16.mxu0 0
      %405 = vmatpush1.bf16.xpose.msra.mxu0 0
      %406 = vmatprep.subr.bf16.mxu0 0
      %407 = vmatpush1.bf16.xpose.msra.mxu0 0
      %408 = vmatprep.subr.bf16.mxu0 0
      %409 = vmatpush1.bf16.xpose.msra.mxu0 0
      %410 = vmatprep.subr.bf16.mxu0 0
      %411 = vmatpush1.bf16.xpose.msra.mxu0 0
      %412 = vmatprep.subr.bf16.mxu0 0
      %413 = vmatpush1.bf16.xpose.msra.mxu0 0
      %414 = vmatprep.subr.bf16.mxu0 0
      %415 = vmatpush1.bf16.xpose.msra.mxu0 0
      %416 = vmatprep.subr.bf16.mxu0 0
      %417 = vmatpush1.bf16.xpose.msra.mxu0 0
      %418 = vmatprep.subr.bf16.mxu0 0
      %419 = vmatpush1.bf16.xpose.msra.mxu0 0
      %420 = vmatprep.subr.bf16.mxu0 0
      %421 = vmatpush1.bf16.xpose.msra.mxu0 0
      %422 = vmatprep.subr.bf16.mxu0 0
      %423 = vmatpush1.bf16.xpose.msra.mxu0 0
      %424 = vmatprep.subr.bf16.mxu0 0
      %425 = vmatpush1.bf16.xpose.msra.mxu0 0
      %426 = vmatprep.subr.bf16.mxu0 0
      %427 = vmatpush1.bf16.xpose.msra.mxu0 0
      %428 = vmatprep.subr.bf16.mxu0 0
      %429 = vmatpush1.bf16.xpose.msra.mxu0 0
      %430 = vmatprep.subr.bf16.mxu0 0
      %431 = vmatpush1.bf16.xpose.msra.mxu0 0
      %432 = vmatprep.subr.bf16.mxu0 0
      %433 = vmatpush1.bf16.xpose.msra.mxu0 0
      %434 = vmatprep.mubr.bf16.mxu0 0
      %435 = vmatmul.mubr.bf16.gmra.mrb[0].mxu0 %v397
      %v436 = vpop.f32.mrb[0].mxu0
      %v437 = vadd.f32 %v276, %v436
      %v438 = vpop.f32.mrb[0].mxu0
      %v439 = vpop.f32.mrb[0].mxu0
      %v440 = vpop.f32.mrb[0].mxu0
      %441 = vdwg.mxu0
      %v442 = vsel %vm280, %v437, -inf
      %443 = vmax.xlane.f32.xlu0 %v442
      %v444 = vpop.xlane.xlu0 %443
      %v445 = vsub.f32 %v437, %v444
      %v446 = vmul.f32 %v445, 1.442695
      %v447 = vpow.pop %v446
      %v448 = vsel %vm280, %v447, 0.0
      %449 = vadd.xlane.f32.xlu0 %v448
      %v450 = vpop.xlane.xlu0 %449
      %v451 = vrcp.pop %v450
      %v452 = vmul.f32 %v447, %v451
      %v453 = vpack.c.bf16 %v452, %v452
      %v455 = vunpack.c.l.b16 %v279
      %v456 = vpack.c.b16 %v455, %v455
      %457 = vrot.lane.b32.xlu0 %v456, 120
      %v458 = vpop.permute.xlu0 %457
      %v460 = vsel %vm280, %v453, 0
      %v463 = vsel %vm342, %v458, 0
      %465 = vmatprep.subr.bf16.mxu0 0
      %466 = vmatpush1.bf16.msra.mxu0 %v463
      %467 = vmatprep.subr.bf16.mxu0 0
      %468 = vmatpush1.bf16.msra.mxu0 0
      %469 = vmatprep.subr.bf16.mxu0 0
      %470 = vmatpush1.bf16.msra.mxu0 0
      %471 = vmatprep.subr.bf16.mxu0 0
      %472 = vmatpush1.bf16.msra.mxu0 0
      %473 = vmatprep.subr.bf16.mxu0 0
      %474 = vmatpush1.bf16.msra.mxu0 0
      %475 = vmatprep.subr.bf16.mxu0 0
      %476 = vmatpush1.bf16.msra.mxu0 0
      %477 = vmatprep.subr.bf16.mxu0 0
      %478 = vmatpush1.bf16.msra.mxu0 0
      %479 = vmatprep.subr.bf16.mxu0 0
      %480 = vmatpush1.bf16.msra.mxu0 0
      %481 = vmatprep.subr.bf16.mxu0 0
      %482 = vmatpush1.bf16.msra.mxu0 0
      %483 = vmatprep.subr.bf16.mxu0 0
      %484 = vmatpush1.bf16.msra.mxu0 0
      %485 = vmatprep.subr.bf16.mxu0 0
      %486 = vmatpush1.bf16.msra.mxu0 0
      %487 = vmatprep.subr.bf16.mxu0 0
      %488 = vmatpush1.bf16.msra.mxu0 0
      %489 = vmatprep.subr.bf16.mxu0 0
      %490 = vmatpush1.bf16.msra.mxu0 0
      %491 = vmatprep.subr.bf16.mxu0 0
      %492 = vmatpush1.bf16.msra.mxu0 0
      %493 = vmatprep.subr.bf16.mxu0 0
      %494 = vmatpush1.bf16.msra.mxu0 0
      %495 = vmatprep.subr.bf16.mxu0 0
      %496 = vmatpush1.bf16.msra.mxu0 0
      %497 = vmatprep.mubr.bf16.mxu0 0
      %498 = vmatmul.mubr.bf16.gmra.mrb[0].mxu0 %v460
      %v499 = vpop.f32.mrb[0].mxu0
      %v500 = vadd.f32 0.0, %v499
      %v501 = vpop.f32.mrb[0].mxu0
      %v502 = vpop.f32.mrb[0].mxu0
      %v503 = vpop.f32.mrb[0].mxu0
      %504 = vdwg.mxu0
      %505 = vrot.lane.b32.xlu0 %v388, 112
      %v506 = vpop.permute.xlu0 %505
      %507 = vrot.lane.b32.xlu0 %v393, 112
      %v508 = vpop.permute.xlu0 %507
      %v510 = vsel %vm280, %v506, 0
      %v513 = vsel %vm280, %v508, 0
      %515 = vmatprep.subr.bf16.mxu0 0
      %516 = vmatpush1.bf16.xpose.msra.mxu0 %v513
      %517 = vmatprep.subr.bf16.mxu0 0
      %518 = vmatpush1.bf16.xpose.msra.mxu0 0
      %519 = vmatprep.subr.bf16.mxu0 0
      %520 = vmatpush1.bf16.xpose.msra.mxu0 0
      %521 = vmatprep.subr.bf16.mxu0 0
      %522 = vmatpush1.bf16.xpose.msra.mxu0 0
      %523 = vmatprep.subr.bf16.mxu0 0
      %524 = vmatpush1.bf16.xpose.msra.mxu0 0
      %525 = vmatprep.subr.bf16.mxu0 0
      %526 = vmatpush1.bf16.xpose.msra.mxu0 0
      %527 = vmatprep.subr.bf16.mxu0 0
      %528 = vmatpush1.bf16.xpose.msra.mxu0 0
      %529 = vmatprep.subr.bf16.mxu0 0
      %530 = vmatpush1.bf16.xpose.msra.mxu0 0
      %531 = vmatprep.subr.bf16.mxu0 0
      %532 = vmatpush1.bf16.xpose.msra.mxu0 0
      %533 = vmatprep.subr.bf16.mxu0 0
      %534 = vmatpush1.bf16.xpose.msra.mxu0 0
      %535 = vmatprep.subr.bf16.mxu0 0
      %536 = vmatpush1.bf16.xpose.msra.mxu0 0
      %537 = vmatprep.subr.bf16.mxu0 0
      %538 = vmatpush1.bf16.xpose.msra.mxu0 0
      %539 = vmatprep.subr.bf16.mxu0 0
      %540 = vmatpush1.bf16.xpose.msra.mxu0 0
      %541 = vmatprep.subr.bf16.mxu0 0
      %542 = vmatpush1.bf16.xpose.msra.mxu0 0
      %543 = vmatprep.subr.bf16.mxu0 0
      %544 = vmatpush1.bf16.xpose.msra.mxu0 0
      %545 = vmatprep.subr.bf16.mxu0 0
      %546 = vmatpush1.bf16.xpose.msra.mxu0 0
      %547 = vmatprep.mubr.bf16.mxu0 0
      %548 = vmatmul.mubr.bf16.gmra.mrb[0].mxu0 %v510
      %v549 = vpop.f32.mrb[0].mxu0
      %v550 = vadd.f32 %v276, %v549
      %v551 = vpop.f32.mrb[0].mxu0
      %v552 = vpop.f32.mrb[0].mxu0
      %v553 = vpop.f32.mrb[0].mxu0
      %554 = vdwg.mxu0
      %v555 = vsel %vm280, %v550, -inf
      %556 = vmax.xlane.f32.xlu0 %v555
      %v557 = vpop.xlane.xlu0 %556
      %v558 = vsub.f32 %v550, %v557
      %v559 = vmul.f32 %v558, 1.442695
      %v560 = vpow.pop %v559
      %v561 = vsel %vm280, %v560, 0.0
      %562 = vadd.xlane.f32.xlu0 %v561
      %v563 = vpop.xlane.xlu0 %562
      %v564 = vrcp.pop %v563
      %v565 = vmul.f32 %v560, %v564
      %v566 = vpack.c.bf16 %v565, %v565
      %567 = vrot.lane.b32.xlu0 %v456, 112
      %v568 = vpop.permute.xlu0 %567
      %v570 = vsel %vm280, %v566, 0
      %v573 = vsel %vm342, %v568, 0
      %575 = vmatprep.subr.bf16.mxu0 0
      %576 = vmatpush1.bf16.msra.mxu0 %v573
      %577 = vmatprep.subr.bf16.mxu0 0
      %578 = vmatpush1.bf16.msra.mxu0 0
      %579 = vmatprep.subr.bf16.mxu0 0
      %580 = vmatpush1.bf16.msra.mxu0 0
      %581 = vmatprep.subr.bf16.mxu0 0
      %582 = vmatpush1.bf16.msra.mxu0 0
      %583 = vmatprep.subr.bf16.mxu0 0
      %584 = vmatpush1.bf16.msra.mxu0 0
      %585 = vmatprep.subr.bf16.mxu0 0
      %586 = vmatpush1.bf16.msra.mxu0 0
      %587 = vmatprep.subr.bf16.mxu0 0
      %588 = vmatpush1.bf16.msra.mxu0 0
      %589 = vmatprep.subr.bf16.mxu0 0
      %590 = vmatpush1.bf16.msra.mxu0 0
      %591 = vmatprep.subr.bf16.mxu0 0
      %592 = vmatpush1.bf16.msra.mxu0 0
      %593 = vmatprep.subr.bf16.mxu0 0
      %594 = vmatpush1.bf16.msra.mxu0 0
      %595 = vmatprep.subr.bf16.mxu0 0
      %596 = vmatpush1.bf16.msra.mxu0 0
      %597 = vmatprep.subr.bf16.mxu0 0
      %598 = vmatpush1.bf16.msra.mxu0 0
      %599 = vmatprep.subr.bf16.mxu0 0
      %600 = vmatpush1.bf16.msra.mxu0 0
      %601 = vmatprep.subr.bf16.mxu0 0
      %602 = vmatpush1.bf16.msra.mxu0 0
      %603 = vmatprep.subr.bf16.mxu0 0
      %604 = vmatpush1.bf16.msra.mxu0 0
      %605 = vmatprep.subr.bf16.mxu0 0
      %606 = vmatpush1.bf16.msra.mxu0 0
      %607 = vmatprep.mubr.bf16.mxu0 0
      %608 = vmatmul.mubr.bf16.gmra.mrb[0].mxu0 %v570
      %v609 = vpop.f32.mrb[0].mxu0
      %v610 = vadd.f32 0.0, %v609
      %v611 = vpop.f32.mrb[0].mxu0
      %v612 = vpop.f32.mrb[0].mxu0
      %v613 = vpop.f32.mrb[0].mxu0
      %614 = vdwg.mxu0
      %615 = vrot.lane.b32.xlu0 %v388, 104
      %v616 = vpop.permute.xlu0 %615
      %617 = vrot.lane.b32.xlu0 %v393, 104
      %v618 = vpop.permute.xlu0 %617
      %v620 = vsel %vm280, %v616, 0
      %v623 = vsel %vm280, %v618, 0
      %625 = vmatprep.subr.bf16.mxu0 0
      %626 = vmatpush1.bf16.xpose.msra.mxu0 %v623
      %627 = vmatprep.subr.bf16.mxu0 0
      %628 = vmatpush1.bf16.xpose.msra.mxu0 0
      %629 = vmatprep.subr.bf16.mxu0 0
      %630 = vmatpush1.bf16.xpose.msra.mxu0 0
      %631 = vmatprep.subr.bf16.mxu0 0
      %632 = vmatpush1.bf16.xpose.msra.mxu0 0
      %633 = vmatprep.subr.bf16.mxu0 0
      %634 = vmatpush1.bf16.xpose.msra.mxu0 0
      %635 = vmatprep.subr.bf16.mxu0 0
      %636 = vmatpush1.bf16.xpose.msra.mxu0 0
      %637 = vmatprep.subr.bf16.mxu0 0
      %638 = vmatpush1.bf16.xpose.msra.mxu0 0
      %639 = vmatprep.subr.bf16.mxu0 0
      %640 = vmatpush1.bf16.xpose.msra.mxu0 0
      %641 = vmatprep.subr.bf16.mxu0 0
      %642 = vmatpush1.bf16.xpose.msra.mxu0 0
      %643 = vmatprep.subr.bf16.mxu0 0
      %644 = vmatpush1.bf16.xpose.msra.mxu0 0
      %645 = vmatprep.subr.bf16.mxu0 0
      %646 = vmatpush1.bf16.xpose.msra.mxu0 0
      %647 = vmatprep.subr.bf16.mxu0 0
      %648 = vmatpush1.bf16.xpose.msra.mxu0 0
      %649 = vmatprep.subr.bf16.mxu0 0
      %650 = vmatpush1.bf16.xpose.msra.mxu0 0
      %651 = vmatprep.subr.bf16.mxu0 0
      %652 = vmatpush1.bf16.xpose.msra.mxu0 0
      %653 = vmatprep.subr.bf16.mxu0 0
      %654 = vmatpush1.bf16.xpose.msra.mxu0 0
      %655 = vmatprep.subr.bf16.mxu0 0
      %656 = vmatpush1.bf16.xpose.msra.mxu0 0
      %657 = vmatprep.mubr.bf16.mxu0 0
      %658 = vmatmul.mubr.bf16.gmra.mrb[0].mxu0 %v620
      %v659 = vpop.f32.mrb[0].mxu0
      %v660 = vadd.f32 %v276, %v659
      %v661 = vpop.f32.mrb[0].mxu0
      %v662 = vpop.f32.mrb[0].mxu0
      %v663 = vpop.f32.mrb[0].mxu0
      %664 = vdwg.mxu0
      %v665 = vsel %vm280, %v660, -inf
      %666 = vmax.xlane.f32.xlu0 %v665
      %v667 = vpop.xlane.xlu0 %666
      %v668 = vsub.f32 %v660, %v667
      %v669 = vmul.f32 %v668, 1.442695
      %v670 = vpow.pop %v669
      %v671 = vsel %vm280, %v670, 0.0
      %672 = vadd.xlane.f32.xlu0 %v671
      %v673 = vpop.xlane.xlu0 %672
      %v674 = vrcp.pop %v673
      %v675 = vmul.f32 %v670, %v674
      %v676 = vpack.c.bf16 %v675, %v675
      %677 = vrot.lane.b32.xlu0 %v456, 104
      %v678 = vpop.permute.xlu0 %677
      %v680 = vsel %vm280, %v676, 0
      %v683 = vsel %vm342, %v678, 0
      %685 = vmatprep.subr.bf16.mxu0 0
      %686 = vmatpush1.bf16.msra.mxu0 %v683
      %687 = vmatprep.subr.bf16.mxu0 0
      %688 = vmatpush1.bf16.msra.mxu0 0
      %689 = vmatprep.subr.bf16.mxu0 0
      %690 = vmatpush1.bf16.msra.mxu0 0
      %691 = vmatprep.subr.bf16.mxu0 0
      %692 = vmatpush1.bf16.msra.mxu0 0
      %693 = vmatprep.subr.bf16.mxu0 0
      %694 = vmatpush1.bf16.msra.mxu0 0
      %695 = vmatprep.subr.bf16.mxu0 0
      %696 = vmatpush1.bf16.msra.mxu0 0
      %697 = vmatprep.subr.bf16.mxu0 0
      %698 = vmatpush1.bf16.msra.mxu0 0
      %699 = vmatprep.subr.bf16.mxu0 0
      %700 = vmatpush1.bf16.msra.mxu0 0
      %701 = vmatprep.subr.bf16.mxu0 0
      %702 = vmatpush1.bf16.msra.mxu0 0
      %703 = vmatprep.subr.bf16.mxu0 0
      %704 = vmatpush1.bf16.msra.mxu0 0
      %705 = vmatprep.subr.bf16.mxu0 0
      %706 = vmatpush1.bf16.msra.mxu0 0
      %707 = vmatprep.subr.bf16.mxu0 0
      %708 = vmatpush1.bf16.msra.mxu0 0
      %709 = vmatprep.subr.bf16.mxu0 0
      %710 = vmatpush1.bf16.msra.mxu0 0
      %711 = vmatprep.subr.bf16.mxu0 0
      %712 = vmatpush1.bf16.msra.mxu0 0
      %713 = vmatprep.subr.bf16.mxu0 0
      %714 = vmatpush1.bf16.msra.mxu0 0
      %715 = vmatprep.subr.bf16.mxu0 0
      %716 = vmatpush1.bf16.msra.mxu0 0
      %717 = vmatprep.mubr.bf16.mxu0 0
      %718 = vmatmul.mubr.bf16.gmra.mrb[0].mxu0 %v680
      %v719 = vpop.f32.mrb[0].mxu0
      %v720 = vadd.f32 0.0, %v719
      %v721 = vpop.f32.mrb[0].mxu0
      %v722 = vpop.f32.mrb[0].mxu0
      %v723 = vpop.f32.mrb[0].mxu0
      %724 = vdwg.mxu0
      %726 = vrot.lane.b32.xlu0 %v500, 8
      %v727 = vpop.permute.xlu0 %726
      %730 = vrot.lane.b32.xlu0 %v610, 16
      %v731 = vpop.permute.xlu0 %730
      %734 = vrot.lane.b32.xlu0 %v720, 24
      %v735 = vpop.permute.xlu0 %734
      %v737 = vsel %vm280, %v381, %v727
      %vm738 = vcmask 130048
      %v739 = vsel %vm738, %v737, %v731
      %vm740 = vcmask 195584
      %v741 = vsel %vm740, %v739, %v735
      %v742 = vpack.c.bf16 %v741, %v741
      %vm743 = vcmask 257024
      %744 = vst.msk [vmem:[%s274] sm:$0xf] %vm743, %v742
      %p745 = scmp.lt.s32.totalorder %s19, 1
      %s746 = scalar_select %p745, %s19, 1
      %p747 = scmp.lt.s32.totalorder %s20, 0
      %s748 = scalar_select %p747, %s20, 0
      %s749 = sadd.s32 %s748, %s746
      %s750 = smul.addr %s749, 4
      %s751 = scalar_lea.vmem %s4, %s750
      // Predicated region
      $region37: #{transformer_forward.30} parent=35 // pred_check
        %p752 = pneg %p153
      $region38: #{transformer_forward.30} parent=35 // pred_check_branch
        %754 = sbr.rel (%p752) target = $region40
      $region39: #{transformer_forward.30} parent=35 // pred_region
        _
      $region40: #{transformer_forward.30} parent=35 // pred_fallthru
        _
    $region36: #{transformer_forward.30} parent=5 // pred_fallthru
      _
    %p755 = scmp.le.s32.totalorder 2, %s10
    // Predicated region
    $region41: #{transformer_forward.30} parent=5 // pred_check
      %p756 = pneg %p755
    $region42: #{transformer_forward.30} parent=5 // pred_check_branch
      %758 = sbr.rel (%p756) target = $region44
    $region43: #{transformer_forward.30} parent=5 // pred_region
      %s759 = ssub.s32 %s10, 2
      // Predicated region
      $region45: #{transformer_forward.30} parent=43 // pred_check
        %p760 = pneg %p159
      $region46: #{transformer_forward.30} parent=43 // pred_check_branch
        %762 = sbr.rel (%p760) target = $region48
      $region47: #{transformer_forward.30} parent=43 // pred_region
        %p763 = scmp.lt.s32.totalorder %s21, 1
        %s764 = scalar_select %p763, %s21, 1
        %p765 = scmp.lt.s32.totalorder %s22, 0
        %s766 = scalar_select %p765, %s22, 0
        %s767 = sadd.s32 %s766, %s764
        %s768 = smul.addr %s767, 4
        %s769 = scalar_lea.vmem %s4, %s768
      $region48: #{transformer_forward.30} parent=43 // pred_fallthru
        _
    $region44: #{transformer_forward.30} parent=5 // pred_fallthru
      _
  $region6: #{transformer_forward.30} parent=0 // loop_footer
    %s14 = sadd.s32 1, %s10
  $region7: #{transformer_forward.30} parent=0 // loop_footer_branch
    %9 = sbr.rel target = $region3
  $region8: #{transformer_forward.30} parent=0 // loop_exit
    _

// kernel: transformer_forward.43
$region0: #{transformer_forward.43}
  #allocation0 [shape = 'u32[]', space=smem, size = 0x4, offset = 0x4, fixed_abs, tag = 'smem constant byte address 0x4 - core index']
  #allocation1 [shape = 'u32[144,128]{1,0:T(1,128)}', space=vmem, size = 0x12000, scoped, tag = 'internal scratch']
  #allocation2 [shape = 'f32[16,64]{1,0:T(8,128)}', space=vmem, size = 0x2000, scoped, tag = 'scratch operand']
  %s0 = inlined_call_operand.vmem [shape: bf16[16,32], index: 0, kind: input, shape index: {}]
  %s1 = inlined_call_operand.vmem [shape: bf16[32,64], index: 1, kind: input, shape index: {}]
  %s2 = inlined_call_operand.vmem [shape: f32[1,64], index: 2, kind: input, shape index: {}]
  %s3 = inlined_call_operand.vmem [shape: bf16[16,32], index: 3, kind: output, shape index: {0}]
  %s4 = inlined_call_operand.vmem [shape: bf16[16,32], index: 4, kind: output, shape index: {1}]
  %5 = xla_tuple %s3, %s4
  %s6 = sld [smem:[#allocation0]]
  $region38: #{transformer_forward.43} parent=0
    _
  %s8 = ssub.s32 1, %s6
  %s9 = scalar_select 0, %s8, %s6
  // Predicated region
  $region2: #{transformer_forward.43} parent=0 // pred_check
    _
  $region3: #{transformer_forward.43} parent=0 // pred_check_branch
    %11 = sbr.rel (0) target = $region5
  $region4: #{transformer_forward.43} parent=0 // pred_region
    _
  $region5: #{transformer_forward.43} parent=0 // pred_fallthru
    _
  // Predicated region
  $region6: #{transformer_forward.43} parent=0 // pred_check
    _
  $region7: #{transformer_forward.43} parent=0 // pred_check_branch
    %13 = sbr.rel (0) target = $region9
  $region8: #{transformer_forward.43} parent=0 // pred_region
    _
  $region9: #{transformer_forward.43} parent=0 // pred_fallthru
    _
  // Predicated region
  $region10: #{transformer_forward.43} parent=0 // pred_check
    _
  $region11: #{transformer_forward.43} parent=0 // pred_check_branch
    %15 = sbr.rel (0) target = $region13
  $region12: #{transformer_forward.43} parent=0 // pred_region
    _
  $region13: #{transformer_forward.43} parent=0 // pred_fallthru
    _
  %p17 = scmp.eq.s32.totalorder 0, 0
  // Predicated region
  $region14: #{transformer_forward.43} parent=0 // pred_check
    %p18 = pneg %p17
  $region15: #{transformer_forward.43} parent=0 // pred_check_branch
    %20 = sbr.rel (%p18) target = $region17
  $region16: #{transformer_forward.43} parent=0 // pred_region
    %vm21 = vcmask 523264
    %22 = vst.msk [vmem:[#allocation2] sm:$0xff] %vm21, 0.0
    %23 = vst.msk [vmem:[#allocation2 + $0x8] sm:$0xff] %vm21, 0.0
  $region17: #{transformer_forward.43} parent=0 // pred_fallthru
    _
  %v24 = vld [vmem:[#allocation2] sm:$0xff]
  %v25 = vld [vmem:[#allocation2 + $0x8] sm:$0xff]
  %v26 = vld [vmem:[%s0] sm:$0xf]
  %v27 = vld [vmem:[%s0 + $0x4] sm:$0xf]
  %v28 = vld [vmem:[%s1] sm:$0xf]
  %v29 = vld [vmem:[%s1 + $0x4] sm:$0xf]
  %v30 = vld [vmem:[%s1 + $0x8] sm:$0xf]
  %v31 = vld [vmem:[%s1 + $0xc] sm:$0xf]
  %v34 = vunpack.c.l.b16 %v26
  %v35 = vunpack.c.l.b16 %v27
  %v36 = vpack.c.b16 %v35, %v34
  %v41 = vunpack.c.l.b16 %v28
  %v42 = vunpack.c.l.b16 %v29
  %v43 = vunpack.c.l.b16 %v30
  %v44 = vunpack.c.l.b16 %v31
  %v45 = vpack.c.b16 %v42, %v41
  %v46 = vpack.c.b16 %v44, %v43
  %vm49 = vcmask 261120
  %v51 = vsel %vm49, %v36, 0
  %53 = vmatprep.subr.bf16.mxu0 0
  %54 = vmatpush1.bf16.msra.mxu0 %v45
  %55 = vmatprep.subr.bf16.mxu0 0
  %56 = vmatpush1.bf16.msra.mxu0 %v46
  %57 = vmatprep.subr.bf16.mxu0 0
  %58 = vmatpush1.bf16.msra.mxu0 0
  %59 = vmatprep.subr.bf16.mxu0 0
  %60 = vmatpush1.bf16.msra.mxu0 0
  %61 = vmatprep.subr.bf16.mxu0 0
  %62 = vmatpush1.bf16.msra.mxu0 0
  %63 = vmatprep.subr.bf16.mxu0 0
  %64 = vmatpush1.bf16.msra.mxu0 0
  %65 = vmatprep.subr.bf16.mxu0 0
  %66 = vmatpush1.bf16.msra.mxu0 0
  %67 = vmatprep.subr.bf16.mxu0 0
  %68 = vmatpush1.bf16.msra.mxu0 0
  %69 = vmatprep.subr.bf16.mxu0 0
  %70 = vmatpush1.bf16.msra.mxu0 0
  %71 = vmatprep.subr.bf16.mxu0 0
  %72 = vmatpush1.bf16.msra.mxu0 0
  %73 = vmatprep.subr.bf16.mxu0 0
  %74 = vmatpush1.bf16.msra.mxu0 0
  %75 = vmatprep.subr.bf16.mxu0 0
  %76 = vmatpush1.bf16.msra.mxu0 0
  %77 = vmatprep.subr.bf16.mxu0 0
  %78 = vmatpush1.bf16.msra.mxu0 0
  %79 = vmatprep.subr.bf16.mxu0 0
  %80 = vmatpush1.bf16.msra.mxu0 0
  %81 = vmatprep.subr.bf16.mxu0 0
  %82 = vmatpush1.bf16.msra.mxu0 0
  %83 = vmatprep.subr.bf16.mxu0 0
  %84 = vmatpush1.bf16.msra.mxu0 0
  %85 = vmatprep.mubr.bf16.mxu0 0
  %86 = vmatmul.mubr.bf16.gmra.mrb[0].mxu0 %v51
  %v87 = vpop.f32.mrb[0].mxu0
  %v88 = vadd.f32 0.0, %v87
  %v89 = vpop.f32.mrb[0].mxu0
  %v90 = vpop.f32.mrb[0].mxu0
  %v91 = vadd.f32 0.0, %v90
  %v92 = vpop.f32.mrb[0].mxu0
  %93 = vdwg.mxu0
  %v94 = vadd.f32 %v24, %v88
  %v95 = vadd.f32 %v25, %v91
  %vm96 = vcmask 523264
  %97 = vst.msk [vmem:[#allocation2] sm:$0xff] %vm96, %v94
  %98 = vst.msk [vmem:[#allocation2 + $0x8] sm:$0xff] %vm96, %v95
  // Predicated region
  $region18: #{transformer_forward.43} parent=0 // pred_check
    %p99 = pneg %p17
  $region19: #{transformer_forward.43} parent=0 // pred_check_branch
    %101 = sbr.rel (%p99) target = $region21
  $region20: #{transformer_forward.43} parent=0 // pred_region
    %v102 = vld [vmem:[#allocation2] sm:$0xff]
    %v103 = vld [vmem:[#allocation2 + $0x8] sm:$0xff]
    %v104 = vld [vmem:[%s2] sm:$0x1]
    %v106 = vlaneseq
    %v107 = vshrl.u32 %v106, 7
    %v108 = vsub.s32 0, %v107
    %v109 = vrot.slane %v104, %v108
    %v111 = vadd.f32 %v102, %v109
    %v112 = vadd.f32 %v103, %v109
    %v113 = vpack.c.bf16 %v112, %v111
    %v115 = vunpack.c.l.b16 %v113
    %v116 = vunpack.c.h.b16 %v113
    %v117 = vpack.c.b16 %v115, %v115
    %v118 = vpack.c.b16 %v116, %v116
    %vm121 = vcmask 257024
    %122 = vst.msk [vmem:[%s3] sm:$0xf] %vm121, %v117
    %123 = vst.msk [vmem:[%s3 + $0x4] sm:$0xf] %vm121, %v118
    %124 = vrot.lane.b32.xlu0 %v117, 96
    %v125 = vpop.permute.xlu0 %124
    %126 = vrot.lane.b32.xlu0 %v118, 96
    %v127 = vpop.permute.xlu0 %126
    %130 = vst.msk [vmem:[%s4] sm:$0xf] %vm121, %v125
    %131 = vst.msk [vmem:[%s4 + $0x4] sm:$0xf] %vm121, %v127
  $region21: #{transformer_forward.43} parent=0 // pred_fallthru
    _
  // Predicated region
  $region22: #{transformer_forward.43} parent=0 // pred_check
    _
  $region23: #{transformer_forward.43} parent=0 // pred_check_branch
    %133 = sbr.rel (0) target = $region25
  $region24: #{transformer_forward.43} parent=0 // pred_region
    _
  $region25: #{transformer_forward.43} parent=0 // pred_fallthru
    _
  // Predicated region
  $region26: #{transformer_forward.43} parent=0 // pred_check
    _
  $region27: #{transformer_forward.43} parent=0 // pred_check_branch
    %135 = sbr.rel (0) target = $region29
  $region28: #{transformer_forward.43} parent=0 // pred_region
    _
  $region29: #{transformer_forward.43} parent=0 // pred_fallthru
    _
  // Predicated region
  $region30: #{transformer_forward.43} parent=0 // pred_check
    _
  $region31: #{transformer_forward.43} parent=0 // pred_check_branch
    %137 = sbr.rel (0) target = $region33
  $region32: #{transformer_forward.43} parent=0 // pred_region
    _
  $region33: #{transformer_forward.43} parent=0 // pred_fallthru
    _
  // Predicated region
  $region34: #{transformer_forward.43} parent=0 // pred_check
    _
  $region35: #{transformer_forward.43} parent=0 // pred_check_branch
    %139 = sbr.rel (0) target = $region37
  $region36: #{transformer_forward.43} parent=0 // pred_region
    _
  $region37: #{transformer_forward.43} parent=0 // pred_fallthru
    _

// kernel: transformer_forward.42
$region0: #{transformer_forward.42}
  #allocation0 [shape = 'u32[]', space=smem, size = 0x4, offset = 0x4, fixed_abs, tag = 'smem constant byte address 0x4 - core index']
  #allocation1 [shape = 'u32[144,128]{1,0:T(1,128)}', space=vmem, size = 0x12000, scoped, tag = 'internal scratch']
  #allocation2 [shape = 'f32[16,32]{1,0:T(8,128)}', space=vmem, size = 0x2000, scoped, tag = 'scratch operand']
  %s0 = inlined_call_operand.vmem [shape: bf16[16,32], index: 0, kind: input, shape index: {}]
  %s1 = inlined_call_operand.vmem [shape: bf16[32,32], index: 1, kind: input, shape index: {}]
  %s2 = inlined_call_operand.vmem [shape: f32[1,32], index: 2, kind: input, shape index: {}]
  %s3 = inlined_call_operand.vmem [shape: bf16[16,32], index: 3, kind: output, shape index: {}]
  %s4 = sld [smem:[#allocation0]]
  $region30: #{transformer_forward.42} parent=0
    _
  %s6 = ssub.s32 1, %s4
  %s7 = scalar_select 0, %s6, %s4
  // Predicated region
  $region2: #{transformer_forward.42} parent=0 // pred_check
    _
  $region3: #{transformer_forward.42} parent=0 // pred_check_branch
    %9 = sbr.rel (0) target = $region5
  $region4: #{transformer_forward.42} parent=0 // pred_region
    _
  $region5: #{transformer_forward.42} parent=0 // pred_fallthru
    _
  // Predicated region
  $region6: #{transformer_forward.42} parent=0 // pred_check
    _
  $region7: #{transformer_forward.42} parent=0 // pred_check_branch
    %11 = sbr.rel (0) target = $region9
  $region8: #{transformer_forward.42} parent=0 // pred_region
    _
  $region9: #{transformer_forward.42} parent=0 // pred_fallthru
    _
  // Predicated region
  $region10: #{transformer_forward.42} parent=0 // pred_check
    _
  $region11: #{transformer_forward.42} parent=0 // pred_check_branch
    %13 = sbr.rel (0) target = $region13
  $region12: #{transformer_forward.42} parent=0 // pred_region
    _
  $region13: #{transformer_forward.42} parent=0 // pred_fallthru
    _
  %p15 = scmp.eq.s32.totalorder 0, 0
  // Predicated region
  $region14: #{transformer_forward.42} parent=0 // pred_check
    %p16 = pneg %p15
  $region15: #{transformer_forward.42} parent=0 // pred_check_branch
    %18 = sbr.rel (%p16) target = $region17
  $region16: #{transformer_forward.42} parent=0 // pred_region
    %vm19 = vcmask 261120
    %20 = vst.msk [vmem:[#allocation2] sm:$0xff] %vm19, 0.0
    %21 = vst.msk [vmem:[#allocation2 + $0x8] sm:$0xff] %vm19, 0.0
  $region17: #{transformer_forward.42} parent=0 // pred_fallthru
    _
  %v22 = vld [vmem:[#allocation2] sm:$0xff]
  %v23 = vld [vmem:[#allocation2 + $0x8] sm:$0xff]
  %v24 = vld [vmem:[%s0] sm:$0xf]
  %v25 = vld [vmem:[%s0 + $0x4] sm:$0xf]
  %v26 = vld [vmem:[%s1] sm:$0xf]
  %v27 = vld [vmem:[%s1 + $0x4] sm:$0xf]
  %v28 = vld [vmem:[%s1 + $0x8] sm:$0xf]
  %v29 = vld [vmem:[%s1 + $0xc] sm:$0xf]
  %v32 = vunpack.c.l.b16 %v24
  %v33 = vunpack.c.l.b16 %v25
  %v34 = vpack.c.b16 %v33, %v32
  %v39 = vunpack.c.l.b16 %v26
  %v40 = vunpack.c.l.b16 %v27
  %v41 = vunpack.c.l.b16 %v28
  %v42 = vunpack.c.l.b16 %v29
  %v43 = vpack.c.b16 %v40, %v39
  %v44 = vpack.c.b16 %v42, %v41
  %vm47 = vcmask 261120
  %v49 = vsel %vm47, %v34, 0
  %51 = vmatprep.subr.bf16.mxu0 0
  %52 = vmatpush1.bf16.msra.mxu0 %v43
  %53 = vmatprep.subr.bf16.mxu0 0
  %54 = vmatpush1.bf16.msra.mxu0 %v44
  %55 = vmatprep.subr.bf16.mxu0 0
  %56 = vmatpush1.bf16.msra.mxu0 0
  %57 = vmatprep.subr.bf16.mxu0 0
  %58 = vmatpush1.bf16.msra.mxu0 0
  %59 = vmatprep.subr.bf16.mxu0 0
  %60 = vmatpush1.bf16.msra.mxu0 0
  %61 = vmatprep.subr.bf16.mxu0 0
  %62 = vmatpush1.bf16.msra.mxu0 0
  %63 = vmatprep.subr.bf16.mxu0 0
  %64 = vmatpush1.bf16.msra.mxu0 0
  %65 = vmatprep.subr.bf16.mxu0 0
  %66 = vmatpush1.bf16.msra.mxu0 0
  %67 = vmatprep.subr.bf16.mxu0 0
  %68 = vmatpush1.bf16.msra.mxu0 0
  %69 = vmatprep.subr.bf16.mxu0 0
  %70 = vmatpush1.bf16.msra.mxu0 0
  %71 = vmatprep.subr.bf16.mxu0 0
  %72 = vmatpush1.bf16.msra.mxu0 0
  %73 = vmatprep.subr.bf16.mxu0 0
  %74 = vmatpush1.bf16.msra.mxu0 0
  %75 = vmatprep.subr.bf16.mxu0 0
  %76 = vmatpush1.bf16.msra.mxu0 0
  %77 = vmatprep.subr.bf16.mxu0 0
  %78 = vmatpush1.bf16.msra.mxu0 0
  %79 = vmatprep.subr.bf16.mxu0 0
  %80 = vmatpush1.bf16.msra.mxu0 0
  %81 = vmatprep.subr.bf16.mxu0 0
  %82 = vmatpush1.bf16.msra.mxu0 0
  %83 = vmatprep.mubr.bf16.mxu0 0
  %84 = vmatmul.mubr.bf16.gmra.mrb[0].mxu0 %v49
  %v85 = vpop.f32.mrb[0].mxu0
  %v86 = vadd.f32 0.0, %v85
  %v87 = vpop.f32.mrb[0].mxu0
  %v88 = vpop.f32.mrb[0].mxu0
  %v89 = vadd.f32 0.0, %v88
  %v90 = vpop.f32.mrb[0].mxu0
  %91 = vdwg.mxu0
  %v92 = vadd.f32 %v22, %v86
  %v93 = vadd.f32 %v23, %v89
  %94 = vst.msk [vmem:[#allocation2] sm:$0xff] %vm47, %v92
  %95 = vst.msk [vmem:[#allocation2 + $0x8] sm:$0xff] %vm47, %v93
  // Predicated region
  $region18: #{transformer_forward.42} parent=0 // pred_check
    %p96 = pneg %p15
  $region19: #{transformer_forward.42} parent=0 // pred_check_branch
    %98 = sbr.rel (%p96) target = $region21
  $region20: #{transformer_forward.42} parent=0 // pred_region
    %v99 = vld [vmem:[#allocation2] sm:$0xff]
    %v100 = vld [vmem:[#allocation2 + $0x8] sm:$0xff]
    %v101 = vld [vmem:[%s2] sm:$0x1]
    %v103 = vlaneseq
    %v104 = vshrl.u32 %v103, 7
    %v105 = vsub.s32 0, %v104
    %v106 = vrot.slane %v101, %v105
    %v108 = vadd.f32 %v99, %v106
    %v109 = vadd.f32 %v100, %v106
    %v110 = vpack.c.bf16 %v109, %v108
    %v112 = vunpack.c.l.b16 %v110
    %v113 = vunpack.c.h.b16 %v110
    %v114 = vpack.c.b16 %v112, %v112
    %v115 = vpack.c.b16 %v113, %v113
    %vm118 = vcmask 257024
    %119 = vst.msk [vmem:[%s3] sm:$0xf] %vm118, %v114
    %120 = vst.msk [vmem:[%s3 + $0x4] sm:$0xf] %vm118, %v115
  $region21: #{transformer_forward.42} parent=0 // pred_fallthru
    _
  // Predicated region
  $region22: #{transformer_forward.42} parent=0 // pred_check
    _
  $region23: #{transformer_forward.42} parent=0 // pred_check_branch
    %122 = sbr.rel (0) target = $region25
  $region24: #{transformer_forward.42} parent=0 // pred_region
    _
  $region25: #{transformer_forward.42} parent=0 // pred_fallthru
    _
  // Predicated region
  $region26: #{transformer_forward.42} parent=0 // pred_check
    _
  $region27: #{transformer_forward.42} parent=0 // pred_check_branch
    %124 = sbr.rel (0) target = $region29
  $region28: #{transformer_forward.42} parent=0 // pred_region
    _
  $region29: #{transformer_forward.42} parent=0 // pred_fallthru
    _

// kernel: transformer_forward.33
$region0: #{transformer_forward.33}
  #allocation0 [shape = 'u32[]', space=smem, size = 0x4, offset = 0x4, fixed_abs, tag = 'smem constant byte address 0x4 - core index']
  #allocation1 [shape = 'u32[144,128]{1,0:T(1,128)}', space=vmem, size = 0x12000, scoped, tag = 'internal scratch']
  #allocation2 [shape = 'f32[16,32]{1,0:T(8,128)}', space=vmem, size = 0x2000, scoped, tag = 'scratch operand']
  %s0 = inlined_call_operand.vmem [shape: bf16[16,64], index: 0, kind: input, shape index: {}]
  %s1 = inlined_call_operand.vmem [shape: bf16[64,32], index: 1, kind: input, shape index: {}]
  %s2 = inlined_call_operand.vmem [shape: f32[1,32], index: 2, kind: input, shape index: {}]
  %s3 = inlined_call_operand.vmem [shape: bf16[16,32], index: 3, kind: input, shape index: {}]
  %s4 = inlined_call_operand.vmem [shape: f32[1,32], index: 4, kind: input, shape index: {}]
  %s5 = inlined_call_operand.vmem [shape: f32[1,32], index: 5, kind: input, shape index: {}]
  %s6 = inlined_call_operand.vmem [shape: bf16[16,32], index: 6, kind: output, shape index: {}]
  %s7 = sld [smem:[#allocation0]]
  $region42: #{transformer_forward.33} parent=0
    _
  %s9 = ssub.s32 1, %s7
  %s10 = scalar_select 0, %s9, %s7
  // Predicated region
  $region2: #{transformer_forward.33} parent=0 // pred_check
    _
  $region3: #{transformer_forward.33} parent=0 // pred_check_branch
    %12 = sbr.rel (0) target = $region5
  $region4: #{transformer_forward.33} parent=0 // pred_region
    _
  $region5: #{transformer_forward.33} parent=0 // pred_fallthru
    _
  // Predicated region
  $region6: #{transformer_forward.33} parent=0 // pred_check
    _
  $region7: #{transformer_forward.33} parent=0 // pred_check_branch
    %14 = sbr.rel (0) target = $region9
  $region8: #{transformer_forward.33} parent=0 // pred_region
    _
  $region9: #{transformer_forward.33} parent=0 // pred_fallthru
    _
  // Predicated region
  $region10: #{transformer_forward.33} parent=0 // pred_check
    _
  $region11: #{transformer_forward.33} parent=0 // pred_check_branch
    %16 = sbr.rel (0) target = $region13
  $region12: #{transformer_forward.33} parent=0 // pred_region
    _
  $region13: #{transformer_forward.33} parent=0 // pred_fallthru
    _
  // Predicated region
  $region14: #{transformer_forward.33} parent=0 // pred_check
    _
  $region15: #{transformer_forward.33} parent=0 // pred_check_branch
    %18 = sbr.rel (0) target = $region17
  $region16: #{transformer_forward.33} parent=0 // pred_region
    _
  $region17: #{transformer_forward.33} parent=0 // pred_fallthru
    _
  // Predicated region
  $region18: #{transformer_forward.33} parent=0 // pred_check
    _
  $region19: #{transformer_forward.33} parent=0 // pred_check_branch
    %20 = sbr.rel (0) target = $region21
  $region20: #{transformer_forward.33} parent=0 // pred_region
    _
  $region21: #{transformer_forward.33} parent=0 // pred_fallthru
    _
  // Predicated region
  $region22: #{transformer_forward.33} parent=0 // pred_check
    _
  $region23: #{transformer_forward.33} parent=0 // pred_check_branch
    %22 = sbr.rel (0) target = $region25
  $region24: #{transformer_forward.33} parent=0 // pred_region
    _
  $region25: #{transformer_forward.33} parent=0 // pred_fallthru
    _
  %p24 = scmp.eq.s32.totalorder 0, 0
  // Predicated region
  $region26: #{transformer_forward.33} parent=0 // pred_check
    %p25 = pneg %p24
  $region27: #{transformer_forward.33} parent=0 // pred_check_branch
    %27 = sbr.rel (%p25) target = $region29
  $region28: #{transformer_forward.33} parent=0 // pred_region
    %vm28 = vcmask 261120
    %29 = vst.msk [vmem:[#allocation2] sm:$0xff] %vm28, 0.0
    %30 = vst.msk [vmem:[#allocation2 + $0x8] sm:$0xff] %vm28, 0.0
  $region29: #{transformer_forward.33} parent=0 // pred_fallthru
    _
  %v31 = vld [vmem:[#allocation2] sm:$0xff]
  %v32 = vld [vmem:[#allocation2 + $0x8] sm:$0xff]
  %v33 = vld [vmem:[%s0] sm:$0xf]
  %v34 = vld [vmem:[%s0 + $0x4] sm:$0xf]
  %v35 = vld [vmem:[%s1] sm:$0xf]
  %v36 = vld [vmem:[%s1 + $0x4] sm:$0xf]
  %v37 = vld [vmem:[%s1 + $0x8] sm:$0xf]
  %v38 = vld [vmem:[%s1 + $0xc] sm:$0xf]
  %v39 = vld [vmem:[%s1 + $0x10] sm:$0xf]
  %v40 = vld [vmem:[%s1 + $0x14] sm:$0xf]
  %v41 = vld [vmem:[%s1 + $0x18] sm:$0xf]
  %v42 = vld [vmem:[%s1 + $0x1c] sm:$0xf]
  %v45 = vunpack.c.l.b16 %v33
  %v46 = vunpack.c.l.b16 %v34
  %v47 = vpack.c.b16 %v46, %v45
  %v56 = vunpack.c.l.b16 %v35
  %v57 = vunpack.c.l.b16 %v36
  %v58 = vunpack.c.l.b16 %v37
  %v59 = vunpack.c.l.b16 %v38
  %v60 = vunpack.c.l.b16 %v39
  %v61 = vunpack.c.l.b16 %v40
  %v62 = vunpack.c.l.b16 %v41
  %v63 = vunpack.c.l.b16 %v42
  %v64 = vpack.c.b16 %v57, %v56
  %v65 = vpack.c.b16 %v59, %v58
  %v66 = vpack.c.b16 %v61, %v60
  %v67 = vpack.c.b16 %v63, %v62
  %vm72 = vcmask 523264
  %v74 = vsel %vm72, %v47, 0
  %76 = vmatprep.subr.bf16.mxu0 0
  %77 = vmatpush1.bf16.msra.mxu0 %v64
  %78 = vmatprep.subr.bf16.mxu0 0
  %79 = vmatpush1.bf16.msra.mxu0 %v65
  %80 = vmatprep.subr.bf16.mxu0 0
  %81 = vmatpush1.bf16.msra.mxu0 %v66
  %82 = vmatprep.subr.bf16.mxu0 0
  %83 = vmatpush1.bf16.msra.mxu0 %v67
  %84 = vmatprep.subr.bf16.mxu0 0
  %85 = vmatpush1.bf16.msra.mxu0 0
  %86 = vmatprep.subr.bf16.mxu0 0
  %87 = vmatpush1.bf16.msra.mxu0 0
  %88 = vmatprep.subr.bf16.mxu0 0
  %89 = vmatpush1.bf16.msra.mxu0 0
  %90 = vmatprep.subr.bf16.mxu0 0
  %91 = vmatpush1.bf16.msra.mxu0 0
  %92 = vmatprep.subr.bf16.mxu0 0
  %93 = vmatpush1.bf16.msra.mxu0 0
  %94 = vmatprep.subr.bf16.mxu0 0
  %95 = vmatpush1.bf16.msra.mxu0 0
  %96 = vmatprep.subr.bf16.mxu0 0
  %97 = vmatpush1.bf16.msra.mxu0 0
  %98 = vmatprep.subr.bf16.mxu0 0
  %99 = vmatpush1.bf16.msra.mxu0 0
  %100 = vmatprep.subr.bf16.mxu0 0
  %101 = vmatpush1.bf16.msra.mxu0 0
  %102 = vmatprep.subr.bf16.mxu0 0
  %103 = vmatpush1.bf16.msra.mxu0 0
  %104 = vmatprep.subr.bf16.mxu0 0
  %105 = vmatpush1.bf16.msra.mxu0 0
  %106 = vmatprep.subr.bf16.mxu0 0
  %107 = vmatpush1.bf16.msra.mxu0 0
  %108 = vmatprep.mubr.bf16.mxu0 0
  %109 = vmatmul.mubr.bf16.gmra.mrb[0].mxu0 %v74
  %v110 = vpop.f32.mrb[0].mxu0
  %v111 = vadd.f32 0.0, %v110
  %v112 = vpop.f32.mrb[0].mxu0
  %v113 = vpop.f32.mrb[0].mxu0
  %v114 = vadd.f32 0.0, %v113
  %v115 = vpop.f32.mrb[0].mxu0
  %116 = vdwg.mxu0
  %v117 = vadd.f32 %v31, %v111
  %v118 = vadd.f32 %v32, %v114
  %vm119 = vcmask 261120
  %120 = vst.msk [vmem:[#allocation2] sm:$0xff] %vm119, %v117
  %121 = vst.msk [vmem:[#allocation2 + $0x8] sm:$0xff] %vm119, %v118
  // Predicated region
  $region30: #{transformer_forward.33} parent=0 // pred_check
    %p122 = pneg %p24
  $region31: #{transformer_forward.33} parent=0 // pred_check_branch
    %124 = sbr.rel (%p122) target = $region33
  $region32: #{transformer_forward.33} parent=0 // pred_region
    %v125 = vld [vmem:[#allocation2] sm:$0xff]
    %v126 = vld [vmem:[#allocation2 + $0x8] sm:$0xff]
    %v127 = vld [vmem:[%s2] sm:$0x1]
    %v129 = vlaneseq
    %v130 = vshrl.u32 %v129, 7
    %v131 = vsub.s32 0, %v130
    %v132 = vrot.slane %v127, %v131
    %v134 = vadd.f32 %v125, %v132
    %v135 = vadd.f32 %v126, %v132
    %v136 = vld [vmem:[%s3] sm:$0xf]
    %v137 = vld [vmem:[%s3 + $0x4] sm:$0xf]
    %v138 = vunpack.c.l.bf16 %v136
    %v139 = vunpack.c.l.bf16 %v137
    %v140 = vadd.f32 %v134, %v138
    %v141 = vadd.f32 %v135, %v139
    %v142 = vsel %vm119, %v140, 0.0
    %143 = vadd.xlane.f32.xlu0 %v142
    %v144 = vpop.xlane.xlu0 %143
    %v145 = vsel %vm119, %v141, 0.0
    %146 = vadd.xlane.f32.xlu0 %v145
    %v147 = vpop.xlane.xlu0 %146
    %v148 = vmul.f32 %v140, %v140
    %v149 = vmul.f32 %v141, %v141
    %v150 = vsel %vm119, %v148, 0.0
    %151 = vadd.xlane.f32.xlu0 %v150
    %v152 = vpop.xlane.xlu0 %151
    %v153 = vsel %vm119, %v149, 0.0
    %154 = vadd.xlane.f32.xlu0 %v153
    %v155 = vpop.xlane.xlu0 %154
    %v156 = vmul.f32 %v144, 0.03125
    %v157 = vmul.f32 %v147, 0.03125
    %v158 = vmul.f32 %v152, 0.03125
    %v159 = vmul.f32 %v155, 0.03125
    %v160 = vmul.f32 %v156, %v156
    %v161 = vmul.f32 %v157, %v157
    %v162 = vsub.f32 %v158, %v160
    %v163 = vsub.f32 %v159, %v161
    %v164 = vsub.f32 %v140, %v156
    %v165 = vsub.f32 %v141, %v157
    %v166 = vadd.f32 %v162, 1e-05
    %v167 = vadd.f32 %v163, 1e-05
    %v168 = vrsqrt.pop %v166
    %v169 = vrsqrt.pop %v167
    %v170 = vmul.f32 %v164, %v168
    %v171 = vmul.f32 %v165, %v169
    %v172 = vld [vmem:[%s4] sm:$0x1]
    %v174 = vlaneseq
    %v175 = vshrl.u32 %v174, 7
    %v176 = vsub.s32 0, %v175
    %v177 = vrot.slane %v172, %v176
    %v179 = vmul.f32 %v170, %v177
    %v180 = vmul.f32 %v171, %v177
    %v181 = vld [vmem:[%s5] sm:$0x1]
    %v183 = vlaneseq
    %v184 = vshrl.u32 %v183, 7
    %v185 = vsub.s32 0, %v184
    %v186 = vrot.slane %v181, %v185
    %v188 = vadd.f32 %v179, %v186
    %v189 = vadd.f32 %v180, %v186
    %v190 = vpack.c.bf16 %v189, %v188
    %v192 = vunpack.c.l.b16 %v190
    %v193 = vunpack.c.h.b16 %v190
    %v194 = vpack.c.b16 %v192, %v192
    %v195 = vpack.c.b16 %v193, %v193
    %vm198 = vcmask 257024
    %199 = vst.msk [vmem:[%s6] sm:$0xf] %vm198, %v194
    %200 = vst.msk [vmem:[%s6 + $0x4] sm:$0xf] %vm198, %v195
  $region33: #{transformer_forward.33} parent=0 // pred_fallthru
    _
  // Predicated region
  $region34: #{transformer_forward.33} parent=0 // pred_check
    _
  $region35: #{transformer_forward.33} parent=0 // pred_check_branch
    %202 = sbr.rel (0) target = $region37
  $region36: #{transformer_forward.33} parent=0 // pred_region
    _
  $region37: #{transformer_forward.33} parent=0 // pred_fallthru
    _
  // Predicated region
  $region38: #{transformer_forward.33} parent=0 // pred_check
    _
  $region39: #{transformer_forward.33} parent=0 // pred_check_branch
    %204 = sbr.rel (0) target = $region41
  $region40: #{transformer_forward.33} parent=0 // pred_region
    _
  $region41: #{transformer_forward.33} parent=0 // pred_fallthru
    _

// kernel: transformer_forward.57
$region0: #{transformer_forward.57}
  #allocation0 [shape = 'u32[]', space=smem, size = 0x4, offset = 0x4, fixed_abs, tag = 'smem constant byte address 0x4 - core index']
  #allocation1 [shape = 'u32[144,128]{1,0:T(1,128)}', space=vmem, size = 0x12000, scoped, tag = 'internal scratch']
  #allocation2 [shape = 'f32[16,128]{1,0:T(8,128)}', space=vmem, size = 0x2000, scoped, tag = 'scratch operand']
  %s0 = inlined_call_operand.vmem [shape: bf16[16,32], index: 0, kind: input, shape index: {}]
  %s1 = inlined_call_operand.vmem [shape: bf16[32,128], index: 1, kind: input, shape index: {}]
  %s2 = inlined_call_operand.vmem [shape: f32[1,128], index: 2, kind: input, shape index: {}]
  %s3 = inlined_call_operand.vmem [shape: f32[16,128], index: 3, kind: output, shape index: {}]
  %s4 = sld [smem:[#allocation0]]
  $region30: #{transformer_forward.57} parent=0
    _
  %s6 = ssub.s32 1, %s4
  %s7 = scalar_select 0, %s6, %s4
  // Predicated region
  $region2: #{transformer_forward.57} parent=0 // pred_check
    _
  $region3: #{transformer_forward.57} parent=0 // pred_check_branch
    %9 = sbr.rel (0) target = $region5
  $region4: #{transformer_forward.57} parent=0 // pred_region
    _
  $region5: #{transformer_forward.57} parent=0 // pred_fallthru
    _
  // Predicated region
  $region6: #{transformer_forward.57} parent=0 // pred_check
    _
  $region7: #{transformer_forward.57} parent=0 // pred_check_branch
    %11 = sbr.rel (0) target = $region9
  $region8: #{transformer_forward.57} parent=0 // pred_region
    _
  $region9: #{transformer_forward.57} parent=0 // pred_fallthru
    _
  // Predicated region
  $region10: #{transformer_forward.57} parent=0 // pred_check
    _
  $region11: #{transformer_forward.57} parent=0 // pred_check_branch
    %13 = sbr.rel (0) target = $region13
  $region12: #{transformer_forward.57} parent=0 // pred_region
    _
  $region13: #{transformer_forward.57} parent=0 // pred_fallthru
    _
  %p15 = scmp.eq.s32.totalorder 0, 0
  // Predicated region
  $region14: #{transformer_forward.57} parent=0 // pred_check
    %p16 = pneg %p15
  $region15: #{transformer_forward.57} parent=0 // pred_check_branch
    %18 = sbr.rel (%p16) target = $region17
  $region16: #{transformer_forward.57} parent=0 // pred_region
    %19 = vst [vmem:[#allocation2] sm:$0xff] 0.0
    %20 = vst [vmem:[#allocation2 + $0x8] sm:$0xff] 0.0
  $region17: #{transformer_forward.57} parent=0 // pred_fallthru
    _
  %v21 = vld [vmem:[#allocation2] sm:$0xff]
  %v22 = vld [vmem:[#allocation2 + $0x8] sm:$0xff]
  %v23 = vld [vmem:[%s0] sm:$0xf]
  %v24 = vld [vmem:[%s0 + $0x4] sm:$0xf]
  %v25 = vld [vmem:[%s1] sm:$0xf]
  %v26 = vld [vmem:[%s1 + $0x4] sm:$0xf]
  %v27 = vld [vmem:[%s1 + $0x8] sm:$0xf]
  %v28 = vld [vmem:[%s1 + $0xc] sm:$0xf]
  %v31 = vunpack.c.l.b16 %v23
  %v32 = vunpack.c.l.b16 %v24
  %v33 = vpack.c.b16 %v32, %v31
  %v38 = vunpack.c.l.b16 %v25
  %v39 = vunpack.c.l.b16 %v26
  %v40 = vunpack.c.l.b16 %v27
  %v41 = vunpack.c.l.b16 %v28
  %v42 = vpack.c.b16 %v39, %v38
  %v43 = vpack.c.b16 %v41, %v40
  %vm46 = vcmask 261120
  %v48 = vsel %vm46, %v33, 0
  %50 = vmatprep.subr.bf16.mxu0 0
  %51 = vmatpush1.bf16.msra.mxu0 %v42
  %52 = vmatprep.subr.bf16.mxu0 0
  %53 = vmatpush1.bf16.msra.mxu0 %v43
  %54 = vmatprep.subr.bf16.mxu0 0
  %55 = vmatpush1.bf16.msra.mxu0 0
  %56 = vmatprep.subr.bf16.mxu0 0
  %57 = vmatpush1.bf16.msra.mxu0 0
  %58 = vmatprep.subr.bf16.mxu0 0
  %59 = vmatpush1.bf16.msra.mxu0 0
  %60 = vmatprep.subr.bf16.mxu0 0
  %61 = vmatpush1.bf16.msra.mxu0 0
  %62 = vmatprep.subr.bf16.mxu0 0
  %63 = vmatpush1.bf16.msra.mxu0 0
  %64 = vmatprep.subr.bf16.mxu0 0
  %65 = vmatpush1.bf16.msra.mxu0 0
  %66 = vmatprep.subr.bf16.mxu0 0
  %67 = vmatpush1.bf16.msra.mxu0 0
  %68 = vmatprep.subr.bf16.mxu0 0
  %69 = vmatpush1.bf16.msra.mxu0 0
  %70 = vmatprep.subr.bf16.mxu0 0
  %71 = vmatpush1.bf16.msra.mxu0 0
  %72 = vmatprep.subr.bf16.mxu0 0
  %73 = vmatpush1.bf16.msra.mxu0 0
  %74 = vmatprep.subr.bf16.mxu0 0
  %75 = vmatpush1.bf16.msra.mxu0 0
  %76 = vmatprep.subr.bf16.mxu0 0
  %77 = vmatpush1.bf16.msra.mxu0 0
  %78 = vmatprep.subr.bf16.mxu0 0
  %79 = vmatpush1.bf16.msra.mxu0 0
  %80 = vmatprep.subr.bf16.mxu0 0
  %81 = vmatpush1.bf16.msra.mxu0 0
  %82 = vmatprep.mubr.bf16.mxu0 0
  %83 = vmatmul.mubr.bf16.gmra.mrb[0].mxu0 %v48
  %v84 = vpop.f32.mrb[0].mxu0
  %v85 = vadd.f32 0.0, %v84
  %v86 = vpop.f32.mrb[0].mxu0
  %v87 = vpop.f32.mrb[0].mxu0
  %v88 = vadd.f32 0.0, %v87
  %v89 = vpop.f32.mrb[0].mxu0
  %90 = vdwg.mxu0
  %v91 = vadd.f32 %v21, %v85
  %v92 = vadd.f32 %v22, %v88
  %93 = vst [vmem:[#allocation2] sm:$0xff] %v91
  %94 = vst [vmem:[#allocation2 + $0x8] sm:$0xff] %v92
  // Predicated region
  $region18: #{transformer_forward.57} parent=0 // pred_check
    %p95 = pneg %p15
  $region19: #{transformer_forward.57} parent=0 // pred_check_branch
    %97 = sbr.rel (%p95) target = $region21
  $region20: #{transformer_forward.57} parent=0 // pred_region
    %v98 = vld [vmem:[#allocation2] sm:$0xff]
    %v99 = vld [vmem:[#allocation2 + $0x8] sm:$0xff]
    %v100 = vld [vmem:[%s2] sm:$0x1]
    %v102 = vlaneseq
    %v103 = vshrl.u32 %v102, 7
    %v104 = vsub.s32 0, %v103
    %v105 = vrot.slane %v100, %v104
    %v107 = vadd.f32 %v98, %v105
    %v108 = vadd.f32 %v99, %v105
    %109 = vst [vmem:[%s3] sm:$0xff] %v107
    %110 = vst [vmem:[%s3 + $0x8] sm:$0xff] %v108
  $region21: #{transformer_forward.57} parent=0 // pred_fallthru
    _
  // Predicated region
  $region22: #{transformer_forward.57} parent=0 // pred_check
    _
  $region23: #{transformer_forward.57} parent=0 // pred_check_branch
    %112 = sbr.rel (0) target = $region25
  $region24: #{transformer_forward.57} parent=0 // pred_region
    _
  $region25: #{transformer_forward.57} parent=0 // pred_fallthru
    _
  // Predicated region
  $region26: #{transformer_forward.57} parent=0 // pred_check
    _
  $region27: #{transformer_forward.57} parent=0 // pred_check_branch
    %114 = sbr.rel (0) target = $region29
  $region28: #{transformer_forward.57} parent=0 // pred_region
    _
  $region29: #{transformer_forward.57} parent=0 // pred_fallthru
    _

</llo_original>
